<compile_context>
chip_gen: v5e
topology: v5e:2x2
jax: 0.10.0
libtpu: 0.0.40
codegen_flags: <defaults>
</compile_context>

<pallas_src>
from functools import partial

import jax
import jax.numpy as jnp
import numpy as np
from jax.experimental import pallas as pl
from jax.experimental.pallas import tpu as pltpu

SUBLANE = 8
LANE = 128   # pad target for hidden/input/output dims; use 256 at production H on v6e/v7x (2x256x256 MXU)


def _round_up(n, m):
    return ((n + m - 1) // m) * m


# ----------------------------- fused GRU-net kernel -----------------------------
def grunet_fused_kernel(x_ref, h0_ref, wih_ref, whh_ref, ba_ref, bn_ref,
                        wfc_ref, bfc_ref, out_ref, hn_ref, seq_ref, gi_ref,
                        *, unroll):
    """All layers + FC head fused; layer-major, input projection hoisted per layer."""
    L, Bp, Hp = h0_ref.shape
    T, B, D = x_ref.shape
    w_dtype = wih_ref.dtype

    # Stage x into the zero-padded, time-major layer-0 sequence scratch (VMEM side).
    seq_ref[...] = jnp.zeros_like(seq_ref)
    seq_ref[:, :B, :D] = x_ref[...].astype(seq_ref.dtype)

    h_fin = None
    for l in range(L):                                    # static layer loop (layer-major)
        # Hoisted input projection for the whole sequence: one (T*Bp, Hp) x (Hp, 3*Hp)
        # MXU matmul per layer.  Biases b_ih (all gates) + b_hh (r,z) folded in here.
        seq2d = seq_ref[...].reshape(T * Bp, Hp)
        gi_all = jnp.dot(seq2d.astype(w_dtype), wih_ref[l],
                         preferred_element_type=jnp.float32) + ba_ref[l]
        gi_ref[...] = gi_all.reshape(T, Bp, 3 * Hp)

        # Loop-invariant broadcast hoisted out of the recurrence (no CSE inside loops).
        bn_l = jnp.broadcast_to(bn_ref[l], (Bp, Hp))      # b_hh_n (stays inside r*(...))
        write_seq = l < L - 1                             # last layer's sequence is never read

        def step(t, h, l=l, bn_l=bn_l, write_seq=write_seq):
            gi = gi_ref[t]                                # (Bp, 3*Hp), hoisted projection
            # Only Whh is re-streamed on the serial path.
            # TODO(synk): at production sizes, pin the 3 Whh gate tiles in MXU staging
            #             (pltpu.matmul_push_rhs / matmul_acc_lhs / matmul_pop) and/or use
            #             bf16 weights (pack_params(weight_dtype=jnp.bfloat16)).
            gh = jnp.dot(h.astype(w_dtype), whh_ref[l],
                         preferred_element_type=jnp.float32)
            # Fused r/z sigmoid: one EUP issue on the (Bp, 2*Hp) slab; split is 128-aligned.
            rz = jax.nn.sigmoid(gi[:, :2 * Hp] + gh[:, :2 * Hp])
            r = rz[:, :Hp]
            z = rz[:, Hp:]
            n = jnp.tanh(gi[:, 2 * Hp:] + r * (gh[:, 2 * Hp:] + bn_l))
            h_new = (1.0 - z) * n + z * h
            if write_seq:
                seq_ref[t] = h_new                        # becomes the next layer's input
            return h_new

        h_fin = jax.lax.fori_loop(0, T, step, h0_ref[l], unroll=unroll)
        hn_ref[l] = h_fin

    # ReLU + FC head on the last timestep of the top layer (lane-dense (Bp, Op) output).
    top = jnp.maximum(h_fin, 0.0)
    out_ref[...] = jnp.dot(top, wfc_ref[...],
                           preferred_element_type=jnp.float32) + bfc_ref[...]


def _grunet_pallas(x_tm, h0_pad, packed):
    """x_tm: time-major, unpadded (T, B, D).  Padding happens inside the kernel."""
    T, B, D = x_tm.shape
    L, Bp, Hp = h0_pad.shape
    Op = packed["wfc"].shape[-1]

    flops = 4 * T * L * Bp * Hp * 3 * Hp + 2 * Bp * Hp * Op
    transcendentals = 3 * T * L * Bp * Hp
    bytes_accessed = (x_tm.size * 4 + h0_pad.size * 4
                      + sum(int(v.size) * v.dtype.itemsize for v in packed.values())
                      + (Bp * Op + L * Bp * Hp) * 4)

    # Bounded unroll: full only when T is small (avoids vreg-pressure/spills at large T).
    kernel = partial(grunet_fused_kernel, unroll=min(T, 8))

    return pl.pallas_call(
        kernel,
        out_shape=(jax.ShapeDtypeStruct((Bp, Op), jnp.float32),
                   jax.ShapeDtypeStruct((L, Bp, Hp), jnp.float32)),
        in_specs=[
            pl.BlockSpec((T, B, D), lambda: (0, 0, 0)),          # x (time-major, unpadded)
            pl.BlockSpec((L, Bp, Hp), lambda: (0, 0, 0)),        # h0 (padded)
            pl.BlockSpec((L, Hp, 3 * Hp), lambda: (0, 0, 0)),    # W_ih^T (per-gate lane-aligned)
            pl.BlockSpec((L, Hp, 3 * Hp), lambda: (0, 0, 0)),    # W_hh^T
            pl.BlockSpec((L, 1, 3 * Hp), lambda: (0, 0, 0)),     # folded gi bias
            pl.BlockSpec((L, 1, Hp), lambda: (0, 0, 0)),         # b_hh_n
            pl.BlockSpec((Hp, Op), lambda: (0, 0)),              # W_fc^T
            pl.BlockSpec((1, Op), lambda: (0, 0)),               # b_fc
        ],
        out_specs=(pl.BlockSpec((Bp, Op), lambda: (0, 0)),
                   pl.BlockSpec((L, Bp, Hp), lambda: (0, 0, 0))),
        scratch_shapes=[pltpu.VMEM((T, Bp, Hp), jnp.float32),       # layer-I/O sequence
                        pltpu.VMEM((T, Bp, 3 * Hp), jnp.float32)],  # hoisted gi per layer
        cost_estimate=pl.CostEstimate(flops=flops,
                                      transcendentals=transcendentals,
                                      bytes_accessed=bytes_accessed),
        # TODO(synk): on v7x (2 TCs / 64 MiB VMEM), add a leading batch grid axis marked
        #             "parallel" and stream per-layer weights (BlockSpec over L or manual
        #             double-buffered DMA) once H/L grow past the all-resident budget.
    )(x_tm, h0_pad, packed["wih"], packed["whh"], packed["ba"], packed["bn"],
      packed["wfc"], packed["bfc"])


# ------------------------------ parameter packing ------------------------------
def pack_params(raw, input_dim, hidden_dim, output_dim, *,
                weight_dtype=jnp.float32, lane_align=LANE):
    """Pack PyTorch-layout GRU/FC weights into padded, lane-aligned fused arrays.

    weight_dtype: dtype of the gate matrices (jnp.bfloat16 recommended at production
                  sizes on v6e/v7x; accumulation and gate math stay f32).
    lane_align:   pad target for contraction/hidden dims (128; 256 on v6e/v7x MXUs).
    """
    H, O = hidden_dim, output_dim
    Hp = _round_up(H, lane_align)
    Op = _round_up(O, lane_align)
    assert input_dim <= Hp, "layer-0 input is packed into the Hp-wide input slot"
    wih_all, whh_all, ba_all, bn_all = [], [], [], []
    for p in raw["gru"]:
        in_dim = p["wih"].shape[1]
        # (3H, in) -> (in, 3, H) -> zero-pad -> (Hp, 3*Hp): gate g at columns [g*Hp, g*Hp+H)
        wih_g = jnp.transpose(p["wih"].reshape(3, H, in_dim), (2, 0, 1))
        wih_g = jnp.pad(wih_g, ((0, Hp - in_dim), (0, 0), (0, Hp - H)))
        wih_all.append(wih_g.reshape(Hp, 3 * Hp))
        whh_g = jnp.transpose(p["whh"].reshape(3, H, H), (2, 0, 1))
        whh_g = jnp.pad(whh_g, ((0, Hp - H), (0, 0), (0, Hp - H)))
        whh_all.append(whh_g.reshape(Hp, 3 * Hp))
        bih_g = p["bih"].reshape(3, H)
        bhh_g = p["bhh"].reshape(3, H)
        ba = jnp.stack([bih_g[0] + bhh_g[0],      # r: fold both biases
                        bih_g[1] + bhh_g[1],      # z: fold both biases
                        bih_g[2]])                # n: b_ih only (b_hh_n stays inside r*(...))
        ba_all.append(jnp.pad(ba, ((0, 0), (0, Hp - H))).reshape(1, 3 * Hp))
        bn_all.append(jnp.pad(bhh_g[2], (0, Hp - H)).reshape(1, Hp))
    wfc = jnp.pad(raw["w_fc"].T, ((0, Hp - H), (0, Op - O)))
    bfc = jnp.pad(raw["b_fc"], (0, Op - O)).reshape(1, Op)
    return {"wih": jnp.stack(wih_all).astype(weight_dtype),
            "whh": jnp.stack(whh_all).astype(weight_dtype),
            "ba": jnp.stack(ba_all), "bn": jnp.stack(bn_all),
            "wfc": wfc, "bfc": bfc}


# --------------------------------- full forward ---------------------------------
@partial(jax.jit, static_argnames=("hidden_dim", "output_dim"))
def grunet_forward(x, h0, packed, *, hidden_dim, output_dim):
    """x: (B, T, D) batch-first (torch layout), h0: (n_layers, B, H).
    Returns (out (B, O), h_new (n_layers, B, H))."""
    B, T, D = x.shape
    L = h0.shape[0]
    H, O = hidden_dim, output_dim
    Hp = packed["wih"].shape[1]
    Bp = _round_up(B, SUBLANE)
    # Only a time-major transpose on the XLA side; the zero-pad to (T, Bp, Hp) happens
    # on the VMEM side inside the kernel (no padded HBM copy of the sequence).
    # TODO(synk): at production, accept time-major (T,B,D) input directly and drop this transpose.
    x_tm = jnp.transpose(x, (1, 0, 2)).astype(jnp.float32)
    h0_pad = jnp.zeros((L, Bp, Hp), jnp.float32).at[:, :B, :H].set(h0.astype(jnp.float32))
    out_pad, hn_pad = _grunet_pallas(x_tm, h0_pad, packed)
    return out_pad[:B, :O], hn_pad[:, :B, :H]


# ------------------------------ pure-JAX reference -------------------------------
def grunet_reference(x, h, raw):
    H = h.shape[-1]
    layer_in = jnp.transpose(x, (1, 0, 2))
    h_finals = []
    for l, p in enumerate(raw["gru"]):
        wih_t, whh_t = p["wih"].T, p["whh"].T
        bih, bhh = p["bih"], p["bhh"]

        def step(hprev, x_t, wih_t=wih_t, whh_t=whh_t, bih=bih, bhh=bhh):
            gi = x_t @ wih_t + bih
            gh = hprev @ whh_t + bhh
            r = jax.nn.sigmoid(gi[:, :H] + gh[:, :H])
            z = jax.nn.sigmoid(gi[:, H:2 * H] + gh[:, H:2 * H])
            n = jnp.tanh(gi[:, 2 * H:] + r * gh[:, 2 * H:])
            hn = (1.0 - z) * n + z * hprev
            return hn, hn

        h_fin, seq = jax.lax.scan(step, h[l], layer_in)
        h_finals.append(h_fin)
        layer_in = seq
    h_new = jnp.stack(h_finals, axis=0)
    out = jnp.maximum(layer_in[-1], 0.0) @ raw["w_fc"].T + raw["b_fc"]
    return out, h_new


# ------------------------------------- main --------------------------------------
if __name__ == "__main__":
    B, T, D, H, O, n_layers = 2, 8, 16, 32, 4, 2

    key = jax.random.PRNGKey(0)
    keys = jax.random.split(key, 4 * n_layers + 3)
    bound = 1.0 / np.sqrt(H)

    gru = []
    ki = 0
    for l in range(n_layers):
        in_dim = D if l == 0 else H
        wih = jax.random.uniform(keys[ki], (3 * H, in_dim), jnp.float32, -bound, bound); ki += 1
        whh = jax.random.uniform(keys[ki], (3 * H, H), jnp.float32, -bound, bound); ki += 1
        bih = jax.random.uniform(keys[ki], (3 * H,), jnp.float32, -bound, bound); ki += 1
        bhh = jax.random.uniform(keys[ki], (3 * H,), jnp.float32, -bound, bound); ki += 1
        gru.append({"wih": wih, "whh": whh, "bih": bih, "bhh": bhh})
    w_fc = jax.random.uniform(keys[ki], (O, H), jnp.float32, -bound, bound); ki += 1
    b_fc = jax.random.uniform(keys[ki], (O,), jnp.float32, -bound, bound); ki += 1
    raw = {"gru": gru, "w_fc": w_fc, "b_fc": b_fc}

    packed = pack_params(raw, D, H, O)   # f32 here; weight_dtype=jnp.bfloat16 at production sizes

    x = jax.random.normal(keys[ki], (B, T, D), jnp.float32); ki += 1
    h0 = jnp.zeros((n_layers, B, H), jnp.float32)   # init_hidden()

    out, h_new = jax.block_until_ready(
        grunet_forward(x, h0, packed, hidden_dim=H, output_dim=O))
    out_ref, h_ref = jax.block_until_ready(grunet_reference(x, h0, raw))

    assert out.shape == (B, O) and h_new.shape == (n_layers, B, H)
    np.testing.assert_allclose(np.asarray(out), np.asarray(out_ref), rtol=1e-5, atol=2e-5)
    np.testing.assert_allclose(np.asarray(h_new), np.asarray(h_ref), rtol=1e-5, atol=2e-5)
    print("KERNEL_OK")
</pallas_src>

<mosaic_0001>
module attributes {stable_mosaic.version = 11 : i64} {
  func.func @grunet_fused_kernel(%arg0: memref<8x2x16xf32, #tpu.memory_space<vmem>>, %arg1: memref<2x8x128xf32, #tpu.memory_space<vmem>>, %arg2: memref<2x128x384xf32, #tpu.memory_space<vmem>>, %arg3: memref<2x128x384xf32, #tpu.memory_space<vmem>>, %arg4: memref<2x1x384xf32, #tpu.memory_space<vmem>>, %arg5: memref<2x1x128xf32, #tpu.memory_space<vmem>>, %arg6: memref<128x128xf32, #tpu.memory_space<vmem>>, %arg7: memref<1x128xf32, #tpu.memory_space<vmem>>, %arg8: memref<8x128xf32, #tpu.memory_space<vmem>>, %arg9: memref<2x8x128xf32, #tpu.memory_space<vmem>>, %arg10: memref<8x8x128xf32, #tpu.memory_space<vmem>>, %arg11: memref<8x8x384xf32, #tpu.memory_space<vmem>>) attributes {dimension_semantics = [], scalar_prefetch = 0 : i64, scratch_operands = 2 : i64, tpu.core_type = #tpu.core_type<tc>} {
    %cst = arith.constant 0.000000e+00 : f32
    %0 = vector.broadcast %cst : f32 to vector<8x8x128xf32>
    %c0 = arith.constant 0 : index
    %c0_0 = arith.constant 0 : index
    %c0_1 = arith.constant 0 : index
    %1 = vector.load %arg10[%c0, %c0_0, %c0_1] : memref<8x8x128xf32, #tpu.memory_space<vmem>>, vector<8x8x128xf32>
    tpu.vector_store %arg10[%c0, %c0_0, %c0_1], %0 {strides = array<i32>} : memref<8x8x128xf32, #tpu.memory_space<vmem>>, vector<8x8x128xf32>,
    %c0_2 = arith.constant 0 : index
    %c0_3 = arith.constant 0 : index
    %c0_4 = arith.constant 0 : index
    %2 = vector.load %arg0[%c0_2, %c0_3, %c0_4] : memref<8x2x16xf32, #tpu.memory_space<vmem>>, vector<8x2x16xf32>
    %c0_5 = arith.constant 0 : index
    %c0_6 = arith.constant 0 : index
    %c0_7 = arith.constant 0 : index
    %3 = vector.load %arg10[%c0_5, %c0_6, %c0_7] : memref<8x8x128xf32, #tpu.memory_space<vmem>>, vector<8x2x16xf32>
    tpu.vector_store %arg10[%c0_5, %c0_6, %c0_7], %2 {strides = array<i32>} : memref<8x8x128xf32, #tpu.memory_space<vmem>>, vector<8x2x16xf32>,
    %c0_8 = arith.constant 0 : index
    %c0_9 = arith.constant 0 : index
    %c0_10 = arith.constant 0 : index
    %4 = vector.load %arg10[%c0_8, %c0_9, %c0_10] : memref<8x8x128xf32, #tpu.memory_space<vmem>>, vector<8x8x128xf32>
    %5 = vector.shape_cast %4 : vector<8x8x128xf32> to vector<64x128xf32>
    %c0_11 = arith.constant 0 : index
    %c0_12 = arith.constant 0 : index
    %c0_13 = arith.constant 0 : index
    %6 = vector.load %arg2[%c0_11, %c0_12, %c0_13] : memref<2x128x384xf32, #tpu.memory_space<vmem>>, vector<1x128x384xf32>
    %7 = vector.shape_cast %6 : vector<1x128x384xf32> to vector<128x384xf32>
    %cst_14 = arith.constant dense<0.000000e+00> : vector<64x384xf32>
    %8 = tpu.matmul %5, %7, %cst_14 {dimension_numbers = #tpu.dot_dimension_numbers<[1], [0], [0], [1], [0, 0, 1, 1], [], []>} : vector<64x128xf32>, vector<128x384xf32>, vector<64x384xf32> -> vector<64x384xf32>
    %c0_15 = arith.constant 0 : index
    %c0_16 = arith.constant 0 : index
    %c0_17 = arith.constant 0 : index
    %9 = vector.load %arg4[%c0_15, %c0_16, %c0_17] : memref<2x1x384xf32, #tpu.memory_space<vmem>>, vector<1x1x384xf32>
    %10 = vector.shape_cast %9 : vector<1x1x384xf32> to vector<1x384xf32>
    %11 = vector.broadcast %10 : vector<1x384xf32> to vector<64x384xf32>
    %12 = arith.addf %8, %11 : vector<64x384xf32>
    %13 = vector.shape_cast %12 : vector<64x384xf32> to vector<8x8x384xf32>
    %c0_18 = arith.constant 0 : index
    %c0_19 = arith.constant 0 : index
    %c0_20 = arith.constant 0 : index
    %14 = vector.load %arg11[%c0_18, %c0_19, %c0_20] : memref<8x8x384xf32, #tpu.memory_space<vmem>>, vector<8x8x384xf32>
    tpu.vector_store %arg11[%c0_18, %c0_19, %c0_20], %13 {strides = array<i32>} : memref<8x8x384xf32, #tpu.memory_space<vmem>>, vector<8x8x384xf32>,
    %c0_21 = arith.constant 0 : index
    %c0_22 = arith.constant 0 : index
    %c0_23 = arith.constant 0 : index
    %15 = vector.load %arg5[%c0_21, %c0_22, %c0_23] : memref<2x1x128xf32, #tpu.memory_space<vmem>>, vector<1x1x128xf32>
    %16 = vector.shape_cast %15 : vector<1x1x128xf32> to vector<1x128xf32>
    %17 = vector.shape_cast %16 : vector<1x128xf32> to vector<1x128xf32>
    %18 = vector.broadcast %17 : vector<1x128xf32> to vector<8x128xf32>
    %c0_24 = arith.constant 0 : index
    %c0_25 = arith.constant 0 : index
    %c0_26 = arith.constant 0 : index
    %19 = vector.load %arg1[%c0_24, %c0_25, %c0_26] : memref<2x8x128xf32, #tpu.memory_space<vmem>>, vector<1x8x128xf32>
    %20 = vector.shape_cast %19 : vector<1x8x128xf32> to vector<8x128xf32>
    %c0_i32 = arith.constant 0 : i32
    %21 = arith.index_cast %c0_i32 : i32 to index
    %c0_27 = arith.constant 0 : index
    %c0_28 = arith.constant 0 : index
    %22 = vector.load %arg11[%21, %c0_27, %c0_28] : memref<8x8x384xf32, #tpu.memory_space<vmem>>, vector<1x8x384xf32>
    %23 = vector.shape_cast %22 : vector<1x8x384xf32> to vector<8x384xf32>
    %c0_29 = arith.constant 0 : index
    %c0_30 = arith.constant 0 : index
    %c0_31 = arith.constant 0 : index
    %24 = vector.load %arg3[%c0_29, %c0_30, %c0_31] : memref<2x128x384xf32, #tpu.memory_space<vmem>>, vector<1x128x384xf32>
    %25 = vector.shape_cast %24 : vector<1x128x384xf32> to vector<128x384xf32>
    %cst_32 = arith.constant dense<0.000000e+00> : vector<8x384xf32>
    %26 = tpu.matmul %20, %25, %cst_32 {dimension_numbers = #tpu.dot_dimension_numbers<[1], [0], [0], [1], [0, 0, 1, 1], [], []>} : vector<8x128xf32>, vector<128x384xf32>, vector<8x384xf32> -> vector<8x384xf32>
    %27 = vector.extract_strided_slice %23 {offsets = [0, 0], sizes = [8, 256], strides = [1, 1]} : vector<8x384xf32> to vector<8x256xf32>
    %28 = vector.extract_strided_slice %26 {offsets = [0, 0], sizes = [8, 256], strides = [1, 1]} : vector<8x384xf32> to vector<8x256xf32>
    %29 = arith.addf %27, %28 : vector<8x256xf32>
    %30 = arith.negf %29 : vector<8x256xf32>
    %31 = math.exp %30 : vector<8x256xf32>
    %cst_33 = arith.constant 1.000000e+00 : f32
    %32 = vector.broadcast %cst_33 : f32 to vector<8x256xf32>
    %33 = arith.addf %32, %31 : vector<8x256xf32>
    %34 = arith.divf %32, %33 : vector<8x256xf32>
    %35 = vector.extract_strided_slice %34 {offsets = [0, 0], sizes = [8, 128], strides = [1, 1]} : vector<8x256xf32> to vector<8x128xf32>
    %36 = vector.extract_strided_slice %34 {offsets = [0, 128], sizes = [8, 128], strides = [1, 1]} : vector<8x256xf32> to vector<8x128xf32>
    %37 = vector.extract_strided_slice %23 {offsets = [0, 256], sizes = [8, 128], strides = [1, 1]} : vector<8x384xf32> to vector<8x128xf32>
    %38 = vector.extract_strided_slice %26 {offsets = [0, 256], sizes = [8, 128], strides = [1, 1]} : vector<8x384xf32> to vector<8x128xf32>
    %39 = arith.addf %38, %18 : vector<8x128xf32>
    %40 = arith.mulf %35, %39 : vector<8x128xf32>
    %41 = arith.addf %37, %40 : vector<8x128xf32>
    %42 = math.tanh %41 : vector<8x128xf32>
    %cst_34 = arith.constant 1.000000e+00 : f32
    %43 = vector.broadcast %cst_34 : f32 to vector<8x128xf32>
    %44 = arith.subf %43, %36 : vector<8x128xf32>
    %45 = arith.mulf %44, %42 : vector<8x128xf32>
    %46 = arith.mulf %36, %20 : vector<8x128xf32>
    %47 = arith.addf %45, %46 : vector<8x128xf32>
    %48 = arith.index_cast %c0_i32 : i32 to index
    %c0_35 = arith.constant 0 : index
    %c0_36 = arith.constant 0 : index
    %49 = vector.load %arg10[%48, %c0_35, %c0_36] : memref<8x8x128xf32, #tpu.memory_space<vmem>>, vector<1x8x128xf32>
    %50 = vector.shape_cast %49 : vector<1x8x128xf32> to vector<8x128xf32>
    %51 = vector.shape_cast %47 : vector<8x128xf32> to vector<1x8x128xf32>
    tpu.vector_store %arg10[%48, %c0_35, %c0_36], %51 {strides = array<i32>} : memref<8x8x128xf32, #tpu.memory_space<vmem>>, vector<1x8x128xf32>,
    %c1_i32 = arith.constant 1 : i32
    %52 = arith.index_cast %c1_i32 : i32 to index
    %c0_37 = arith.constant 0 : index
    %c0_38 = arith.constant 0 : index
    %53 = vector.load %arg11[%52, %c0_37, %c0_38] : memref<8x8x384xf32, #tpu.memory_space<vmem>>, vector<1x8x384xf32>
    %54 = vector.shape_cast %53 : vector<1x8x384xf32> to vector<8x384xf32>
    %c0_39 = arith.constant 0 : index
    %c0_40 = arith.constant 0 : index
    %c0_41 = arith.constant 0 : index
    %55 = vector.load %arg3[%c0_39, %c0_40, %c0_41] : memref<2x128x384xf32, #tpu.memory_space<vmem>>, vector<1x128x384xf32>
    %56 = vector.shape_cast %55 : vector<1x128x384xf32> to vector<128x384xf32>
    %cst_42 = arith.constant dense<0.000000e+00> : vector<8x384xf32>
    %57 = tpu.matmul %47, %56, %cst_42 {dimension_numbers = #tpu.dot_dimension_numbers<[1], [0], [0], [1], [0, 0, 1, 1], [], []>} : vector<8x128xf32>, vector<128x384xf32>, vector<8x384xf32> -> vector<8x384xf32>
    %58 = vector.extract_strided_slice %54 {offsets = [0, 0], sizes = [8, 256], strides = [1, 1]} : vector<8x384xf32> to vector<8x256xf32>
    %59 = vector.extract_strided_slice %57 {offsets = [0, 0], sizes = [8, 256], strides = [1, 1]} : vector<8x384xf32> to vector<8x256xf32>
    %60 = arith.addf %58, %59 : vector<8x256xf32>
    %61 = arith.negf %60 : vector<8x256xf32>
    %62 = math.exp %61 : vector<8x256xf32>
    %cst_43 = arith.constant 1.000000e+00 : f32
    %63 = vector.broadcast %cst_43 : f32 to vector<8x256xf32>
    %64 = arith.addf %63, %62 : vector<8x256xf32>
    %65 = arith.divf %63, %64 : vector<8x256xf32>
    %66 = vector.extract_strided_slice %65 {offsets = [0, 0], sizes = [8, 128], strides = [1, 1]} : vector<8x256xf32> to vector<8x128xf32>
    %67 = vector.extract_strided_slice %65 {offsets = [0, 128], sizes = [8, 128], strides = [1, 1]} : vector<8x256xf32> to vector<8x128xf32>
    %68 = vector.extract_strided_slice %54 {offsets = [0, 256], sizes = [8, 128], strides = [1, 1]} : vector<8x384xf32> to vector<8x128xf32>
    %69 = vector.extract_strided_slice %57 {offsets = [0, 256], sizes = [8, 128], strides = [1, 1]} : vector<8x384xf32> to vector<8x128xf32>
    %70 = arith.addf %69, %18 : vector<8x128xf32>
    %71 = arith.mulf %66, %70 : vector<8x128xf32>
    %72 = arith.addf %68, %71 : vector<8x128xf32>
    %73 = math.tanh %72 : vector<8x128xf32>
    %cst_44 = arith.constant 1.000000e+00 : f32
    %74 = vector.broadcast %cst_44 : f32 to vector<8x128xf32>
    %75 = arith.subf %74, %67 : vector<8x128xf32>
    %76 = arith.mulf %75, %73 : vector<8x128xf32>
    %77 = arith.mulf %67, %47 : vector<8x128xf32>
    %78 = arith.addf %76, %77 : vector<8x128xf32>
    %79 = arith.index_cast %c1_i32 : i32 to index
    %c0_45 = arith.constant 0 : index
    %c0_46 = arith.constant 0 : index
    %80 = vector.load %arg10[%79, %c0_45, %c0_46] : memref<8x8x128xf32, #tpu.memory_space<vmem>>, vector<1x8x128xf32>
    %81 = vector.shape_cast %80 : vector<1x8x128xf32> to vector<8x128xf32>
    %82 = vector.shape_cast %78 : vector<8x128xf32> to vector<1x8x128xf32>
    tpu.vector_store %arg10[%79, %c0_45, %c0_46], %82 {strides = array<i32>} : memref<8x8x128xf32, #tpu.memory_space<vmem>>, vector<1x8x128xf32>,
    %c2_i32 = arith.constant 2 : i32
    %83 = arith.index_cast %c2_i32 : i32 to index
    %c0_47 = arith.constant 0 : index
    %c0_48 = arith.constant 0 : index
    %84 = vector.load %arg11[%83, %c0_47, %c0_48] : memref<8x8x384xf32, #tpu.memory_space<vmem>>, vector<1x8x384xf32>
    %85 = vector.shape_cast %84 : vector<1x8x384xf32> to vector<8x384xf32>
    %c0_49 = arith.constant 0 : index
    %c0_50 = arith.constant 0 : index
    %c0_51 = arith.constant 0 : index
    %86 = vector.load %arg3[%c0_49, %c0_50, %c0_51] : memref<2x128x384xf32, #tpu.memory_space<vmem>>, vector<1x128x384xf32>
    %87 = vector.shape_cast %86 : vector<1x128x384xf32> to vector<128x384xf32>
    %cst_52 = arith.constant dense<0.000000e+00> : vector<8x384xf32>
    %88 = tpu.matmul %78, %87, %cst_52 {dimension_numbers = #tpu.dot_dimension_numbers<[1], [0], [0], [1], [0, 0, 1, 1], [], []>} : vector<8x128xf32>, vector<128x384xf32>, vector<8x384xf32> -> vector<8x384xf32>
    %89 = vector.extract_strided_slice %85 {offsets = [0, 0], sizes = [8, 256], strides = [1, 1]} : vector<8x384xf32> to vector<8x256xf32>
    %90 = vector.extract_strided_slice %88 {offsets = [0, 0], sizes = [8, 256], strides = [1, 1]} : vector<8x384xf32> to vector<8x256xf32>
    %91 = arith.addf %89, %90 : vector<8x256xf32>
    %92 = arith.negf %91 : vector<8x256xf32>
    %93 = math.exp %92 : vector<8x256xf32>
    %cst_53 = arith.constant 1.000000e+00 : f32
    %94 = vector.broadcast %cst_53 : f32 to vector<8x256xf32>
    %95 = arith.addf %94, %93 : vector<8x256xf32>
    %96 = arith.divf %94, %95 : vector<8x256xf32>
    %97 = vector.extract_strided_slice %96 {offsets = [0, 0], sizes = [8, 128], strides = [1, 1]} : vector<8x256xf32> to vector<8x128xf32>
    %98 = vector.extract_strided_slice %96 {offsets = [0, 128], sizes = [8, 128], strides = [1, 1]} : vector<8x256xf32> to vector<8x128xf32>
    %99 = vector.extract_strided_slice %85 {offsets = [0, 256], sizes = [8, 128], strides = [1, 1]} : vector<8x384xf32> to vector<8x128xf32>
    %100 = vector.extract_strided_slice %88 {offsets = [0, 256], sizes = [8, 128], strides = [1, 1]} : vector<8x384xf32> to vector<8x128xf32>
    %101 = arith.addf %100, %18 : vector<8x128xf32>
    %102 = arith.mulf %97, %101 : vector<8x128xf32>
    %103 = arith.addf %99, %102 : vector<8x128xf32>
    %104 = math.tanh %103 : vector<8x128xf32>
    %cst_54 = arith.constant 1.000000e+00 : f32
    %105 = vector.broadcast %cst_54 : f32 to vector<8x128xf32>
    %106 = arith.subf %105, %98 : vector<8x128xf32>
    %107 = arith.mulf %106, %104 : vector<8x128xf32>
    %108 = arith.mulf %98, %78 : vector<8x128xf32>
    %109 = arith.addf %107, %108 : vector<8x128xf32>
    %110 = arith.index_cast %c2_i32 : i32 to index
    %c0_55 = arith.constant 0 : index
    %c0_56 = arith.constant 0 : index
    %111 = vector.load %arg10[%110, %c0_55, %c0_56] : memref<8x8x128xf32, #tpu.memory_space<vmem>>, vector<1x8x128xf32>
    %112 = vector.shape_cast %111 : vector<1x8x128xf32> to vector<8x128xf32>
    %113 = vector.shape_cast %109 : vector<8x128xf32> to vector<1x8x128xf32>
    tpu.vector_store %arg10[%110, %c0_55, %c0_56], %113 {strides = array<i32>} : memref<8x8x128xf32, #tpu.memory_space<vmem>>, vector<1x8x128xf32>,
    %c3_i32 = arith.constant 3 : i32
    %114 = arith.index_cast %c3_i32 : i32 to index
    %c0_57 = arith.constant 0 : index
    %c0_58 = arith.constant 0 : index
    %115 = vector.load %arg11[%114, %c0_57, %c0_58] : memref<8x8x384xf32, #tpu.memory_space<vmem>>, vector<1x8x384xf32>
    %116 = vector.shape_cast %115 : vector<1x8x384xf32> to vector<8x384xf32>
    %c0_59 = arith.constant 0 : index
    %c0_60 = arith.constant 0 : index
    %c0_61 = arith.constant 0 : index
    %117 = vector.load %arg3[%c0_59, %c0_60, %c0_61] : memref<2x128x384xf32, #tpu.memory_space<vmem>>, vector<1x128x384xf32>
    %118 = vector.shape_cast %117 : vector<1x128x384xf32> to vector<128x384xf32>
    %cst_62 = arith.constant dense<0.000000e+00> : vector<8x384xf32>
    %119 = tpu.matmul %109, %118, %cst_62 {dimension_numbers = #tpu.dot_dimension_numbers<[1], [0], [0], [1], [0, 0, 1, 1], [], []>} : vector<8x128xf32>, vector<128x384xf32>, vector<8x384xf32> -> vector<8x384xf32>
    %120 = vector.extract_strided_slice %116 {offsets = [0, 0], sizes = [8, 256], strides = [1, 1]} : vector<8x384xf32> to vector<8x256xf32>
    %121 = vector.extract_strided_slice %119 {offsets = [0, 0], sizes = [8, 256], strides = [1, 1]} : vector<8x384xf32> to vector<8x256xf32>
    %122 = arith.addf %120, %121 : vector<8x256xf32>
    %123 = arith.negf %122 : vector<8x256xf32>
    %124 = math.exp %123 : vector<8x256xf32>
    %cst_63 = arith.constant 1.000000e+00 : f32
    %125 = vector.broadcast %cst_63 : f32 to vector<8x256xf32>
    %126 = arith.addf %125, %124 : vector<8x256xf32>
    %127 = arith.divf %125, %126 : vector<8x256xf32>
    %128 = vector.extract_strided_slice %127 {offsets = [0, 0], sizes = [8, 128], strides = [1, 1]} : vector<8x256xf32> to vector<8x128xf32>
    %129 = vector.extract_strided_slice %127 {offsets = [0, 128], sizes = [8, 128], strides = [1, 1]} : vector<8x256xf32> to vector<8x128xf32>
    %130 = vector.extract_strided_slice %116 {offsets = [0, 256], sizes = [8, 128], strides = [1, 1]} : vector<8x384xf32> to vector<8x128xf32>
    %131 = vector.extract_strided_slice %119 {offsets = [0, 256], sizes = [8, 128], strides = [1, 1]} : vector<8x384xf32> to vector<8x128xf32>
    %132 = arith.addf %131, %18 : vector<8x128xf32>
    %133 = arith.mulf %128, %132 : vector<8x128xf32>
    %134 = arith.addf %130, %133 : vector<8x128xf32>
    %135 = math.tanh %134 : vector<8x128xf32>
    %cst_64 = arith.constant 1.000000e+00 : f32
    %136 = vector.broadcast %cst_64 : f32 to vector<8x128xf32>
    %137 = arith.subf %136, %129 : vector<8x128xf32>
    %138 = arith.mulf %137, %135 : vector<8x128xf32>
    %139 = arith.mulf %129, %109 : vector<8x128xf32>
    %140 = arith.addf %138, %139 : vector<8x128xf32>
    %141 = arith.index_cast %c3_i32 : i32 to index
    %c0_65 = arith.constant 0 : index
    %c0_66 = arith.constant 0 : index
    %142 = vector.load %arg10[%141, %c0_65, %c0_66] : memref<8x8x128xf32, #tpu.memory_space<vmem>>, vector<1x8x128xf32>
    %143 = vector.shape_cast %142 : vector<1x8x128xf32> to vector<8x128xf32>
    %144 = vector.shape_cast %140 : vector<8x128xf32> to vector<1x8x128xf32>
    tpu.vector_store %arg10[%141, %c0_65, %c0_66], %144 {strides = array<i32>} : memref<8x8x128xf32, #tpu.memory_space<vmem>>, vector<1x8x128xf32>,
    %c4_i32 = arith.constant 4 : i32
    %145 = arith.index_cast %c4_i32 : i32 to index
    %c0_67 = arith.constant 0 : index
    %c0_68 = arith.constant 0 : index
    %146 = vector.load %arg11[%145, %c0_67, %c0_68] : memref<8x8x384xf32, #tpu.memory_space<vmem>>, vector<1x8x384xf32>
    %147 = vector.shape_cast %146 : vector<1x8x384xf32> to vector<8x384xf32>
    %c0_69 = arith.constant 0 : index
    %c0_70 = arith.constant 0 : index
    %c0_71 = arith.constant 0 : index
    %148 = vector.load %arg3[%c0_69, %c0_70, %c0_71] : memref<2x128x384xf32, #tpu.memory_space<vmem>>, vector<1x128x384xf32>
    %149 = vector.shape_cast %148 : vector<1x128x384xf32> to vector<128x384xf32>
    %cst_72 = arith.constant dense<0.000000e+00> : vector<8x384xf32>
    %150 = tpu.matmul %140, %149, %cst_72 {dimension_numbers = #tpu.dot_dimension_numbers<[1], [0], [0], [1], [0, 0, 1, 1], [], []>} : vector<8x128xf32>, vector<128x384xf32>, vector<8x384xf32> -> vector<8x384xf32>
    %151 = vector.extract_strided_slice %147 {offsets = [0, 0], sizes = [8, 256], strides = [1, 1]} : vector<8x384xf32> to vector<8x256xf32>
    %152 = vector.extract_strided_slice %150 {offsets = [0, 0], sizes = [8, 256], strides = [1, 1]} : vector<8x384xf32> to vector<8x256xf32>
    %153 = arith.addf %151, %152 : vector<8x256xf32>
    %154 = arith.negf %153 : vector<8x256xf32>
    %155 = math.exp %154 : vector<8x256xf32>
    %cst_73 = arith.constant 1.000000e+00 : f32
    %156 = vector.broadcast %cst_73 : f32 to vector<8x256xf32>
    %157 = arith.addf %156, %155 : vector<8x256xf32>
    %158 = arith.divf %156, %157 : vector<8x256xf32>
    %159 = vector.extract_strided_slice %158 {offsets = [0, 0], sizes = [8, 128], strides = [1, 1]} : vector<8x256xf32> to vector<8x128xf32>
    %160 = vector.extract_strided_slice %158 {offsets = [0, 128], sizes = [8, 128], strides = [1, 1]} : vector<8x256xf32> to vector<8x128xf32>
    %161 = vector.extract_strided_slice %147 {offsets = [0, 256], sizes = [8, 128], strides = [1, 1]} : vector<8x384xf32> to vector<8x128xf32>
    %162 = vector.extract_strided_slice %150 {offsets = [0, 256], sizes = [8, 128], strides = [1, 1]} : vector<8x384xf32> to vector<8x128xf32>
    %163 = arith.addf %162, %18 : vector<8x128xf32>
    %164 = arith.mulf %159, %163 : vector<8x128xf32>
    %165 = arith.addf %161, %164 : vector<8x128xf32>
    %166 = math.tanh %165 : vector<8x128xf32>
    %cst_74 = arith.constant 1.000000e+00 : f32
    %167 = vector.broadcast %cst_74 : f32 to vector<8x128xf32>
    %168 = arith.subf %167, %160 : vector<8x128xf32>
    %169 = arith.mulf %168, %166 : vector<8x128xf32>
    %170 = arith.mulf %160, %140 : vector<8x128xf32>
    %171 = arith.addf %169, %170 : vector<8x128xf32>
    %172 = arith.index_cast %c4_i32 : i32 to index
    %c0_75 = arith.constant 0 : index
    %c0_76 = arith.constant 0 : index
    %173 = vector.load %arg10[%172, %c0_75, %c0_76] : memref<8x8x128xf32, #tpu.memory_space<vmem>>, vector<1x8x128xf32>
    %174 = vector.shape_cast %173 : vector<1x8x128xf32> to vector<8x128xf32>
    %175 = vector.shape_cast %171 : vector<8x128xf32> to vector<1x8x128xf32>
    tpu.vector_store %arg10[%172, %c0_75, %c0_76], %175 {strides = array<i32>} : memref<8x8x128xf32, #tpu.memory_space<vmem>>, vector<1x8x128xf32>,
    %c5_i32 = arith.constant 5 : i32
    %176 = arith.index_cast %c5_i32 : i32 to index
    %c0_77 = arith.constant 0 : index
    %c0_78 = arith.constant 0 : index
    %177 = vector.load %arg11[%176, %c0_77, %c0_78] : memref<8x8x384xf32, #tpu.memory_space<vmem>>, vector<1x8x384xf32>
    %178 = vector.shape_cast %177 : vector<1x8x384xf32> to vector<8x384xf32>
    %c0_79 = arith.constant 0 : index
    %c0_80 = arith.constant 0 : index
    %c0_81 = arith.constant 0 : index
    %179 = vector.load %arg3[%c0_79, %c0_80, %c0_81] : memref<2x128x384xf32, #tpu.memory_space<vmem>>, vector<1x128x384xf32>
    %180 = vector.shape_cast %179 : vector<1x128x384xf32> to vector<128x384xf32>
    %cst_82 = arith.constant dense<0.000000e+00> : vector<8x384xf32>
    %181 = tpu.matmul %171, %180, %cst_82 {dimension_numbers = #tpu.dot_dimension_numbers<[1], [0], [0], [1], [0, 0, 1, 1], [], []>} : vector<8x128xf32>, vector<128x384xf32>, vector<8x384xf32> -> vector<8x384xf32>
    %182 = vector.extract_strided_slice %178 {offsets = [0, 0], sizes = [8, 256], strides = [1, 1]} : vector<8x384xf32> to vector<8x256xf32>
    %183 = vector.extract_strided_slice %181 {offsets = [0, 0], sizes = [8, 256], strides = [1, 1]} : vector<8x384xf32> to vector<8x256xf32>
    %184 = arith.addf %182, %183 : vector<8x256xf32>
    %185 = arith.negf %184 : vector<8x256xf32>
    %186 = math.exp %185 : vector<8x256xf32>
    %cst_83 = arith.constant 1.000000e+00 : f32
    %187 = vector.broadcast %cst_83 : f32 to vector<8x256xf32>
    %188 = arith.addf %187, %186 : vector<8x256xf32>
    %189 = arith.divf %187, %188 : vector<8x256xf32>
    %190 = vector.extract_strided_slice %189 {offsets = [0, 0], sizes = [8, 128], strides = [1, 1]} : vector<8x256xf32> to vector<8x128xf32>
    %191 = vector.extract_strided_slice %189 {offsets = [0, 128], sizes = [8, 128], strides = [1, 1]} : vector<8x256xf32> to vector<8x128xf32>
    %192 = vector.extract_strided_slice %178 {offsets = [0, 256], sizes = [8, 128], strides = [1, 1]} : vector<8x384xf32> to vector<8x128xf32>
    %193 = vector.extract_strided_slice %181 {offsets = [0, 256], sizes = [8, 128], strides = [1, 1]} : vector<8x384xf32> to vector<8x128xf32>
    %194 = arith.addf %193, %18 : vector<8x128xf32>
    %195 = arith.mulf %190, %194 : vector<8x128xf32>
    %196 = arith.addf %192, %195 : vector<8x128xf32>
    %197 = math.tanh %196 : vector<8x128xf32>
    %cst_84 = arith.constant 1.000000e+00 : f32
    %198 = vector.broadcast %cst_84 : f32 to vector<8x128xf32>
    %199 = arith.subf %198, %191 : vector<8x128xf32>
    %200 = arith.mulf %199, %197 : vector<8x128xf32>
    %201 = arith.mulf %191, %171 : vector<8x128xf32>
    %202 = arith.addf %200, %201 : vector<8x128xf32>
    %203 = arith.index_cast %c5_i32 : i32 to index
    %c0_85 = arith.constant 0 : index
    %c0_86 = arith.constant 0 : index
    %204 = vector.load %arg10[%203, %c0_85, %c0_86] : memref<8x8x128xf32, #tpu.memory_space<vmem>>, vector<1x8x128xf32>
    %205 = vector.shape_cast %204 : vector<1x8x128xf32> to vector<8x128xf32>
    %206 = vector.shape_cast %202 : vector<8x128xf32> to vector<1x8x128xf32>
    tpu.vector_store %arg10[%203, %c0_85, %c0_86], %206 {strides = array<i32>} : memref<8x8x128xf32, #tpu.memory_space<vmem>>, vector<1x8x128xf32>,
    %c6_i32 = arith.constant 6 : i32
    %207 = arith.index_cast %c6_i32 : i32 to index
    %c0_87 = arith.constant 0 : index
    %c0_88 = arith.constant 0 : index
    %208 = vector.load %arg11[%207, %c0_87, %c0_88] : memref<8x8x384xf32, #tpu.memory_space<vmem>>, vector<1x8x384xf32>
    %209 = vector.shape_cast %208 : vector<1x8x384xf32> to vector<8x384xf32>
    %c0_89 = arith.constant 0 : index
    %c0_90 = arith.constant 0 : index
    %c0_91 = arith.constant 0 : index
    %210 = vector.load %arg3[%c0_89, %c0_90, %c0_91] : memref<2x128x384xf32, #tpu.memory_space<vmem>>, vector<1x128x384xf32>
    %211 = vector.shape_cast %210 : vector<1x128x384xf32> to vector<128x384xf32>
    %cst_92 = arith.constant dense<0.000000e+00> : vector<8x384xf32>
    %212 = tpu.matmul %202, %211, %cst_92 {dimension_numbers = #tpu.dot_dimension_numbers<[1], [0], [0], [1], [0, 0, 1, 1], [], []>} : vector<8x128xf32>, vector<128x384xf32>, vector<8x384xf32> -> vector<8x384xf32>
    %213 = vector.extract_strided_slice %209 {offsets = [0, 0], sizes = [8, 256], strides = [1, 1]} : vector<8x384xf32> to vector<8x256xf32>
    %214 = vector.extract_strided_slice %212 {offsets = [0, 0], sizes = [8, 256], strides = [1, 1]} : vector<8x384xf32> to vector<8x256xf32>
    %215 = arith.addf %213, %214 : vector<8x256xf32>
    %216 = arith.negf %215 : vector<8x256xf32>
    %217 = math.exp %216 : vector<8x256xf32>
    %cst_93 = arith.constant 1.000000e+00 : f32
    %218 = vector.broadcast %cst_93 : f32 to vector<8x256xf32>
    %219 = arith.addf %218, %217 : vector<8x256xf32>
    %220 = arith.divf %218, %219 : vector<8x256xf32>
    %221 = vector.extract_strided_slice %220 {offsets = [0, 0], sizes = [8, 128], strides = [1, 1]} : vector<8x256xf32> to vector<8x128xf32>
    %222 = vector.extract_strided_slice %220 {offsets = [0, 128], sizes = [8, 128], strides = [1, 1]} : vector<8x256xf32> to vector<8x128xf32>
    %223 = vector.extract_strided_slice %209 {offsets = [0, 256], sizes = [8, 128], strides = [1, 1]} : vector<8x384xf32> to vector<8x128xf32>
    %224 = vector.extract_strided_slice %212 {offsets = [0, 256], sizes = [8, 128], strides = [1, 1]} : vector<8x384xf32> to vector<8x128xf32>
    %225 = arith.addf %224, %18 : vector<8x128xf32>
    %226 = arith.mulf %221, %225 : vector<8x128xf32>
    %227 = arith.addf %223, %226 : vector<8x128xf32>
    %228 = math.tanh %227 : vector<8x128xf32>
    %cst_94 = arith.constant 1.000000e+00 : f32
    %229 = vector.broadcast %cst_94 : f32 to vector<8x128xf32>
    %230 = arith.subf %229, %222 : vector<8x128xf32>
    %231 = arith.mulf %230, %228 : vector<8x128xf32>
    %232 = arith.mulf %222, %202 : vector<8x128xf32>
    %233 = arith.addf %231, %232 : vector<8x128xf32>
    %234 = arith.index_cast %c6_i32 : i32 to index
    %c0_95 = arith.constant 0 : index
    %c0_96 = arith.constant 0 : index
    %235 = vector.load %arg10[%234, %c0_95, %c0_96] : memref<8x8x128xf32, #tpu.memory_space<vmem>>, vector<1x8x128xf32>
    %236 = vector.shape_cast %235 : vector<1x8x128xf32> to vector<8x128xf32>
    %237 = vector.shape_cast %233 : vector<8x128xf32> to vector<1x8x128xf32>
    tpu.vector_store %arg10[%234, %c0_95, %c0_96], %237 {strides = array<i32>} : memref<8x8x128xf32, #tpu.memory_space<vmem>>, vector<1x8x128xf32>,
    %c7_i32 = arith.constant 7 : i32
    %238 = arith.index_cast %c7_i32 : i32 to index
    %c0_97 = arith.constant 0 : index
    %c0_98 = arith.constant 0 : index
    %239 = vector.load %arg11[%238, %c0_97, %c0_98] : memref<8x8x384xf32, #tpu.memory_space<vmem>>, vector<1x8x384xf32>
    %240 = vector.shape_cast %239 : vector<1x8x384xf32> to vector<8x384xf32>
    %c0_99 = arith.constant 0 : index
    %c0_100 = arith.constant 0 : index
    %c0_101 = arith.constant 0 : index
    %241 = vector.load %arg3[%c0_99, %c0_100, %c0_101] : memref<2x128x384xf32, #tpu.memory_space<vmem>>, vector<1x128x384xf32>
    %242 = vector.shape_cast %241 : vector<1x128x384xf32> to vector<128x384xf32>
    %cst_102 = arith.constant dense<0.000000e+00> : vector<8x384xf32>
    %243 = tpu.matmul %233, %242, %cst_102 {dimension_numbers = #tpu.dot_dimension_numbers<[1], [0], [0], [1], [0, 0, 1, 1], [], []>} : vector<8x128xf32>, vector<128x384xf32>, vector<8x384xf32> -> vector<8x384xf32>
    %244 = vector.extract_strided_slice %240 {offsets = [0, 0], sizes = [8, 256], strides = [1, 1]} : vector<8x384xf32> to vector<8x256xf32>
    %245 = vector.extract_strided_slice %243 {offsets = [0, 0], sizes = [8, 256], strides = [1, 1]} : vector<8x384xf32> to vector<8x256xf32>
    %246 = arith.addf %244, %245 : vector<8x256xf32>
    %247 = arith.negf %246 : vector<8x256xf32>
    %248 = math.exp %247 : vector<8x256xf32>
    %cst_103 = arith.constant 1.000000e+00 : f32
    %249 = vector.broadcast %cst_103 : f32 to vector<8x256xf32>
    %250 = arith.addf %249, %248 : vector<8x256xf32>
    %251 = arith.divf %249, %250 : vector<8x256xf32>
    %252 = vector.extract_strided_slice %251 {offsets = [0, 0], sizes = [8, 128], strides = [1, 1]} : vector<8x256xf32> to vector<8x128xf32>
    %253 = vector.extract_strided_slice %251 {offsets = [0, 128], sizes = [8, 128], strides = [1, 1]} : vector<8x256xf32> to vector<8x128xf32>
    %254 = vector.extract_strided_slice %240 {offsets = [0, 256], sizes = [8, 128], strides = [1, 1]} : vector<8x384xf32> to vector<8x128xf32>
    %255 = vector.extract_strided_slice %243 {offsets = [0, 256], sizes = [8, 128], strides = [1, 1]} : vector<8x384xf32> to vector<8x128xf32>
    %256 = arith.addf %255, %18 : vector<8x128xf32>
    %257 = arith.mulf %252, %256 : vector<8x128xf32>
    %258 = arith.addf %254, %257 : vector<8x128xf32>
    %259 = math.tanh %258 : vector<8x128xf32>
    %cst_104 = arith.constant 1.000000e+00 : f32
    %260 = vector.broadcast %cst_104 : f32 to vector<8x128xf32>
    %261 = arith.subf %260, %253 : vector<8x128xf32>
    %262 = arith.mulf %261, %259 : vector<8x128xf32>
    %263 = arith.mulf %253, %233 : vector<8x128xf32>
    %264 = arith.addf %262, %263 : vector<8x128xf32>
    %265 = arith.index_cast %c7_i32 : i32 to index
    %c0_105 = arith.constant 0 : index
    %c0_106 = arith.constant 0 : index
    %266 = vector.load %arg10[%265, %c0_105, %c0_106] : memref<8x8x128xf32, #tpu.memory_space<vmem>>, vector<1x8x128xf32>
    %267 = vector.shape_cast %266 : vector<1x8x128xf32> to vector<8x128xf32>
    %268 = vector.shape_cast %264 : vector<8x128xf32> to vector<1x8x128xf32>
    tpu.vector_store %arg10[%265, %c0_105, %c0_106], %268 {strides = array<i32>} : memref<8x8x128xf32, #tpu.memory_space<vmem>>, vector<1x8x128xf32>,
    %c8_i32 = arith.constant 8 : i32
    %c0_107 = arith.constant 0 : index
    %c0_108 = arith.constant 0 : index
    %c0_109 = arith.constant 0 : index
    %269 = vector.load %arg9[%c0_107, %c0_108, %c0_109] : memref<2x8x128xf32, #tpu.memory_space<vmem>>, vector<1x8x128xf32>
    %270 = vector.shape_cast %269 : vector<1x8x128xf32> to vector<8x128xf32>
    %271 = vector.shape_cast %264 : vector<8x128xf32> to vector<1x8x128xf32>
    tpu.vector_store %arg9[%c0_107, %c0_108, %c0_109], %271 {strides = array<i32>} : memref<2x8x128xf32, #tpu.memory_space<vmem>>, vector<1x8x128xf32>,
    %c0_110 = arith.constant 0 : index
    %c0_111 = arith.constant 0 : index
    %c0_112 = arith.constant 0 : index
    %272 = vector.load %arg10[%c0_110, %c0_111, %c0_112] : memref<8x8x128xf32, #tpu.memory_space<vmem>>, vector<8x8x128xf32>
    %273 = vector.shape_cast %272 : vector<8x8x128xf32> to vector<64x128xf32>
    %c1 = arith.constant 1 : index
    %c0_113 = arith.constant 0 : index
    %c0_114 = arith.constant 0 : index
    %274 = vector.load %arg2[%c1, %c0_113, %c0_114] : memref<2x128x384xf32, #tpu.memory_space<vmem>>, vector<1x128x384xf32>
    %275 = vector.shape_cast %274 : vector<1x128x384xf32> to vector<128x384xf32>
    %cst_115 = arith.constant dense<0.000000e+00> : vector<64x384xf32>
    %276 = tpu.matmul %273, %275, %cst_115 {dimension_numbers = #tpu.dot_dimension_numbers<[1], [0], [0], [1], [0, 0, 1, 1], [], []>} : vector<64x128xf32>, vector<128x384xf32>, vector<64x384xf32> -> vector<64x384xf32>
    %c1_116 = arith.constant 1 : index
    %c0_117 = arith.constant 0 : index
    %c0_118 = arith.constant 0 : index
    %277 = vector.load %arg4[%c1_116, %c0_117, %c0_118] : memref<2x1x384xf32, #tpu.memory_space<vmem>>, vector<1x1x384xf32>
    %278 = vector.shape_cast %277 : vector<1x1x384xf32> to vector<1x384xf32>
    %279 = vector.broadcast %278 : vector<1x384xf32> to vector<64x384xf32>
    %280 = arith.addf %276, %279 : vector<64x384xf32>
    %281 = vector.shape_cast %280 : vector<64x384xf32> to vector<8x8x384xf32>
    %c0_119 = arith.constant 0 : index
    %c0_120 = arith.constant 0 : index
    %c0_121 = arith.constant 0 : index
    %282 = vector.load %arg11[%c0_119, %c0_120, %c0_121] : memref<8x8x384xf32, #tpu.memory_space<vmem>>, vector<8x8x384xf32>
    tpu.vector_store %arg11[%c0_119, %c0_120, %c0_121], %281 {strides = array<i32>} : memref<8x8x384xf32, #tpu.memory_space<vmem>>, vector<8x8x384xf32>,
    %c1_122 = arith.constant 1 : index
    %c0_123 = arith.constant 0 : index
    %c0_124 = arith.constant 0 : index
    %283 = vector.load %arg5[%c1_122, %c0_123, %c0_124] : memref<2x1x128xf32, #tpu.memory_space<vmem>>, vector<1x1x128xf32>
    %284 = vector.shape_cast %283 : vector<1x1x128xf32> to vector<1x128xf32>
    %285 = vector.shape_cast %284 : vector<1x128xf32> to vector<1x128xf32>
    %286 = vector.broadcast %285 : vector<1x128xf32> to vector<8x128xf32>
    %c1_125 = arith.constant 1 : index
    %c0_126 = arith.constant 0 : index
    %c0_127 = arith.constant 0 : index
    %287 = vector.load %arg1[%c1_125, %c0_126, %c0_127] : memref<2x8x128xf32, #tpu.memory_space<vmem>>, vector<1x8x128xf32>
    %288 = vector.shape_cast %287 : vector<1x8x128xf32> to vector<8x128xf32>
    %c0_i32_128 = arith.constant 0 : i32
    %289 = arith.index_cast %c0_i32_128 : i32 to index
    %c0_129 = arith.constant 0 : index
    %c0_130 = arith.constant 0 : index
    %290 = vector.load %arg11[%289, %c0_129, %c0_130] : memref<8x8x384xf32, #tpu.memory_space<vmem>>, vector<1x8x384xf32>
    %291 = vector.shape_cast %290 : vector<1x8x384xf32> to vector<8x384xf32>
    %c1_131 = arith.constant 1 : index
    %c0_132 = arith.constant 0 : index
    %c0_133 = arith.constant 0 : index
    %292 = vector.load %arg3[%c1_131, %c0_132, %c0_133] : memref<2x128x384xf32, #tpu.memory_space<vmem>>, vector<1x128x384xf32>
    %293 = vector.shape_cast %292 : vector<1x128x384xf32> to vector<128x384xf32>
    %cst_134 = arith.constant dense<0.000000e+00> : vector<8x384xf32>
    %294 = tpu.matmul %288, %293, %cst_134 {dimension_numbers = #tpu.dot_dimension_numbers<[1], [0], [0], [1], [0, 0, 1, 1], [], []>} : vector<8x128xf32>, vector<128x384xf32>, vector<8x384xf32> -> vector<8x384xf32>
    %295 = vector.extract_strided_slice %291 {offsets = [0, 0], sizes = [8, 256], strides = [1, 1]} : vector<8x384xf32> to vector<8x256xf32>
    %296 = vector.extract_strided_slice %294 {offsets = [0, 0], sizes = [8, 256], strides = [1, 1]} : vector<8x384xf32> to vector<8x256xf32>
    %297 = arith.addf %295, %296 : vector<8x256xf32>
    %298 = arith.negf %297 : vector<8x256xf32>
    %299 = math.exp %298 : vector<8x256xf32>
    %cst_135 = arith.constant 1.000000e+00 : f32
    %300 = vector.broadcast %cst_135 : f32 to vector<8x256xf32>
    %301 = arith.addf %300, %299 : vector<8x256xf32>
    %302 = arith.divf %300, %301 : vector<8x256xf32>
    %303 = vector.extract_strided_slice %302 {offsets = [0, 0], sizes = [8, 128], strides = [1, 1]} : vector<8x256xf32> to vector<8x128xf32>
    %304 = vector.extract_strided_slice %302 {offsets = [0, 128], sizes = [8, 128], strides = [1, 1]} : vector<8x256xf32> to vector<8x128xf32>
    %305 = vector.extract_strided_slice %291 {offsets = [0, 256], sizes = [8, 128], strides = [1, 1]} : vector<8x384xf32> to vector<8x128xf32>
    %306 = vector.extract_strided_slice %294 {offsets = [0, 256], sizes = [8, 128], strides = [1, 1]} : vector<8x384xf32> to vector<8x128xf32>
    %307 = arith.addf %306, %286 : vector<8x128xf32>
    %308 = arith.mulf %303, %307 : vector<8x128xf32>
    %309 = arith.addf %305, %308 : vector<8x128xf32>
    %310 = math.tanh %309 : vector<8x128xf32>
    %cst_136 = arith.constant 1.000000e+00 : f32
    %311 = vector.broadcast %cst_136 : f32 to vector<8x128xf32>
    %312 = arith.subf %311, %304 : vector<8x128xf32>
    %313 = arith.mulf %312, %310 : vector<8x128xf32>
    %314 = arith.mulf %304, %288 : vector<8x128xf32>
    %315 = arith.addf %313, %314 : vector<8x128xf32>
    %c1_i32_137 = arith.constant 1 : i32
    %316 = arith.index_cast %c1_i32_137 : i32 to index
    %c0_138 = arith.constant 0 : index
    %c0_139 = arith.constant 0 : index
    %317 = vector.load %arg11[%316, %c0_138, %c0_139] : memref<8x8x384xf32, #tpu.memory_space<vmem>>, vector<1x8x384xf32>
    %318 = vector.shape_cast %317 : vector<1x8x384xf32> to vector<8x384xf32>
    %c1_140 = arith.constant 1 : index
    %c0_141 = arith.constant 0 : index
    %c0_142 = arith.constant 0 : index
    %319 = vector.load %arg3[%c1_140, %c0_141, %c0_142] : memref<2x128x384xf32, #tpu.memory_space<vmem>>, vector<1x128x384xf32>
    %320 = vector.shape_cast %319 : vector<1x128x384xf32> to vector<128x384xf32>
    %cst_143 = arith.constant dense<0.000000e+00> : vector<8x384xf32>
    %321 = tpu.matmul %315, %320, %cst_143 {dimension_numbers = #tpu.dot_dimension_numbers<[1], [0], [0], [1], [0, 0, 1, 1], [], []>} : vector<8x128xf32>, vector<128x384xf32>, vector<8x384xf32> -> vector<8x384xf32>
    %322 = vector.extract_strided_slice %318 {offsets = [0, 0], sizes = [8, 256], strides = [1, 1]} : vector<8x384xf32> to vector<8x256xf32>
    %323 = vector.extract_strided_slice %321 {offsets = [0, 0], sizes = [8, 256], strides = [1, 1]} : vector<8x384xf32> to vector<8x256xf32>
    %324 = arith.addf %322, %323 : vector<8x256xf32>
    %325 = arith.negf %324 : vector<8x256xf32>
    %326 = math.exp %325 : vector<8x256xf32>
    %cst_144 = arith.constant 1.000000e+00 : f32
    %327 = vector.broadcast %cst_144 : f32 to vector<8x256xf32>
    %328 = arith.addf %327, %326 : vector<8x256xf32>
    %329 = arith.divf %327, %328 : vector<8x256xf32>
    %330 = vector.extract_strided_slice %329 {offsets = [0, 0], sizes = [8, 128], strides = [1, 1]} : vector<8x256xf32> to vector<8x128xf32>
    %331 = vector.extract_strided_slice %329 {offsets = [0, 128], sizes = [8, 128], strides = [1, 1]} : vector<8x256xf32> to vector<8x128xf32>
    %332 = vector.extract_strided_slice %318 {offsets = [0, 256], sizes = [8, 128], strides = [1, 1]} : vector<8x384xf32> to vector<8x128xf32>
    %333 = vector.extract_strided_slice %321 {offsets = [0, 256], sizes = [8, 128], strides = [1, 1]} : vector<8x384xf32> to vector<8x128xf32>
    %334 = arith.addf %333, %286 : vector<8x128xf32>
    %335 = arith.mulf %330, %334 : vector<8x128xf32>
    %336 = arith.addf %332, %335 : vector<8x128xf32>
    %337 = math.tanh %336 : vector<8x128xf32>
    %cst_145 = arith.constant 1.000000e+00 : f32
    %338 = vector.broadcast %cst_145 : f32 to vector<8x128xf32>
    %339 = arith.subf %338, %331 : vector<8x128xf32>
    %340 = arith.mulf %339, %337 : vector<8x128xf32>
    %341 = arith.mulf %331, %315 : vector<8x128xf32>
    %342 = arith.addf %340, %341 : vector<8x128xf32>
    %c2_i32_146 = arith.constant 2 : i32
    %343 = arith.index_cast %c2_i32_146 : i32 to index
    %c0_147 = arith.constant 0 : index
    %c0_148 = arith.constant 0 : index
    %344 = vector.load %arg11[%343, %c0_147, %c0_148] : memref<8x8x384xf32, #tpu.memory_space<vmem>>, vector<1x8x384xf32>
    %345 = vector.shape_cast %344 : vector<1x8x384xf32> to vector<8x384xf32>
    %c1_149 = arith.constant 1 : index
    %c0_150 = arith.constant 0 : index
    %c0_151 = arith.constant 0 : index
    %346 = vector.load %arg3[%c1_149, %c0_150, %c0_151] : memref<2x128x384xf32, #tpu.memory_space<vmem>>, vector<1x128x384xf32>
    %347 = vector.shape_cast %346 : vector<1x128x384xf32> to vector<128x384xf32>
    %cst_152 = arith.constant dense<0.000000e+00> : vector<8x384xf32>
    %348 = tpu.matmul %342, %347, %cst_152 {dimension_numbers = #tpu.dot_dimension_numbers<[1], [0], [0], [1], [0, 0, 1, 1], [], []>} : vector<8x128xf32>, vector<128x384xf32>, vector<8x384xf32> -> vector<8x384xf32>
    %349 = vector.extract_strided_slice %345 {offsets = [0, 0], sizes = [8, 256], strides = [1, 1]} : vector<8x384xf32> to vector<8x256xf32>
    %350 = vector.extract_strided_slice %348 {offsets = [0, 0], sizes = [8, 256], strides = [1, 1]} : vector<8x384xf32> to vector<8x256xf32>
    %351 = arith.addf %349, %350 : vector<8x256xf32>
    %352 = arith.negf %351 : vector<8x256xf32>
    %353 = math.exp %352 : vector<8x256xf32>
    %cst_153 = arith.constant 1.000000e+00 : f32
    %354 = vector.broadcast %cst_153 : f32 to vector<8x256xf32>
    %355 = arith.addf %354, %353 : vector<8x256xf32>
    %356 = arith.divf %354, %355 : vector<8x256xf32>
    %357 = vector.extract_strided_slice %356 {offsets = [0, 0], sizes = [8, 128], strides = [1, 1]} : vector<8x256xf32> to vector<8x128xf32>
    %358 = vector.extract_strided_slice %356 {offsets = [0, 128], sizes = [8, 128], strides = [1, 1]} : vector<8x256xf32> to vector<8x128xf32>
    %359 = vector.extract_strided_slice %345 {offsets = [0, 256], sizes = [8, 128], strides = [1, 1]} : vector<8x384xf32> to vector<8x128xf32>
    %360 = vector.extract_strided_slice %348 {offsets = [0, 256], sizes = [8, 128], strides = [1, 1]} : vector<8x384xf32> to vector<8x128xf32>
    %361 = arith.addf %360, %286 : vector<8x128xf32>
    %362 = arith.mulf %357, %361 : vector<8x128xf32>
    %363 = arith.addf %359, %362 : vector<8x128xf32>
    %364 = math.tanh %363 : vector<8x128xf32>
    %cst_154 = arith.constant 1.000000e+00 : f32
    %365 = vector.broadcast %cst_154 : f32 to vector<8x128xf32>
    %366 = arith.subf %365, %358 : vector<8x128xf32>
    %367 = arith.mulf %366, %364 : vector<8x128xf32>
    %368 = arith.mulf %358, %342 : vector<8x128xf32>
    %369 = arith.addf %367, %368 : vector<8x128xf32>
    %c3_i32_155 = arith.constant 3 : i32
    %370 = arith.index_cast %c3_i32_155 : i32 to index
    %c0_156 = arith.constant 0 : index
    %c0_157 = arith.constant 0 : index
    %371 = vector.load %arg11[%370, %c0_156, %c0_157] : memref<8x8x384xf32, #tpu.memory_space<vmem>>, vector<1x8x384xf32>
    %372 = vector.shape_cast %371 : vector<1x8x384xf32> to vector<8x384xf32>
    %c1_158 = arith.constant 1 : index
    %c0_159 = arith.constant 0 : index
    %c0_160 = arith.constant 0 : index
    %373 = vector.load %arg3[%c1_158, %c0_159, %c0_160] : memref<2x128x384xf32, #tpu.memory_space<vmem>>, vector<1x128x384xf32>
    %374 = vector.shape_cast %373 : vector<1x128x384xf32> to vector<128x384xf32>
    %cst_161 = arith.constant dense<0.000000e+00> : vector<8x384xf32>
    %375 = tpu.matmul %369, %374, %cst_161 {dimension_numbers = #tpu.dot_dimension_numbers<[1], [0], [0], [1], [0, 0, 1, 1], [], []>} : vector<8x128xf32>, vector<128x384xf32>, vector<8x384xf32> -> vector<8x384xf32>
    %376 = vector.extract_strided_slice %372 {offsets = [0, 0], sizes = [8, 256], strides = [1, 1]} : vector<8x384xf32> to vector<8x256xf32>
    %377 = vector.extract_strided_slice %375 {offsets = [0, 0], sizes = [8, 256], strides = [1, 1]} : vector<8x384xf32> to vector<8x256xf32>
    %378 = arith.addf %376, %377 : vector<8x256xf32>
    %379 = arith.negf %378 : vector<8x256xf32>
    %380 = math.exp %379 : vector<8x256xf32>
    %cst_162 = arith.constant 1.000000e+00 : f32
    %381 = vector.broadcast %cst_162 : f32 to vector<8x256xf32>
    %382 = arith.addf %381, %380 : vector<8x256xf32>
    %383 = arith.divf %381, %382 : vector<8x256xf32>
    %384 = vector.extract_strided_slice %383 {offsets = [0, 0], sizes = [8, 128], strides = [1, 1]} : vector<8x256xf32> to vector<8x128xf32>
    %385 = vector.extract_strided_slice %383 {offsets = [0, 128], sizes = [8, 128], strides = [1, 1]} : vector<8x256xf32> to vector<8x128xf32>
    %386 = vector.extract_strided_slice %372 {offsets = [0, 256], sizes = [8, 128], strides = [1, 1]} : vector<8x384xf32> to vector<8x128xf32>
    %387 = vector.extract_strided_slice %375 {offsets = [0, 256], sizes = [8, 128], strides = [1, 1]} : vector<8x384xf32> to vector<8x128xf32>
    %388 = arith.addf %387, %286 : vector<8x128xf32>
    %389 = arith.mulf %384, %388 : vector<8x128xf32>
    %390 = arith.addf %386, %389 : vector<8x128xf32>
    %391 = math.tanh %390 : vector<8x128xf32>
    %cst_163 = arith.constant 1.000000e+00 : f32
    %392 = vector.broadcast %cst_163 : f32 to vector<8x128xf32>
    %393 = arith.subf %392, %385 : vector<8x128xf32>
    %394 = arith.mulf %393, %391 : vector<8x128xf32>
    %395 = arith.mulf %385, %369 : vector<8x128xf32>
    %396 = arith.addf %394, %395 : vector<8x128xf32>
    %c4_i32_164 = arith.constant 4 : i32
    %397 = arith.index_cast %c4_i32_164 : i32 to index
    %c0_165 = arith.constant 0 : index
    %c0_166 = arith.constant 0 : index
    %398 = vector.load %arg11[%397, %c0_165, %c0_166] : memref<8x8x384xf32, #tpu.memory_space<vmem>>, vector<1x8x384xf32>
    %399 = vector.shape_cast %398 : vector<1x8x384xf32> to vector<8x384xf32>
    %c1_167 = arith.constant 1 : index
    %c0_168 = arith.constant 0 : index
    %c0_169 = arith.constant 0 : index
    %400 = vector.load %arg3[%c1_167, %c0_168, %c0_169] : memref<2x128x384xf32, #tpu.memory_space<vmem>>, vector<1x128x384xf32>
    %401 = vector.shape_cast %400 : vector<1x128x384xf32> to vector<128x384xf32>
    %cst_170 = arith.constant dense<0.000000e+00> : vector<8x384xf32>
    %402 = tpu.matmul %396, %401, %cst_170 {dimension_numbers = #tpu.dot_dimension_numbers<[1], [0], [0], [1], [0, 0, 1, 1], [], []>} : vector<8x128xf32>, vector<128x384xf32>, vector<8x384xf32> -> vector<8x384xf32>
    %403 = vector.extract_strided_slice %399 {offsets = [0, 0], sizes = [8, 256], strides = [1, 1]} : vector<8x384xf32> to vector<8x256xf32>
    %404 = vector.extract_strided_slice %402 {offsets = [0, 0], sizes = [8, 256], strides = [1, 1]} : vector<8x384xf32> to vector<8x256xf32>
    %405 = arith.addf %403, %404 : vector<8x256xf32>
    %406 = arith.negf %405 : vector<8x256xf32>
    %407 = math.exp %406 : vector<8x256xf32>
    %cst_171 = arith.constant 1.000000e+00 : f32
    %408 = vector.broadcast %cst_171 : f32 to vector<8x256xf32>
    %409 = arith.addf %408, %407 : vector<8x256xf32>
    %410 = arith.divf %408, %409 : vector<8x256xf32>
    %411 = vector.extract_strided_slice %410 {offsets = [0, 0], sizes = [8, 128], strides = [1, 1]} : vector<8x256xf32> to vector<8x128xf32>
    %412 = vector.extract_strided_slice %410 {offsets = [0, 128], sizes = [8, 128], strides = [1, 1]} : vector<8x256xf32> to vector<8x128xf32>
    %413 = vector.extract_strided_slice %399 {offsets = [0, 256], sizes = [8, 128], strides = [1, 1]} : vector<8x384xf32> to vector<8x128xf32>
    %414 = vector.extract_strided_slice %402 {offsets = [0, 256], sizes = [8, 128], strides = [1, 1]} : vector<8x384xf32> to vector<8x128xf32>
    %415 = arith.addf %414, %286 : vector<8x128xf32>
    %416 = arith.mulf %411, %415 : vector<8x128xf32>
    %417 = arith.addf %413, %416 : vector<8x128xf32>
    %418 = math.tanh %417 : vector<8x128xf32>
    %cst_172 = arith.constant 1.000000e+00 : f32
    %419 = vector.broadcast %cst_172 : f32 to vector<8x128xf32>
    %420 = arith.subf %419, %412 : vector<8x128xf32>
    %421 = arith.mulf %420, %418 : vector<8x128xf32>
    %422 = arith.mulf %412, %396 : vector<8x128xf32>
    %423 = arith.addf %421, %422 : vector<8x128xf32>
    %c5_i32_173 = arith.constant 5 : i32
    %424 = arith.index_cast %c5_i32_173 : i32 to index
    %c0_174 = arith.constant 0 : index
    %c0_175 = arith.constant 0 : index
    %425 = vector.load %arg11[%424, %c0_174, %c0_175] : memref<8x8x384xf32, #tpu.memory_space<vmem>>, vector<1x8x384xf32>
    %426 = vector.shape_cast %425 : vector<1x8x384xf32> to vector<8x384xf32>
    %c1_176 = arith.constant 1 : index
    %c0_177 = arith.constant 0 : index
    %c0_178 = arith.constant 0 : index
    %427 = vector.load %arg3[%c1_176, %c0_177, %c0_178] : memref<2x128x384xf32, #tpu.memory_space<vmem>>, vector<1x128x384xf32>
    %428 = vector.shape_cast %427 : vector<1x128x384xf32> to vector<128x384xf32>
    %cst_179 = arith.constant dense<0.000000e+00> : vector<8x384xf32>
    %429 = tpu.matmul %423, %428, %cst_179 {dimension_numbers = #tpu.dot_dimension_numbers<[1], [0], [0], [1], [0, 0, 1, 1], [], []>} : vector<8x128xf32>, vector<128x384xf32>, vector<8x384xf32> -> vector<8x384xf32>
    %430 = vector.extract_strided_slice %426 {offsets = [0, 0], sizes = [8, 256], strides = [1, 1]} : vector<8x384xf32> to vector<8x256xf32>
    %431 = vector.extract_strided_slice %429 {offsets = [0, 0], sizes = [8, 256], strides = [1, 1]} : vector<8x384xf32> to vector<8x256xf32>
    %432 = arith.addf %430, %431 : vector<8x256xf32>
    %433 = arith.negf %432 : vector<8x256xf32>
    %434 = math.exp %433 : vector<8x256xf32>
    %cst_180 = arith.constant 1.000000e+00 : f32
    %435 = vector.broadcast %cst_180 : f32 to vector<8x256xf32>
    %436 = arith.addf %435, %434 : vector<8x256xf32>
    %437 = arith.divf %435, %436 : vector<8x256xf32>
    %438 = vector.extract_strided_slice %437 {offsets = [0, 0], sizes = [8, 128], strides = [1, 1]} : vector<8x256xf32> to vector<8x128xf32>
    %439 = vector.extract_strided_slice %437 {offsets = [0, 128], sizes = [8, 128], strides = [1, 1]} : vector<8x256xf32> to vector<8x128xf32>
    %440 = vector.extract_strided_slice %426 {offsets = [0, 256], sizes = [8, 128], strides = [1, 1]} : vector<8x384xf32> to vector<8x128xf32>
    %441 = vector.extract_strided_slice %429 {offsets = [0, 256], sizes = [8, 128], strides = [1, 1]} : vector<8x384xf32> to vector<8x128xf32>
    %442 = arith.addf %441, %286 : vector<8x128xf32>
    %443 = arith.mulf %438, %442 : vector<8x128xf32>
    %444 = arith.addf %440, %443 : vector<8x128xf32>
    %445 = math.tanh %444 : vector<8x128xf32>
    %cst_181 = arith.constant 1.000000e+00 : f32
    %446 = vector.broadcast %cst_181 : f32 to vector<8x128xf32>
    %447 = arith.subf %446, %439 : vector<8x128xf32>
    %448 = arith.mulf %447, %445 : vector<8x128xf32>
    %449 = arith.mulf %439, %423 : vector<8x128xf32>
    %450 = arith.addf %448, %449 : vector<8x128xf32>
    %c6_i32_182 = arith.constant 6 : i32
    %451 = arith.index_cast %c6_i32_182 : i32 to index
    %c0_183 = arith.constant 0 : index
    %c0_184 = arith.constant 0 : index
    %452 = vector.load %arg11[%451, %c0_183, %c0_184] : memref<8x8x384xf32, #tpu.memory_space<vmem>>, vector<1x8x384xf32>
    %453 = vector.shape_cast %452 : vector<1x8x384xf32> to vector<8x384xf32>
    %c1_185 = arith.constant 1 : index
    %c0_186 = arith.constant 0 : index
    %c0_187 = arith.constant 0 : index
    %454 = vector.load %arg3[%c1_185, %c0_186, %c0_187] : memref<2x128x384xf32, #tpu.memory_space<vmem>>, vector<1x128x384xf32>
    %455 = vector.shape_cast %454 : vector<1x128x384xf32> to vector<128x384xf32>
    %cst_188 = arith.constant dense<0.000000e+00> : vector<8x384xf32>
    %456 = tpu.matmul %450, %455, %cst_188 {dimension_numbers = #tpu.dot_dimension_numbers<[1], [0], [0], [1], [0, 0, 1, 1], [], []>} : vector<8x128xf32>, vector<128x384xf32>, vector<8x384xf32> -> vector<8x384xf32>
    %457 = vector.extract_strided_slice %453 {offsets = [0, 0], sizes = [8, 256], strides = [1, 1]} : vector<8x384xf32> to vector<8x256xf32>
    %458 = vector.extract_strided_slice %456 {offsets = [0, 0], sizes = [8, 256], strides = [1, 1]} : vector<8x384xf32> to vector<8x256xf32>
    %459 = arith.addf %457, %458 : vector<8x256xf32>
    %460 = arith.negf %459 : vector<8x256xf32>
    %461 = math.exp %460 : vector<8x256xf32>
    %cst_189 = arith.constant 1.000000e+00 : f32
    %462 = vector.broadcast %cst_189 : f32 to vector<8x256xf32>
    %463 = arith.addf %462, %461 : vector<8x256xf32>
    %464 = arith.divf %462, %463 : vector<8x256xf32>
    %465 = vector.extract_strided_slice %464 {offsets = [0, 0], sizes = [8, 128], strides = [1, 1]} : vector<8x256xf32> to vector<8x128xf32>
    %466 = vector.extract_strided_slice %464 {offsets = [0, 128], sizes = [8, 128], strides = [1, 1]} : vector<8x256xf32> to vector<8x128xf32>
    %467 = vector.extract_strided_slice %453 {offsets = [0, 256], sizes = [8, 128], strides = [1, 1]} : vector<8x384xf32> to vector<8x128xf32>
    %468 = vector.extract_strided_slice %456 {offsets = [0, 256], sizes = [8, 128], strides = [1, 1]} : vector<8x384xf32> to vector<8x128xf32>
    %469 = arith.addf %468, %286 : vector<8x128xf32>
    %470 = arith.mulf %465, %469 : vector<8x128xf32>
    %471 = arith.addf %467, %470 : vector<8x128xf32>
    %472 = math.tanh %471 : vector<8x128xf32>
    %cst_190 = arith.constant 1.000000e+00 : f32
    %473 = vector.broadcast %cst_190 : f32 to vector<8x128xf32>
    %474 = arith.subf %473, %466 : vector<8x128xf32>
    %475 = arith.mulf %474, %472 : vector<8x128xf32>
    %476 = arith.mulf %466, %450 : vector<8x128xf32>
    %477 = arith.addf %475, %476 : vector<8x128xf32>
    %c7_i32_191 = arith.constant 7 : i32
    %478 = arith.index_cast %c7_i32_191 : i32 to index
    %c0_192 = arith.constant 0 : index
    %c0_193 = arith.constant 0 : index
    %479 = vector.load %arg11[%478, %c0_192, %c0_193] : memref<8x8x384xf32, #tpu.memory_space<vmem>>, vector<1x8x384xf32>
    %480 = vector.shape_cast %479 : vector<1x8x384xf32> to vector<8x384xf32>
    %c1_194 = arith.constant 1 : index
    %c0_195 = arith.constant 0 : index
    %c0_196 = arith.constant 0 : index
    %481 = vector.load %arg3[%c1_194, %c0_195, %c0_196] : memref<2x128x384xf32, #tpu.memory_space<vmem>>, vector<1x128x384xf32>
    %482 = vector.shape_cast %481 : vector<1x128x384xf32> to vector<128x384xf32>
    %cst_197 = arith.constant dense<0.000000e+00> : vector<8x384xf32>
    %483 = tpu.matmul %477, %482, %cst_197 {dimension_numbers = #tpu.dot_dimension_numbers<[1], [0], [0], [1], [0, 0, 1, 1], [], []>} : vector<8x128xf32>, vector<128x384xf32>, vector<8x384xf32> -> vector<8x384xf32>
    %484 = vector.extract_strided_slice %480 {offsets = [0, 0], sizes = [8, 256], strides = [1, 1]} : vector<8x384xf32> to vector<8x256xf32>
    %485 = vector.extract_strided_slice %483 {offsets = [0, 0], sizes = [8, 256], strides = [1, 1]} : vector<8x384xf32> to vector<8x256xf32>
    %486 = arith.addf %484, %485 : vector<8x256xf32>
    %487 = arith.negf %486 : vector<8x256xf32>
    %488 = math.exp %487 : vector<8x256xf32>
    %cst_198 = arith.constant 1.000000e+00 : f32
    %489 = vector.broadcast %cst_198 : f32 to vector<8x256xf32>
    %490 = arith.addf %489, %488 : vector<8x256xf32>
    %491 = arith.divf %489, %490 : vector<8x256xf32>
    %492 = vector.extract_strided_slice %491 {offsets = [0, 0], sizes = [8, 128], strides = [1, 1]} : vector<8x256xf32> to vector<8x128xf32>
    %493 = vector.extract_strided_slice %491 {offsets = [0, 128], sizes = [8, 128], strides = [1, 1]} : vector<8x256xf32> to vector<8x128xf32>
    %494 = vector.extract_strided_slice %480 {offsets = [0, 256], sizes = [8, 128], strides = [1, 1]} : vector<8x384xf32> to vector<8x128xf32>
    %495 = vector.extract_strided_slice %483 {offsets = [0, 256], sizes = [8, 128], strides = [1, 1]} : vector<8x384xf32> to vector<8x128xf32>
    %496 = arith.addf %495, %286 : vector<8x128xf32>
    %497 = arith.mulf %492, %496 : vector<8x128xf32>
    %498 = arith.addf %494, %497 : vector<8x128xf32>
    %499 = math.tanh %498 : vector<8x128xf32>
    %cst_199 = arith.constant 1.000000e+00 : f32
    %500 = vector.broadcast %cst_199 : f32 to vector<8x128xf32>
    %501 = arith.subf %500, %493 : vector<8x128xf32>
    %502 = arith.mulf %501, %499 : vector<8x128xf32>
    %503 = arith.mulf %493, %477 : vector<8x128xf32>
    %504 = arith.addf %502, %503 : vector<8x128xf32>
    %c8_i32_200 = arith.constant 8 : i32
    %c1_201 = arith.constant 1 : index
    %c0_202 = arith.constant 0 : index
    %c0_203 = arith.constant 0 : index
    %505 = vector.load %arg9[%c1_201, %c0_202, %c0_203] : memref<2x8x128xf32, #tpu.memory_space<vmem>>, vector<1x8x128xf32>
    %506 = vector.shape_cast %505 : vector<1x8x128xf32> to vector<8x128xf32>
    %507 = vector.shape_cast %504 : vector<8x128xf32> to vector<1x8x128xf32>
    tpu.vector_store %arg9[%c1_201, %c0_202, %c0_203], %507 {strides = array<i32>} : memref<2x8x128xf32, #tpu.memory_space<vmem>>, vector<1x8x128xf32>,
    %cst_204 = arith.constant 0.000000e+00 : f32
    %508 = vector.broadcast %cst_204 : f32 to vector<8x128xf32>
    %509 = arith.maximumf %504, %508 : vector<8x128xf32>
    %c0_205 = arith.constant 0 : index
    %c0_206 = arith.constant 0 : index
    %510 = vector.load %arg6[%c0_205, %c0_206] : memref<128x128xf32, #tpu.memory_space<vmem>>, vector<128x128xf32>
    %cst_207 = arith.constant dense<0.000000e+00> : vector<8x128xf32>
    %511 = tpu.matmul %509, %510, %cst_207 {dimension_numbers = #tpu.dot_dimension_numbers<[1], [0], [0], [1], [0, 0, 1, 1], [], []>} : vector<8x128xf32>, vector<128x128xf32>, vector<8x128xf32> -> vector<8x128xf32>
    %c0_208 = arith.constant 0 : index
    %c0_209 = arith.constant 0 : index
    %512 = vector.load %arg7[%c0_208, %c0_209] : memref<1x128xf32, #tpu.memory_space<vmem>>, vector<1x128xf32>
    %513 = vector.broadcast %512 : vector<1x128xf32> to vector<8x128xf32>
    %514 = arith.addf %511, %513 : vector<8x128xf32>
    %c0_210 = arith.constant 0 : index
    %c0_211 = arith.constant 0 : index
    %515 = vector.load %arg8[%c0_210, %c0_211] : memref<8x128xf32, #tpu.memory_space<vmem>>, vector<8x128xf32>
    tpu.vector_store %arg8[%c0_210, %c0_211], %514 {strides = array<i32>} : memref<8x128xf32, #tpu.memory_space<vmem>>, vector<8x128xf32>,
    return
  }
}

</mosaic_0001>

<llo_original>
// kernel: grunet_forward.1
$region0: #{grunet_forward.1}
  #allocation0 [shape = 'u32[]', space=smem, size = 0x4, offset = 0x4, fixed_abs, tag = 'smem constant byte address 0x4 - core index']
  #allocation1 [shape = 'u32[72,128]{1,0:T(1,128)}', space=vmem, size = 0x9000, scoped, tag = 'internal scratch']
  #allocation2 [shape = 'f32[8,8,128]{2,1,0:T(8,128)}', space=vmem, size = 0x8000, scoped, tag = 'scratch operand']
  #allocation3 [shape = 'f32[8,8,384]{2,1,0:T(8,128)}', space=vmem, size = 0x18000, scoped, tag = 'scratch operand']
  %s0 = inlined_call_operand.vmem [shape: f32[8,2,16], index: 0, kind: input, shape index: {}]
  %s1 = inlined_call_operand.vmem [shape: f32[2,8,128], index: 1, kind: input, shape index: {}]
  %s2 = inlined_call_operand.hbm [shape: f32[2,128,384], index: 2, kind: input, shape index: {}]
  %s3 = inlined_call_operand.hbm [shape: f32[2,128,384], index: 3, kind: input, shape index: {}]
  %s4 = inlined_call_operand.vmem [shape: f32[2,1,384], index: 4, kind: input, shape index: {}]
  %s5 = inlined_call_operand.vmem [shape: f32[2,1,128], index: 5, kind: input, shape index: {}]
  %s6 = inlined_call_operand.hbm [shape: f32[128,128], index: 6, kind: input, shape index: {}]
  %s7 = inlined_call_operand.vmem [shape: f32[1,128], index: 7, kind: input, shape index: {}]
  %s8 = inlined_call_operand.vmem [shape: f32[8,128], index: 8, kind: output, shape index: {0}]
  %s9 = inlined_call_operand.vmem [shape: f32[2,8,128], index: 9, kind: output, shape index: {1}]
  %10 = xla_tuple %s8, %s9
  %s11 = sld [smem:[#allocation0]]
  $region62: #{grunet_forward.1} parent=0
    _
  %s13 = ssub.s32 1, %s11
  %s14 = scalar_select 0, %s13, %s11
  $region1: #{grunet_forward.1} parent=0
    #allocation4 [shape = 'u8[393216]{0}', space=vmem, size = 0x60000, scoped, tag = 'input window, operand 2, single buffered']
    #allocation5 [shape = 's32[1]{0}', space=sflag, size = 0x4, scoped, tag = 'scoped memory for grunet_forward.1']
    #allocation6 [shape = 'u8[393216]{0}', space=vmem, size = 0x60000, scoped, tag = 'input window, operand 3, single buffered']
    #allocation7 [shape = 's32[1]{0}', space=sflag, size = 0x4, scoped, tag = 'scoped memory for grunet_forward.1']
    #allocation8 [shape = 'u8[65536]{0}', space=vmem, size = 0x10000, scoped, tag = 'input window, operand 6, single buffered']
    %15 = vsyncpa [#allocation5], 0
    %16 = vsyncpa [#allocation7], 0
    // Predicated region
    $region2: #{grunet_forward.1} parent=1 // pred_check
      _
    $region3: #{grunet_forward.1} parent=1 // pred_check_branch
      %18 = sbr.rel (0) target = $region5
    $region4: #{grunet_forward.1} parent=1 // pred_region
      _
    $region5: #{grunet_forward.1} parent=1 // pred_fallthru
      _
    // Predicated region
    $region6: #{grunet_forward.1} parent=1 // pred_check
      _
    $region7: #{grunet_forward.1} parent=1 // pred_check_branch
      %20 = sbr.rel (0) target = $region9
    $region8: #{grunet_forward.1} parent=1 // pred_region
      _
    $region9: #{grunet_forward.1} parent=1 // pred_fallthru
      _
    // Predicated region
    $region10: #{grunet_forward.1} parent=1 // pred_check
      _
    $region11: #{grunet_forward.1} parent=1 // pred_check_branch
      %22 = sbr.rel (0) target = $region13
    $region12: #{grunet_forward.1} parent=1 // pred_region
      %24 = vsyncadd [#allocation5], 0
      %s25 = sshll.u32 %s2, 4
      %s26 = int_to_ptr.hbm [resolvable:$true] %s25
      %s27 = sshll.u32 [#allocation4], 4
      %s28 = int_to_ptr.vmem [resolvable:$true] %s27
      %33 = dma.hbm_to_vmem [thread:$0]  %s26, 12288, %s28, [#allocation5], 384, 384, 24
    $region13: #{grunet_forward.1} parent=1 // pred_fallthru
      _
    // Predicated region
    $region14: #{grunet_forward.1} parent=1 // pred_check
      _
    $region15: #{grunet_forward.1} parent=1 // pred_check_branch
      %35 = sbr.rel (0) target = $region17
    $region16: #{grunet_forward.1} parent=1 // pred_region
      %37 = vsyncadd [#allocation7], 0
      %s38 = sshll.u32 %s3, 4
      %s39 = int_to_ptr.hbm [resolvable:$true] %s38
      %s40 = sshll.u32 [#allocation6], 4
      %s41 = int_to_ptr.vmem [resolvable:$true] %s40
      %46 = dma.hbm_to_vmem [thread:$0]  %s39, 12288, %s41, [#allocation7], 384, 384, 24
    $region17: #{grunet_forward.1} parent=1 // pred_fallthru
      _
    // Predicated region
    $region18: #{grunet_forward.1} parent=1 // pred_check
      _
    $region19: #{grunet_forward.1} parent=1 // pred_check_branch
      %48 = sbr.rel (0) target = $region21
    $region20: #{grunet_forward.1} parent=1 // pred_region
      _
    $region21: #{grunet_forward.1} parent=1 // pred_fallthru
      _
    // Predicated region
    $region22: #{grunet_forward.1} parent=1 // pred_check
      _
    $region23: #{grunet_forward.1} parent=1 // pred_check_branch
      %50 = sbr.rel (0) target = $region25
    $region24: #{grunet_forward.1} parent=1 // pred_region
      _
    $region25: #{grunet_forward.1} parent=1 // pred_fallthru
      _
    // Predicated region
    $region26: #{grunet_forward.1} parent=1 // pred_check
      _
    $region27: #{grunet_forward.1} parent=1 // pred_check_branch
      %52 = sbr.rel (0) target = $region29
    $region28: #{grunet_forward.1} parent=1 // pred_region
      %54 = vsyncadd [#allocation7], 0
      %s55 = sshll.u32 %s6, 4
      %s56 = int_to_ptr.hbm [resolvable:$true] %s55
      %s57 = sshll.u32 [#allocation8], 4
      %s58 = int_to_ptr.vmem [resolvable:$true] %s57
      %63 = dma.hbm_to_vmem [thread:$0]  %s56, 2048, %s58, [#allocation7], 128, 128, 8
    $region29: #{grunet_forward.1} parent=1 // pred_fallthru
      _
    // Predicated region
    $region30: #{grunet_forward.1} parent=1 // pred_check
      _
    $region31: #{grunet_forward.1} parent=1 // pred_check_branch
      %65 = sbr.rel (0) target = $region33
    $region32: #{grunet_forward.1} parent=1 // pred_region
      _
    $region33: #{grunet_forward.1} parent=1 // pred_fallthru
      _
    // Predicated region
    $region34: #{grunet_forward.1} parent=1 // pred_check
      _
    $region35: #{grunet_forward.1} parent=1 // pred_check_branch
      %67 = sbr.rel (0) target = $region37
    $region36: #{grunet_forward.1} parent=1 // pred_region
      %69 = dma.done [#allocation5], 12288
    $region37: #{grunet_forward.1} parent=1 // pred_fallthru
      _
    // Predicated region
    $region38: #{grunet_forward.1} parent=1 // pred_check
      _
    $region39: #{grunet_forward.1} parent=1 // pred_check_branch
      %71 = sbr.rel (0) target = $region41
    $region40: #{grunet_forward.1} parent=1 // pred_region
      %73 = dma.done [#allocation7], 12288
    $region41: #{grunet_forward.1} parent=1 // pred_fallthru
      _
    // Predicated region
    $region42: #{grunet_forward.1} parent=1 // pred_check
      _
    $region43: #{grunet_forward.1} parent=1 // pred_check_branch
      %75 = sbr.rel (0) target = $region45
    $region44: #{grunet_forward.1} parent=1 // pred_region
      %77 = dma.done [#allocation7], 2048
    $region45: #{grunet_forward.1} parent=1 // pred_fallthru
      _
    %78 = vst [vmem:[#allocation2] sm:$0xff] 0.0
    %79 = vst [vmem:[#allocation2 + $0x8] sm:$0xff] 0.0
    %80 = vst [vmem:[#allocation2 + $0x10] sm:$0xff] 0.0
    %81 = vst [vmem:[#allocation2 + $0x18] sm:$0xff] 0.0
    %82 = vst [vmem:[#allocation2 + $0x20] sm:$0xff] 0.0
    %83 = vst [vmem:[#allocation2 + $0x28] sm:$0xff] 0.0
    %84 = vst [vmem:[#allocation2 + $0x30] sm:$0xff] 0.0
    %85 = vst [vmem:[#allocation2 + $0x38] sm:$0xff] 0.0
    %v86 = vld [vmem:[%s0] sm:$0x3]
    %v87 = vld [vmem:[%s0 + $0x2] sm:$0x3]
    %v88 = vld [vmem:[%s0 + $0x4] sm:$0x3]
    %v89 = vld [vmem:[%s0 + $0x6] sm:$0x3]
    %v90 = vld [vmem:[%s0 + $0x8] sm:$0x3]
    %v91 = vld [vmem:[%s0 + $0xa] sm:$0x3]
    %v92 = vld [vmem:[%s0 + $0xc] sm:$0x3]
    %v93 = vld [vmem:[%s0 + $0xe] sm:$0x3]
    %vm94 = vcmask 123904
    %95 = vst.msk [vmem:[#allocation2] sm:$0x3] %vm94, %v86
    %96 = vst.msk [vmem:[#allocation2 + $0x8] sm:$0x3] %vm94, %v87
    %97 = vst.msk [vmem:[#allocation2 + $0x10] sm:$0x3] %vm94, %v88
    %98 = vst.msk [vmem:[#allocation2 + $0x18] sm:$0x3] %vm94, %v89
    %99 = vst.msk [vmem:[#allocation2 + $0x20] sm:$0x3] %vm94, %v90
    %100 = vst.msk [vmem:[#allocation2 + $0x28] sm:$0x3] %vm94, %v91
    %101 = vst.msk [vmem:[#allocation2 + $0x30] sm:$0x3] %vm94, %v92
    %102 = vst.msk [vmem:[#allocation2 + $0x38] sm:$0x3] %vm94, %v93
    %v103 = vld [vmem:[#allocation2] sm:$0xff]
    %v104 = vld [vmem:[#allocation2 + $0x8] sm:$0xff]
    %v105 = vld [vmem:[#allocation2 + $0x10] sm:$0xff]
    %v106 = vld [vmem:[#allocation2 + $0x18] sm:$0xff]
    %v107 = vld [vmem:[#allocation2 + $0x20] sm:$0xff]
    %v108 = vld [vmem:[#allocation2 + $0x28] sm:$0xff]
    %v109 = vld [vmem:[#allocation2 + $0x30] sm:$0xff]
    %v110 = vld [vmem:[#allocation2 + $0x38] sm:$0xff]
    %v111 = vld [vmem:[#allocation4] sm:$0xff]
    %v112 = vld [vmem:[#allocation4 + $0x8] sm:$0xff]
    %v113 = vld [vmem:[#allocation4 + $0x10] sm:$0xff]
    %v114 = vld [vmem:[#allocation4 + $0x18] sm:$0xff]
    %v115 = vld [vmem:[#allocation4 + $0x20] sm:$0xff]
    %v116 = vld [vmem:[#allocation4 + $0x28] sm:$0xff]
    %v117 = vld [vmem:[#allocation4 + $0x30] sm:$0xff]
    %v118 = vld [vmem:[#allocation4 + $0x38] sm:$0xff]
    %v119 = vld [vmem:[#allocation4 + $0x40] sm:$0xff]
    %v120 = vld [vmem:[#allocation4 + $0x48] sm:$0xff]
    %v121 = vld [vmem:[#allocation4 + $0x50] sm:$0xff]
    %v122 = vld [vmem:[#allocation4 + $0x58] sm:$0xff]
    %v123 = vld [vmem:[#allocation4 + $0x60] sm:$0xff]
    %v124 = vld [vmem:[#allocation4 + $0x68] sm:$0xff]
    %v125 = vld [vmem:[#allocation4 + $0x70] sm:$0xff]
    %v126 = vld [vmem:[#allocation4 + $0x78] sm:$0xff]
    %v127 = vld [vmem:[#allocation4 + $0x80] sm:$0xff]
    %v128 = vld [vmem:[#allocation4 + $0x88] sm:$0xff]
    %v129 = vld [vmem:[#allocation4 + $0x90] sm:$0xff]
    %v130 = vld [vmem:[#allocation4 + $0x98] sm:$0xff]
    %v131 = vld [vmem:[#allocation4 + $0xa0] sm:$0xff]
    %v132 = vld [vmem:[#allocation4 + $0xa8] sm:$0xff]
    %v133 = vld [vmem:[#allocation4 + $0xb0] sm:$0xff]
    %v134 = vld [vmem:[#allocation4 + $0xb8] sm:$0xff]
    %v135 = vld [vmem:[#allocation4 + $0xc0] sm:$0xff]
    %v136 = vld [vmem:[#allocation4 + $0xc8] sm:$0xff]
    %v137 = vld [vmem:[#allocation4 + $0xd0] sm:$0xff]
    %v138 = vld [vmem:[#allocation4 + $0xd8] sm:$0xff]
    %v139 = vld [vmem:[#allocation4 + $0xe0] sm:$0xff]
    %v140 = vld [vmem:[#allocation4 + $0xe8] sm:$0xff]
    %v141 = vld [vmem:[#allocation4 + $0xf0] sm:$0xff]
    %v142 = vld [vmem:[#allocation4 + $0xf8] sm:$0xff]
    %v143 = vld [vmem:[#allocation4 + $0x100] sm:$0xff]
    %v144 = vld [vmem:[#allocation4 + $0x108] sm:$0xff]
    %v145 = vld [vmem:[#allocation4 + $0x110] sm:$0xff]
    %v146 = vld [vmem:[#allocation4 + $0x118] sm:$0xff]
    %v147 = vld [vmem:[#allocation4 + $0x120] sm:$0xff]
    %v148 = vld [vmem:[#allocation4 + $0x128] sm:$0xff]
    %v149 = vld [vmem:[#allocation4 + $0x130] sm:$0xff]
    %v150 = vld [vmem:[#allocation4 + $0x138] sm:$0xff]
    %v151 = vld [vmem:[#allocation4 + $0x140] sm:$0xff]
    %v152 = vld [vmem:[#allocation4 + $0x148] sm:$0xff]
    %v153 = vld [vmem:[#allocation4 + $0x150] sm:$0xff]
    %v154 = vld [vmem:[#allocation4 + $0x158] sm:$0xff]
    %v155 = vld [vmem:[#allocation4 + $0x160] sm:$0xff]
    %v156 = vld [vmem:[#allocation4 + $0x168] sm:$0xff]
    %v157 = vld [vmem:[#allocation4 + $0x170] sm:$0xff]
    %v158 = vld [vmem:[#allocation4 + $0x178] sm:$0xff]
    %v159 = vld [vmem:[%s4] sm:$0x7]
    %v161 = vperm.slane %v159, 0
    %v162 = vperm.slane %v159, 1
    %v163 = vperm.slane %v159, 2
    %167 = vmatpush.msra.mxu0 %v156
    %168 = vmatpush.msra.mxu0 %v153
    %169 = vmatpush.msra.mxu0 %v150
    %170 = vmatpush.msra.mxu0 %v147
    %171 = vmatpush.msra.mxu0 %v144
    %172 = vmatpush.msra.mxu0 %v141
    %173 = vmatpush.msra.mxu0 %v138
    %174 = vmatpush.msra.mxu0 %v135
    %175 = vmatpush.msra.mxu0 %v132
    %176 = vmatpush.msra.mxu0 %v129
    %177 = vmatpush.msra.mxu0 %v126
    %178 = vmatpush.msra.mxu0 %v123
    %179 = vmatpush.msra.mxu0 %v120
    %180 = vmatpush.msra.mxu0 %v117
    %181 = vmatpush.msra.mxu0 %v114
    %182 = vmatpush.msra.mxu0 %v111
    %183 = vmatmul.f32.gmra.mxu0 %v103
    %v184 = vpop.f32.mrf.mxu0
    %v185 = vadd.f32 %v161, %v184
    %186 = vmatmul.f32.gmra.mxu0 %v104
    %v187 = vpop.f32.mrf.mxu0
    %v188 = vadd.f32 %v161, %v187
    %189 = vmatmul.f32.gmra.mxu0 %v105
    %v190 = vpop.f32.mrf.mxu0
    %v191 = vadd.f32 %v161, %v190
    %192 = vmatmul.f32.gmra.mxu0 %v106
    %v193 = vpop.f32.mrf.mxu0
    %v194 = vadd.f32 %v161, %v193
    %195 = vmatmul.f32.gmra.mxu0 %v107
    %v196 = vpop.f32.mrf.mxu0
    %v197 = vadd.f32 %v161, %v196
    %198 = vmatmul.f32.gmra.mxu0 %v108
    %v199 = vpop.f32.mrf.mxu0
    %v200 = vadd.f32 %v161, %v199
    %201 = vmatmul.f32.gmra.mxu0 %v109
    %v202 = vpop.f32.mrf.mxu0
    %v203 = vadd.f32 %v161, %v202
    %204 = vmatmul.f32.gmra.mxu0 %v110
    %v205 = vpop.f32.mrf.mxu0
    %v206 = vadd.f32 %v161, %v205
    %207 = vdwg.mxu0
    %208 = vmatpush.msra.mxu0 %v157
    %209 = vmatpush.msra.mxu0 %v154
    %210 = vmatpush.msra.mxu0 %v151
    %211 = vmatpush.msra.mxu0 %v148
    %212 = vmatpush.msra.mxu0 %v145
    %213 = vmatpush.msra.mxu0 %v142
    %214 = vmatpush.msra.mxu0 %v139
    %215 = vmatpush.msra.mxu0 %v136
    %216 = vmatpush.msra.mxu0 %v133
    %217 = vmatpush.msra.mxu0 %v130
    %218 = vmatpush.msra.mxu0 %v127
    %219 = vmatpush.msra.mxu0 %v124
    %220 = vmatpush.msra.mxu0 %v121
    %221 = vmatpush.msra.mxu0 %v118
    %222 = vmatpush.msra.mxu0 %v115
    %223 = vmatpush.msra.mxu0 %v112
    %224 = vmatmul.f32.gmra.mxu0 %v103
    %v225 = vpop.f32.mrf.mxu0
    %v226 = vadd.f32 %v162, %v225
    %227 = vmatmul.f32.gmra.mxu0 %v104
    %v228 = vpop.f32.mrf.mxu0
    %v229 = vadd.f32 %v162, %v228
    %230 = vmatmul.f32.gmra.mxu0 %v105
    %v231 = vpop.f32.mrf.mxu0
    %v232 = vadd.f32 %v162, %v231
    %233 = vmatmul.f32.gmra.mxu0 %v106
    %v234 = vpop.f32.mrf.mxu0
    %v235 = vadd.f32 %v162, %v234
    %236 = vmatmul.f32.gmra.mxu0 %v107
    %v237 = vpop.f32.mrf.mxu0
    %v238 = vadd.f32 %v162, %v237
    %239 = vmatmul.f32.gmra.mxu0 %v108
    %v240 = vpop.f32.mrf.mxu0
    %v241 = vadd.f32 %v162, %v240
    %242 = vmatmul.f32.gmra.mxu0 %v109
    %v243 = vpop.f32.mrf.mxu0
    %v244 = vadd.f32 %v162, %v243
    %245 = vmatmul.f32.gmra.mxu0 %v110
    %v246 = vpop.f32.mrf.mxu0
    %v247 = vadd.f32 %v162, %v246
    %248 = vdwg.mxu0
    %249 = vmatpush.msra.mxu0 %v158
    %250 = vmatpush.msra.mxu0 %v155
    %251 = vmatpush.msra.mxu0 %v152
    %252 = vmatpush.msra.mxu0 %v149
    %253 = vmatpush.msra.mxu0 %v146
    %254 = vmatpush.msra.mxu0 %v143
    %255 = vmatpush.msra.mxu0 %v140
    %256 = vmatpush.msra.mxu0 %v137
    %257 = vmatpush.msra.mxu0 %v134
    %258 = vmatpush.msra.mxu0 %v131
    %259 = vmatpush.msra.mxu0 %v128
    %260 = vmatpush.msra.mxu0 %v125
    %261 = vmatpush.msra.mxu0 %v122
    %262 = vmatpush.msra.mxu0 %v119
    %263 = vmatpush.msra.mxu0 %v116
    %264 = vmatpush.msra.mxu0 %v113
    %265 = vmatmul.f32.gmra.mxu0 %v103
    %v266 = vpop.f32.mrf.mxu0
    %v267 = vadd.f32 %v163, %v266
    %268 = vmatmul.f32.gmra.mxu0 %v104
    %v269 = vpop.f32.mrf.mxu0
    %v270 = vadd.f32 %v163, %v269
    %271 = vmatmul.f32.gmra.mxu0 %v105
    %v272 = vpop.f32.mrf.mxu0
    %v273 = vadd.f32 %v163, %v272
    %274 = vmatmul.f32.gmra.mxu0 %v106
    %v275 = vpop.f32.mrf.mxu0
    %v276 = vadd.f32 %v163, %v275
    %277 = vmatmul.f32.gmra.mxu0 %v107
    %v278 = vpop.f32.mrf.mxu0
    %v279 = vadd.f32 %v163, %v278
    %280 = vmatmul.f32.gmra.mxu0 %v108
    %v281 = vpop.f32.mrf.mxu0
    %v282 = vadd.f32 %v163, %v281
    %283 = vmatmul.f32.gmra.mxu0 %v109
    %v284 = vpop.f32.mrf.mxu0
    %v285 = vadd.f32 %v163, %v284
    %286 = vmatmul.f32.gmra.mxu0 %v110
    %v287 = vpop.f32.mrf.mxu0
    %v288 = vadd.f32 %v163, %v287
    %289 = vdwg.mxu0
    %290 = vst [vmem:[#allocation3] sm:$0xff] %v185
    %291 = vst [vmem:[#allocation3 + $0x8] sm:$0xff] %v226
    %292 = vst [vmem:[#allocation3 + $0x10] sm:$0xff] %v267
    %293 = vst [vmem:[#allocation3 + $0x18] sm:$0xff] %v188
    %294 = vst [vmem:[#allocation3 + $0x20] sm:$0xff] %v229
    %295 = vst [vmem:[#allocation3 + $0x28] sm:$0xff] %v270
    %296 = vst [vmem:[#allocation3 + $0x30] sm:$0xff] %v191
    %297 = vst [vmem:[#allocation3 + $0x38] sm:$0xff] %v232
    %298 = vst [vmem:[#allocation3 + $0x40] sm:$0xff] %v273
    %299 = vst [vmem:[#allocation3 + $0x48] sm:$0xff] %v194
    %300 = vst [vmem:[#allocation3 + $0x50] sm:$0xff] %v235
    %301 = vst [vmem:[#allocation3 + $0x58] sm:$0xff] %v276
    %302 = vst [vmem:[#allocation3 + $0x60] sm:$0xff] %v197
    %303 = vst [vmem:[#allocation3 + $0x68] sm:$0xff] %v238
    %304 = vst [vmem:[#allocation3 + $0x70] sm:$0xff] %v279
    %305 = vst [vmem:[#allocation3 + $0x78] sm:$0xff] %v200
    %306 = vst [vmem:[#allocation3 + $0x80] sm:$0xff] %v241
    %307 = vst [vmem:[#allocation3 + $0x88] sm:$0xff] %v282
    %308 = vst [vmem:[#allocation3 + $0x90] sm:$0xff] %v203
    %309 = vst [vmem:[#allocation3 + $0x98] sm:$0xff] %v244
    %310 = vst [vmem:[#allocation3 + $0xa0] sm:$0xff] %v285
    %311 = vst [vmem:[#allocation3 + $0xa8] sm:$0xff] %v206
    %312 = vst [vmem:[#allocation3 + $0xb0] sm:$0xff] %v247
    %313 = vst [vmem:[#allocation3 + $0xb8] sm:$0xff] %v288
    %v314 = vld [vmem:[%s5] sm:$0x1]
    %v316 = vperm.slane %v314, 0
    %v318 = vld [vmem:[%s1] sm:$0xff]
    %v319 = vld [vmem:[#allocation3] sm:$0xff]
    %v320 = vld [vmem:[#allocation3 + $0x8] sm:$0xff]
    %v321 = vld [vmem:[#allocation3 + $0x10] sm:$0xff]
    %v322 = vld [vmem:[#allocation6] sm:$0xff]
    %v323 = vld [vmem:[#allocation6 + $0x8] sm:$0xff]
    %v324 = vld [vmem:[#allocation6 + $0x10] sm:$0xff]
    %v325 = vld [vmem:[#allocation6 + $0x18] sm:$0xff]
    %v326 = vld [vmem:[#allocation6 + $0x20] sm:$0xff]
    %v327 = vld [vmem:[#allocation6 + $0x28] sm:$0xff]
    %v328 = vld [vmem:[#allocation6 + $0x30] sm:$0xff]
    %v329 = vld [vmem:[#allocation6 + $0x38] sm:$0xff]
    %v330 = vld [vmem:[#allocation6 + $0x40] sm:$0xff]
    %v331 = vld [vmem:[#allocation6 + $0x48] sm:$0xff]
    %v332 = vld [vmem:[#allocation6 + $0x50] sm:$0xff]
    %v333 = vld [vmem:[#allocation6 + $0x58] sm:$0xff]
    %v334 = vld [vmem:[#allocation6 + $0x60] sm:$0xff]
    %v335 = vld [vmem:[#allocation6 + $0x68] sm:$0xff]
    %v336 = vld [vmem:[#allocation6 + $0x70] sm:$0xff]
    %v337 = vld [vmem:[#allocation6 + $0x78] sm:$0xff]
    %v338 = vld [vmem:[#allocation6 + $0x80] sm:$0xff]
    %v339 = vld [vmem:[#allocation6 + $0x88] sm:$0xff]
    %v340 = vld [vmem:[#allocation6 + $0x90] sm:$0xff]
    %v341 = vld [vmem:[#allocation6 + $0x98] sm:$0xff]
    %v342 = vld [vmem:[#allocation6 + $0xa0] sm:$0xff]
    %v343 = vld [vmem:[#allocation6 + $0xa8] sm:$0xff]
    %v344 = vld [vmem:[#allocation6 + $0xb0] sm:$0xff]
    %v345 = vld [vmem:[#allocation6 + $0xb8] sm:$0xff]
    %v346 = vld [vmem:[#allocation6 + $0xc0] sm:$0xff]
    %v347 = vld [vmem:[#allocation6 + $0xc8] sm:$0xff]
    %v348 = vld [vmem:[#allocation6 + $0xd0] sm:$0xff]
    %v349 = vld [vmem:[#allocation6 + $0xd8] sm:$0xff]
    %v350 = vld [vmem:[#allocation6 + $0xe0] sm:$0xff]
    %v351 = vld [vmem:[#allocation6 + $0xe8] sm:$0xff]
    %v352 = vld [vmem:[#allocation6 + $0xf0] sm:$0xff]
    %v353 = vld [vmem:[#allocation6 + $0xf8] sm:$0xff]
    %v354 = vld [vmem:[#allocation6 + $0x100] sm:$0xff]
    %v355 = vld [vmem:[#allocation6 + $0x108] sm:$0xff]
    %v356 = vld [vmem:[#allocation6 + $0x110] sm:$0xff]
    %v357 = vld [vmem:[#allocation6 + $0x118] sm:$0xff]
    %v358 = vld [vmem:[#allocation6 + $0x120] sm:$0xff]
    %v359 = vld [vmem:[#allocation6 + $0x128] sm:$0xff]
    %v360 = vld [vmem:[#allocation6 + $0x130] sm:$0xff]
    %v361 = vld [vmem:[#allocation6 + $0x138] sm:$0xff]
    %v362 = vld [vmem:[#allocation6 + $0x140] sm:$0xff]
    %v363 = vld [vmem:[#allocation6 + $0x148] sm:$0xff]
    %v364 = vld [vmem:[#allocation6 + $0x150] sm:$0xff]
    %v365 = vld [vmem:[#allocation6 + $0x158] sm:$0xff]
    %v366 = vld [vmem:[#allocation6 + $0x160] sm:$0xff]
    %v367 = vld [vmem:[#allocation6 + $0x168] sm:$0xff]
    %v368 = vld [vmem:[#allocation6 + $0x170] sm:$0xff]
    %v369 = vld [vmem:[#allocation6 + $0x178] sm:$0xff]
    %370 = vmatpush.msra.mxu0 %v367
    %371 = vmatpush.msra.mxu0 %v364
    %372 = vmatpush.msra.mxu0 %v361
    %373 = vmatpush.msra.mxu0 %v358
    %374 = vmatpush.msra.mxu0 %v355
    %375 = vmatpush.msra.mxu0 %v352
    %376 = vmatpush.msra.mxu0 %v349
    %377 = vmatpush.msra.mxu0 %v346
    %378 = vmatpush.msra.mxu0 %v343
    %379 = vmatpush.msra.mxu0 %v340
    %380 = vmatpush.msra.mxu0 %v337
    %381 = vmatpush.msra.mxu0 %v334
    %382 = vmatpush.msra.mxu0 %v331
    %383 = vmatpush.msra.mxu0 %v328
    %384 = vmatpush.msra.mxu0 %v325
    %385 = vmatpush.msra.mxu0 %v322
    %386 = vmatmul.f32.gmra.mxu0 %v318
    %v387 = vpop.f32.mrf.mxu0
    %v388 = vadd.f32 0.0, %v387
    %389 = vdwg.mxu0
    %390 = vmatpush.msra.mxu0 %v368
    %391 = vmatpush.msra.mxu0 %v365
    %392 = vmatpush.msra.mxu0 %v362
    %393 = vmatpush.msra.mxu0 %v359
    %394 = vmatpush.msra.mxu0 %v356
    %395 = vmatpush.msra.mxu0 %v353
    %396 = vmatpush.msra.mxu0 %v350
    %397 = vmatpush.msra.mxu0 %v347
    %398 = vmatpush.msra.mxu0 %v344
    %399 = vmatpush.msra.mxu0 %v341
    %400 = vmatpush.msra.mxu0 %v338
    %401 = vmatpush.msra.mxu0 %v335
    %402 = vmatpush.msra.mxu0 %v332
    %403 = vmatpush.msra.mxu0 %v329
    %404 = vmatpush.msra.mxu0 %v326
    %405 = vmatpush.msra.mxu0 %v323
    %406 = vmatmul.f32.gmra.mxu0 %v318
    %v407 = vpop.f32.mrf.mxu0
    %v408 = vadd.f32 0.0, %v407
    %409 = vdwg.mxu0
    %410 = vmatpush.msra.mxu0 %v369
    %411 = vmatpush.msra.mxu0 %v366
    %412 = vmatpush.msra.mxu0 %v363
    %413 = vmatpush.msra.mxu0 %v360
    %414 = vmatpush.msra.mxu0 %v357
    %415 = vmatpush.msra.mxu0 %v354
    %416 = vmatpush.msra.mxu0 %v351
    %417 = vmatpush.msra.mxu0 %v348
    %418 = vmatpush.msra.mxu0 %v345
    %419 = vmatpush.msra.mxu0 %v342
    %420 = vmatpush.msra.mxu0 %v339
    %421 = vmatpush.msra.mxu0 %v336
    %422 = vmatpush.msra.mxu0 %v333
    %423 = vmatpush.msra.mxu0 %v330
    %424 = vmatpush.msra.mxu0 %v327
    %425 = vmatpush.msra.mxu0 %v324
    %426 = vmatmul.f32.gmra.mxu0 %v318
    %v427 = vpop.f32.mrf.mxu0
    %v428 = vadd.f32 0.0, %v427
    %429 = vdwg.mxu0
    %v430 = vadd.f32 %v319, %v388
    %v431 = vadd.f32 %v320, %v408
    %v432 = vxor.u32 %v430, 2147483648
    %v433 = vxor.u32 %v431, 2147483648
    %v434 = vmul.f32 %v432, 1.442695
    %v435 = vpow.pop %v434
    %v436 = vmul.f32 %v433, 1.442695
    %v437 = vpow.pop %v436
    %v438 = vadd.f32 %v435, 1.0
    %v439 = vadd.f32 %v437, 1.0
    %v440 = vrcp.pop %v438
    %v441 = vmul.f32 %v438, %v440
    %v442 = vsub.f32 1.0, %v441
    %v443 = vmul.f32 %v440, %v442
    %v444 = vadd.f32 %v440, %v443
    %vm445 = vweird.f32 %v438
    %vm446 = vweird.f32 %v440
    %vm447 = vmor %vm445, %vm446
    %v448 = vsel %vm447, %v440, %v444
    %v449 = vand.u32 2147483647, %v438
    %vm450 = vcmp.eq.f32.partialorder %v449, 8.507059e+37
    %v451 = vand.u32 %v438, 2147483648
    %v452 = vor.u32 1.1754944e-38, %v451
    %v453 = vsel %vm450, %v452, %v448
    %v454 = vmul.f32 1.0, %v453
    %v455 = vrcp.pop %v439
    %v456 = vmul.f32 %v439, %v455
    %v457 = vsub.f32 1.0, %v456
    %v458 = vmul.f32 %v455, %v457
    %v459 = vadd.f32 %v455, %v458
    %vm460 = vweird.f32 %v439
    %vm461 = vweird.f32 %v455
    %vm462 = vmor %vm460, %vm461
    %v463 = vsel %vm462, %v455, %v459
    %v464 = vand.u32 2147483647, %v439
    %vm465 = vcmp.eq.f32.partialorder %v464, 8.507059e+37
    %v466 = vand.u32 %v439, 2147483648
    %v467 = vor.u32 1.1754944e-38, %v466
    %v468 = vsel %vm465, %v467, %v463
    %v469 = vmul.f32 1.0, %v468
    %v470 = vadd.f32 %v428, %v316
    %v471 = vmul.f32 %v454, %v470
    %v472 = vadd.f32 %v321, %v471
    %v473 = vtanh.pop %v472
    %v474 = vsub.f32 1.0, %v469
    %v475 = vmul.f32 %v474, %v473
    %v476 = vmul.f32 %v469, %v318
    %v477 = vadd.f32 %v475, %v476
    %478 = vst [vmem:[#allocation2] sm:$0xff] %v477
    %s479 = scalar_lea.vmem [#allocation3], 24
    %v480 = vld [vmem:[%s479] sm:$0xff]
    %v481 = vld [vmem:[%s479 + $0x8] sm:$0xff]
    %v482 = vld [vmem:[%s479 + $0x10] sm:$0xff]
    %v483 = vld [vmem:[#allocation6] sm:$0xff]
    %v484 = vld [vmem:[#allocation6 + $0x8] sm:$0xff]
    %v485 = vld [vmem:[#allocation6 + $0x10] sm:$0xff]
    %v486 = vld [vmem:[#allocation6 + $0x18] sm:$0xff]
    %v487 = vld [vmem:[#allocation6 + $0x20] sm:$0xff]
    %v488 = vld [vmem:[#allocation6 + $0x28] sm:$0xff]
    %v489 = vld [vmem:[#allocation6 + $0x30] sm:$0xff]
    %v490 = vld [vmem:[#allocation6 + $0x38] sm:$0xff]
    %v491 = vld [vmem:[#allocation6 + $0x40] sm:$0xff]
    %v492 = vld [vmem:[#allocation6 + $0x48] sm:$0xff]
    %v493 = vld [vmem:[#allocation6 + $0x50] sm:$0xff]
    %v494 = vld [vmem:[#allocation6 + $0x58] sm:$0xff]
    %v495 = vld [vmem:[#allocation6 + $0x60] sm:$0xff]
    %v496 = vld [vmem:[#allocation6 + $0x68] sm:$0xff]
    %v497 = vld [vmem:[#allocation6 + $0x70] sm:$0xff]
    %v498 = vld [vmem:[#allocation6 + $0x78] sm:$0xff]
    %v499 = vld [vmem:[#allocation6 + $0x80] sm:$0xff]
    %v500 = vld [vmem:[#allocation6 + $0x88] sm:$0xff]
    %v501 = vld [vmem:[#allocation6 + $0x90] sm:$0xff]
    %v502 = vld [vmem:[#allocation6 + $0x98] sm:$0xff]
    %v503 = vld [vmem:[#allocation6 + $0xa0] sm:$0xff]
    %v504 = vld [vmem:[#allocation6 + $0xa8] sm:$0xff]
    %v505 = vld [vmem:[#allocation6 + $0xb0] sm:$0xff]
    %v506 = vld [vmem:[#allocation6 + $0xb8] sm:$0xff]
    %v507 = vld [vmem:[#allocation6 + $0xc0] sm:$0xff]
    %v508 = vld [vmem:[#allocation6 + $0xc8] sm:$0xff]
    %v509 = vld [vmem:[#allocation6 + $0xd0] sm:$0xff]
    %v510 = vld [vmem:[#allocation6 + $0xd8] sm:$0xff]
    %v511 = vld [vmem:[#allocation6 + $0xe0] sm:$0xff]
    %v512 = vld [vmem:[#allocation6 + $0xe8] sm:$0xff]
    %v513 = vld [vmem:[#allocation6 + $0xf0] sm:$0xff]
    %v514 = vld [vmem:[#allocation6 + $0xf8] sm:$0xff]
    %v515 = vld [vmem:[#allocation6 + $0x100] sm:$0xff]
    %v516 = vld [vmem:[#allocation6 + $0x108] sm:$0xff]
    %v517 = vld [vmem:[#allocation6 + $0x110] sm:$0xff]
    %v518 = vld [vmem:[#allocation6 + $0x118] sm:$0xff]
    %v519 = vld [vmem:[#allocation6 + $0x120] sm:$0xff]
    %v520 = vld [vmem:[#allocation6 + $0x128] sm:$0xff]
    %v521 = vld [vmem:[#allocation6 + $0x130] sm:$0xff]
    %v522 = vld [vmem:[#allocation6 + $0x138] sm:$0xff]
    %v523 = vld [vmem:[#allocation6 + $0x140] sm:$0xff]
    %v524 = vld [vmem:[#allocation6 + $0x148] sm:$0xff]
    %v525 = vld [vmem:[#allocation6 + $0x150] sm:$0xff]
    %v526 = vld [vmem:[#allocation6 + $0x158] sm:$0xff]
    %v527 = vld [vmem:[#allocation6 + $0x160] sm:$0xff]
    %v528 = vld [vmem:[#allocation6 + $0x168] sm:$0xff]
    %v529 = vld [vmem:[#allocation6 + $0x170] sm:$0xff]
    %v530 = vld [vmem:[#allocation6 + $0x178] sm:$0xff]
    %531 = vmatpush.msra.mxu0 %v528
    %532 = vmatpush.msra.mxu0 %v525
    %533 = vmatpush.msra.mxu0 %v522
    %534 = vmatpush.msra.mxu0 %v519
    %535 = vmatpush.msra.mxu0 %v516
    %536 = vmatpush.msra.mxu0 %v513
    %537 = vmatpush.msra.mxu0 %v510
    %538 = vmatpush.msra.mxu0 %v507
    %539 = vmatpush.msra.mxu0 %v504
    %540 = vmatpush.msra.mxu0 %v501
    %541 = vmatpush.msra.mxu0 %v498
    %542 = vmatpush.msra.mxu0 %v495
    %543 = vmatpush.msra.mxu0 %v492
    %544 = vmatpush.msra.mxu0 %v489
    %545 = vmatpush.msra.mxu0 %v486
    %546 = vmatpush.msra.mxu0 %v483
    %547 = vmatmul.f32.gmra.mxu0 %v477
    %v548 = vpop.f32.mrf.mxu0
    %v549 = vadd.f32 0.0, %v548
    %550 = vdwg.mxu0
    %551 = vmatpush.msra.mxu0 %v529
    %552 = vmatpush.msra.mxu0 %v526
    %553 = vmatpush.msra.mxu0 %v523
    %554 = vmatpush.msra.mxu0 %v520
    %555 = vmatpush.msra.mxu0 %v517
    %556 = vmatpush.msra.mxu0 %v514
    %557 = vmatpush.msra.mxu0 %v511
    %558 = vmatpush.msra.mxu0 %v508
    %559 = vmatpush.msra.mxu0 %v505
    %560 = vmatpush.msra.mxu0 %v502
    %561 = vmatpush.msra.mxu0 %v499
    %562 = vmatpush.msra.mxu0 %v496
    %563 = vmatpush.msra.mxu0 %v493
    %564 = vmatpush.msra.mxu0 %v490
    %565 = vmatpush.msra.mxu0 %v487
    %566 = vmatpush.msra.mxu0 %v484
    %567 = vmatmul.f32.gmra.mxu0 %v477
    %v568 = vpop.f32.mrf.mxu0
    %v569 = vadd.f32 0.0, %v568
    %570 = vdwg.mxu0
    %571 = vmatpush.msra.mxu0 %v530
    %572 = vmatpush.msra.mxu0 %v527
    %573 = vmatpush.msra.mxu0 %v524
    %574 = vmatpush.msra.mxu0 %v521
    %575 = vmatpush.msra.mxu0 %v518
    %576 = vmatpush.msra.mxu0 %v515
    %577 = vmatpush.msra.mxu0 %v512
    %578 = vmatpush.msra.mxu0 %v509
    %579 = vmatpush.msra.mxu0 %v506
    %580 = vmatpush.msra.mxu0 %v503
    %581 = vmatpush.msra.mxu0 %v500
    %582 = vmatpush.msra.mxu0 %v497
    %583 = vmatpush.msra.mxu0 %v494
    %584 = vmatpush.msra.mxu0 %v491
    %585 = vmatpush.msra.mxu0 %v488
    %586 = vmatpush.msra.mxu0 %v485
    %587 = vmatmul.f32.gmra.mxu0 %v477
    %v588 = vpop.f32.mrf.mxu0
    %v589 = vadd.f32 0.0, %v588
    %590 = vdwg.mxu0
    %v591 = vadd.f32 %v480, %v549
    %v592 = vadd.f32 %v481, %v569
    %v593 = vxor.u32 %v591, 2147483648
    %v594 = vxor.u32 %v592, 2147483648
    %v595 = vmul.f32 %v593, 1.442695
    %v596 = vpow.pop %v595
    %v597 = vmul.f32 %v594, 1.442695
    %v598 = vpow.pop %v597
    %v599 = vadd.f32 %v596, 1.0
    %v600 = vadd.f32 %v598, 1.0
    %v601 = vrcp.pop %v599
    %v602 = vmul.f32 %v599, %v601
    %v603 = vsub.f32 1.0, %v602
    %v604 = vmul.f32 %v601, %v603
    %v605 = vadd.f32 %v601, %v604
    %vm606 = vweird.f32 %v599
    %vm607 = vweird.f32 %v601
    %vm608 = vmor %vm606, %vm607
    %v609 = vsel %vm608, %v601, %v605
    %v610 = vand.u32 2147483647, %v599
    %vm611 = vcmp.eq.f32.partialorder %v610, 8.507059e+37
    %v612 = vand.u32 %v599, 2147483648
    %v613 = vor.u32 1.1754944e-38, %v612
    %v614 = vsel %vm611, %v613, %v609
    %v615 = vmul.f32 1.0, %v614
    %v616 = vrcp.pop %v600
    %v617 = vmul.f32 %v600, %v616
    %v618 = vsub.f32 1.0, %v617
    %v619 = vmul.f32 %v616, %v618
    %v620 = vadd.f32 %v616, %v619
    %vm621 = vweird.f32 %v600
    %vm622 = vweird.f32 %v616
    %vm623 = vmor %vm621, %vm622
    %v624 = vsel %vm623, %v616, %v620
    %v625 = vand.u32 2147483647, %v600
    %vm626 = vcmp.eq.f32.partialorder %v625, 8.507059e+37
    %v627 = vand.u32 %v600, 2147483648
    %v628 = vor.u32 1.1754944e-38, %v627
    %v629 = vsel %vm626, %v628, %v624
    %v630 = vmul.f32 1.0, %v629
    %v631 = vadd.f32 %v589, %v316
    %v632 = vmul.f32 %v615, %v631
    %v633 = vadd.f32 %v482, %v632
    %v634 = vtanh.pop %v633
    %v635 = vsub.f32 1.0, %v630
    %v636 = vmul.f32 %v635, %v634
    %v637 = vmul.f32 %v630, %v477
    %v638 = vadd.f32 %v636, %v637
    %s639 = scalar_lea.vmem [#allocation2], 8
    %640 = vst [vmem:[%s639] sm:$0xff] %v638
    %s641 = scalar_lea.vmem [#allocation3], 48
    %v642 = vld [vmem:[%s641] sm:$0xff]
    %v643 = vld [vmem:[%s641 + $0x8] sm:$0xff]
    %v644 = vld [vmem:[%s641 + $0x10] sm:$0xff]
    %v645 = vld [vmem:[#allocation6] sm:$0xff]
    %v646 = vld [vmem:[#allocation6 + $0x8] sm:$0xff]
    %v647 = vld [vmem:[#allocation6 + $0x10] sm:$0xff]
    %v648 = vld [vmem:[#allocation6 + $0x18] sm:$0xff]
    %v649 = vld [vmem:[#allocation6 + $0x20] sm:$0xff]
    %v650 = vld [vmem:[#allocation6 + $0x28] sm:$0xff]
    %v651 = vld [vmem:[#allocation6 + $0x30] sm:$0xff]
    %v652 = vld [vmem:[#allocation6 + $0x38] sm:$0xff]
    %v653 = vld [vmem:[#allocation6 + $0x40] sm:$0xff]
    %v654 = vld [vmem:[#allocation6 + $0x48] sm:$0xff]
    %v655 = vld [vmem:[#allocation6 + $0x50] sm:$0xff]
    %v656 = vld [vmem:[#allocation6 + $0x58] sm:$0xff]
    %v657 = vld [vmem:[#allocation6 + $0x60] sm:$0xff]
    %v658 = vld [vmem:[#allocation6 + $0x68] sm:$0xff]
    %v659 = vld [vmem:[#allocation6 + $0x70] sm:$0xff]
    %v660 = vld [vmem:[#allocation6 + $0x78] sm:$0xff]
    %v661 = vld [vmem:[#allocation6 + $0x80] sm:$0xff]
    %v662 = vld [vmem:[#allocation6 + $0x88] sm:$0xff]
    %v663 = vld [vmem:[#allocation6 + $0x90] sm:$0xff]
    %v664 = vld [vmem:[#allocation6 + $0x98] sm:$0xff]
    %v665 = vld [vmem:[#allocation6 + $0xa0] sm:$0xff]
    %v666 = vld [vmem:[#allocation6 + $0xa8] sm:$0xff]
    %v667 = vld [vmem:[#allocation6 + $0xb0] sm:$0xff]
    %v668 = vld [vmem:[#allocation6 + $0xb8] sm:$0xff]
    %v669 = vld [vmem:[#allocation6 + $0xc0] sm:$0xff]
    %v670 = vld [vmem:[#allocation6 + $0xc8] sm:$0xff]
    %v671 = vld [vmem:[#allocation6 + $0xd0] sm:$0xff]
    %v672 = vld [vmem:[#allocation6 + $0xd8] sm:$0xff]
    %v673 = vld [vmem:[#allocation6 + $0xe0] sm:$0xff]
    %v674 = vld [vmem:[#allocation6 + $0xe8] sm:$0xff]
    %v675 = vld [vmem:[#allocation6 + $0xf0] sm:$0xff]
    %v676 = vld [vmem:[#allocation6 + $0xf8] sm:$0xff]
    %v677 = vld [vmem:[#allocation6 + $0x100] sm:$0xff]
    %v678 = vld [vmem:[#allocation6 + $0x108] sm:$0xff]
    %v679 = vld [vmem:[#allocation6 + $0x110] sm:$0xff]
    %v680 = vld [vmem:[#allocation6 + $0x118] sm:$0xff]
    %v681 = vld [vmem:[#allocation6 + $0x120] sm:$0xff]
    %v682 = vld [vmem:[#allocation6 + $0x128] sm:$0xff]
    %v683 = vld [vmem:[#allocation6 + $0x130] sm:$0xff]
    %v684 = vld [vmem:[#allocation6 + $0x138] sm:$0xff]
    %v685 = vld [vmem:[#allocation6 + $0x140] sm:$0xff]
    %v686 = vld [vmem:[#allocation6 + $0x148] sm:$0xff]
    %v687 = vld [vmem:[#allocation6 + $0x150] sm:$0xff]
    %v688 = vld [vmem:[#allocation6 + $0x158] sm:$0xff]
    %v689 = vld [vmem:[#allocation6 + $0x160] sm:$0xff]
    %v690 = vld [vmem:[#allocation6 + $0x168] sm:$0xff]
    %v691 = vld [vmem:[#allocation6 + $0x170] sm:$0xff]
    %v692 = vld [vmem:[#allocation6 + $0x178] sm:$0xff]
    %693 = vmatpush.msra.mxu0 %v690
    %694 = vmatpush.msra.mxu0 %v687
    %695 = vmatpush.msra.mxu0 %v684
    %696 = vmatpush.msra.mxu0 %v681
    %697 = vmatpush.msra.mxu0 %v678
    %698 = vmatpush.msra.mxu0 %v675
    %699 = vmatpush.msra.mxu0 %v672
    %700 = vmatpush.msra.mxu0 %v669
    %701 = vmatpush.msra.mxu0 %v666
    %702 = vmatpush.msra.mxu0 %v663
    %703 = vmatpush.msra.mxu0 %v660
    %704 = vmatpush.msra.mxu0 %v657
    %705 = vmatpush.msra.mxu0 %v654
    %706 = vmatpush.msra.mxu0 %v651
    %707 = vmatpush.msra.mxu0 %v648
    %708 = vmatpush.msra.mxu0 %v645
    %709 = vmatmul.f32.gmra.mxu0 %v638
    %v710 = vpop.f32.mrf.mxu0
    %v711 = vadd.f32 0.0, %v710
    %712 = vdwg.mxu0
    %713 = vmatpush.msra.mxu0 %v691
    %714 = vmatpush.msra.mxu0 %v688
    %715 = vmatpush.msra.mxu0 %v685
    %716 = vmatpush.msra.mxu0 %v682
    %717 = vmatpush.msra.mxu0 %v679
    %718 = vmatpush.msra.mxu0 %v676
    %719 = vmatpush.msra.mxu0 %v673
    %720 = vmatpush.msra.mxu0 %v670
    %721 = vmatpush.msra.mxu0 %v667
    %722 = vmatpush.msra.mxu0 %v664
    %723 = vmatpush.msra.mxu0 %v661
    %724 = vmatpush.msra.mxu0 %v658
    %725 = vmatpush.msra.mxu0 %v655
    %726 = vmatpush.msra.mxu0 %v652
    %727 = vmatpush.msra.mxu0 %v649
    %728 = vmatpush.msra.mxu0 %v646
    %729 = vmatmul.f32.gmra.mxu0 %v638
    %v730 = vpop.f32.mrf.mxu0
    %v731 = vadd.f32 0.0, %v730
    %732 = vdwg.mxu0
    %733 = vmatpush.msra.mxu0 %v692
    %734 = vmatpush.msra.mxu0 %v689
    %735 = vmatpush.msra.mxu0 %v686
    %736 = vmatpush.msra.mxu0 %v683
    %737 = vmatpush.msra.mxu0 %v680
    %738 = vmatpush.msra.mxu0 %v677
    %739 = vmatpush.msra.mxu0 %v674
    %740 = vmatpush.msra.mxu0 %v671
    %741 = vmatpush.msra.mxu0 %v668
    %742 = vmatpush.msra.mxu0 %v665
    %743 = vmatpush.msra.mxu0 %v662
    %744 = vmatpush.msra.mxu0 %v659
    %745 = vmatpush.msra.mxu0 %v656
    %746 = vmatpush.msra.mxu0 %v653
    %747 = vmatpush.msra.mxu0 %v650
    %748 = vmatpush.msra.mxu0 %v647
    %749 = vmatmul.f32.gmra.mxu0 %v638
    %v750 = vpop.f32.mrf.mxu0
    %v751 = vadd.f32 0.0, %v750
    %752 = vdwg.mxu0
    %v753 = vadd.f32 %v642, %v711
    %v754 = vadd.f32 %v643, %v731
    %v755 = vxor.u32 %v753, 2147483648
    %v756 = vxor.u32 %v754, 2147483648
    %v757 = vmul.f32 %v755, 1.442695
    %v758 = vpow.pop %v757
    %v759 = vmul.f32 %v756, 1.442695
    %v760 = vpow.pop %v759
    %v761 = vadd.f32 %v758, 1.0
    %v762 = vadd.f32 %v760, 1.0
    %v763 = vrcp.pop %v761
    %v764 = vmul.f32 %v761, %v763
    %v765 = vsub.f32 1.0, %v764
    %v766 = vmul.f32 %v763, %v765
    %v767 = vadd.f32 %v763, %v766
    %vm768 = vweird.f32 %v761
    %vm769 = vweird.f32 %v763
    %vm770 = vmor %vm768, %vm769
    %v771 = vsel %vm770, %v763, %v767
    %v772 = vand.u32 2147483647, %v761
    %vm773 = vcmp.eq.f32.partialorder %v772, 8.507059e+37
    %v774 = vand.u32 %v761, 2147483648
    %v775 = vor.u32 1.1754944e-38, %v774
    %v776 = vsel %vm773, %v775, %v771
    %v777 = vmul.f32 1.0, %v776
    %v778 = vrcp.pop %v762
    %v779 = vmul.f32 %v762, %v778
    %v780 = vsub.f32 1.0, %v779
    %v781 = vmul.f32 %v778, %v780
    %v782 = vadd.f32 %v778, %v781
    %vm783 = vweird.f32 %v762
    %vm784 = vweird.f32 %v778
    %vm785 = vmor %vm783, %vm784
    %v786 = vsel %vm785, %v778, %v782
    %v787 = vand.u32 2147483647, %v762
    %vm788 = vcmp.eq.f32.partialorder %v787, 8.507059e+37
    %v789 = vand.u32 %v762, 2147483648
    %v790 = vor.u32 1.1754944e-38, %v789
    %v791 = vsel %vm788, %v790, %v786
    %v792 = vmul.f32 1.0, %v791
    %v793 = vadd.f32 %v751, %v316
    %v794 = vmul.f32 %v777, %v793
    %v795 = vadd.f32 %v644, %v794
    %v796 = vtanh.pop %v795
    %v797 = vsub.f32 1.0, %v792
    %v798 = vmul.f32 %v797, %v796
    %v799 = vmul.f32 %v792, %v638
    %v800 = vadd.f32 %v798, %v799
    %s801 = scalar_lea.vmem [#allocation2], 16
    %802 = vst [vmem:[%s801] sm:$0xff] %v800
    %s803 = scalar_lea.vmem [#allocation3], 72
    %v804 = vld [vmem:[%s803] sm:$0xff]
    %v805 = vld [vmem:[%s803 + $0x8] sm:$0xff]
    %v806 = vld [vmem:[%s803 + $0x10] sm:$0xff]
    %v807 = vld [vmem:[#allocation6] sm:$0xff]
    %v808 = vld [vmem:[#allocation6 + $0x8] sm:$0xff]
    %v809 = vld [vmem:[#allocation6 + $0x10] sm:$0xff]
    %v810 = vld [vmem:[#allocation6 + $0x18] sm:$0xff]
    %v811 = vld [vmem:[#allocation6 + $0x20] sm:$0xff]
    %v812 = vld [vmem:[#allocation6 + $0x28] sm:$0xff]
    %v813 = vld [vmem:[#allocation6 + $0x30] sm:$0xff]
    %v814 = vld [vmem:[#allocation6 + $0x38] sm:$0xff]
    %v815 = vld [vmem:[#allocation6 + $0x40] sm:$0xff]
    %v816 = vld [vmem:[#allocation6 + $0x48] sm:$0xff]
    %v817 = vld [vmem:[#allocation6 + $0x50] sm:$0xff]
    %v818 = vld [vmem:[#allocation6 + $0x58] sm:$0xff]
    %v819 = vld [vmem:[#allocation6 + $0x60] sm:$0xff]
    %v820 = vld [vmem:[#allocation6 + $0x68] sm:$0xff]
    %v821 = vld [vmem:[#allocation6 + $0x70] sm:$0xff]
    %v822 = vld [vmem:[#allocation6 + $0x78] sm:$0xff]
    %v823 = vld [vmem:[#allocation6 + $0x80] sm:$0xff]
    %v824 = vld [vmem:[#allocation6 + $0x88] sm:$0xff]
    %v825 = vld [vmem:[#allocation6 + $0x90] sm:$0xff]
    %v826 = vld [vmem:[#allocation6 + $0x98] sm:$0xff]
    %v827 = vld [vmem:[#allocation6 + $0xa0] sm:$0xff]
    %v828 = vld [vmem:[#allocation6 + $0xa8] sm:$0xff]
    %v829 = vld [vmem:[#allocation6 + $0xb0] sm:$0xff]
    %v830 = vld [vmem:[#allocation6 + $0xb8] sm:$0xff]
    %v831 = vld [vmem:[#allocation6 + $0xc0] sm:$0xff]
    %v832 = vld [vmem:[#allocation6 + $0xc8] sm:$0xff]
    %v833 = vld [vmem:[#allocation6 + $0xd0] sm:$0xff]
    %v834 = vld [vmem:[#allocation6 + $0xd8] sm:$0xff]
    %v835 = vld [vmem:[#allocation6 + $0xe0] sm:$0xff]
    %v836 = vld [vmem:[#allocation6 + $0xe8] sm:$0xff]
    %v837 = vld [vmem:[#allocation6 + $0xf0] sm:$0xff]
    %v838 = vld [vmem:[#allocation6 + $0xf8] sm:$0xff]
    %v839 = vld [vmem:[#allocation6 + $0x100] sm:$0xff]
    %v840 = vld [vmem:[#allocation6 + $0x108] sm:$0xff]
    %v841 = vld [vmem:[#allocation6 + $0x110] sm:$0xff]
    %v842 = vld [vmem:[#allocation6 + $0x118] sm:$0xff]
    %v843 = vld [vmem:[#allocation6 + $0x120] sm:$0xff]
    %v844 = vld [vmem:[#allocation6 + $0x128] sm:$0xff]
    %v845 = vld [vmem:[#allocation6 + $0x130] sm:$0xff]
    %v846 = vld [vmem:[#allocation6 + $0x138] sm:$0xff]
    %v847 = vld [vmem:[#allocation6 + $0x140] sm:$0xff]
    %v848 = vld [vmem:[#allocation6 + $0x148] sm:$0xff]
    %v849 = vld [vmem:[#allocation6 + $0x150] sm:$0xff]
    %v850 = vld [vmem:[#allocation6 + $0x158] sm:$0xff]
    %v851 = vld [vmem:[#allocation6 + $0x160] sm:$0xff]
    %v852 = vld [vmem:[#allocation6 + $0x168] sm:$0xff]
    %v853 = vld [vmem:[#allocation6 + $0x170] sm:$0xff]
    %v854 = vld [vmem:[#allocation6 + $0x178] sm:$0xff]
    %855 = vmatpush.msra.mxu0 %v852
    %856 = vmatpush.msra.mxu0 %v849
    %857 = vmatpush.msra.mxu0 %v846
    %858 = vmatpush.msra.mxu0 %v843
    %859 = vmatpush.msra.mxu0 %v840
    %860 = vmatpush.msra.mxu0 %v837
    %861 = vmatpush.msra.mxu0 %v834
    %862 = vmatpush.msra.mxu0 %v831
    %863 = vmatpush.msra.mxu0 %v828
    %864 = vmatpush.msra.mxu0 %v825
    %865 = vmatpush.msra.mxu0 %v822
    %866 = vmatpush.msra.mxu0 %v819
    %867 = vmatpush.msra.mxu0 %v816
    %868 = vmatpush.msra.mxu0 %v813
    %869 = vmatpush.msra.mxu0 %v810
    %870 = vmatpush.msra.mxu0 %v807
    %871 = vmatmul.f32.gmra.mxu0 %v800
    %v872 = vpop.f32.mrf.mxu0
    %v873 = vadd.f32 0.0, %v872
    %874 = vdwg.mxu0
    %875 = vmatpush.msra.mxu0 %v853
    %876 = vmatpush.msra.mxu0 %v850
    %877 = vmatpush.msra.mxu0 %v847
    %878 = vmatpush.msra.mxu0 %v844
    %879 = vmatpush.msra.mxu0 %v841
    %880 = vmatpush.msra.mxu0 %v838
    %881 = vmatpush.msra.mxu0 %v835
    %882 = vmatpush.msra.mxu0 %v832
    %883 = vmatpush.msra.mxu0 %v829
    %884 = vmatpush.msra.mxu0 %v826
    %885 = vmatpush.msra.mxu0 %v823
    %886 = vmatpush.msra.mxu0 %v820
    %887 = vmatpush.msra.mxu0 %v817
    %888 = vmatpush.msra.mxu0 %v814
    %889 = vmatpush.msra.mxu0 %v811
    %890 = vmatpush.msra.mxu0 %v808
    %891 = vmatmul.f32.gmra.mxu0 %v800
    %v892 = vpop.f32.mrf.mxu0
    %v893 = vadd.f32 0.0, %v892
    %894 = vdwg.mxu0
    %895 = vmatpush.msra.mxu0 %v854
    %896 = vmatpush.msra.mxu0 %v851
    %897 = vmatpush.msra.mxu0 %v848
    %898 = vmatpush.msra.mxu0 %v845
    %899 = vmatpush.msra.mxu0 %v842
    %900 = vmatpush.msra.mxu0 %v839
    %901 = vmatpush.msra.mxu0 %v836
    %902 = vmatpush.msra.mxu0 %v833
    %903 = vmatpush.msra.mxu0 %v830
    %904 = vmatpush.msra.mxu0 %v827
    %905 = vmatpush.msra.mxu0 %v824
    %906 = vmatpush.msra.mxu0 %v821
    %907 = vmatpush.msra.mxu0 %v818
    %908 = vmatpush.msra.mxu0 %v815
    %909 = vmatpush.msra.mxu0 %v812
    %910 = vmatpush.msra.mxu0 %v809
    %911 = vmatmul.f32.gmra.mxu0 %v800
    %v912 = vpop.f32.mrf.mxu0
    %v913 = vadd.f32 0.0, %v912
    %914 = vdwg.mxu0
    %v915 = vadd.f32 %v804, %v873
    %v916 = vadd.f32 %v805, %v893
    %v917 = vxor.u32 %v915, 2147483648
    %v918 = vxor.u32 %v916, 2147483648
    %v919 = vmul.f32 %v917, 1.442695
    %v920 = vpow.pop %v919
    %v921 = vmul.f32 %v918, 1.442695
    %v922 = vpow.pop %v921
    %v923 = vadd.f32 %v920, 1.0
    %v924 = vadd.f32 %v922, 1.0
    %v925 = vrcp.pop %v923
    %v926 = vmul.f32 %v923, %v925
    %v927 = vsub.f32 1.0, %v926
    %v928 = vmul.f32 %v925, %v927
    %v929 = vadd.f32 %v925, %v928
    %vm930 = vweird.f32 %v923
    %vm931 = vweird.f32 %v925
    %vm932 = vmor %vm930, %vm931
    %v933 = vsel %vm932, %v925, %v929
    %v934 = vand.u32 2147483647, %v923
    %vm935 = vcmp.eq.f32.partialorder %v934, 8.507059e+37
    %v936 = vand.u32 %v923, 2147483648
    %v937 = vor.u32 1.1754944e-38, %v936
    %v938 = vsel %vm935, %v937, %v933
    %v939 = vmul.f32 1.0, %v938
    %v940 = vrcp.pop %v924
    %v941 = vmul.f32 %v924, %v940
    %v942 = vsub.f32 1.0, %v941
    %v943 = vmul.f32 %v940, %v942
    %v944 = vadd.f32 %v940, %v943
    %vm945 = vweird.f32 %v924
    %vm946 = vweird.f32 %v940
    %vm947 = vmor %vm945, %vm946
    %v948 = vsel %vm947, %v940, %v944
    %v949 = vand.u32 2147483647, %v924
    %vm950 = vcmp.eq.f32.partialorder %v949, 8.507059e+37
    %v951 = vand.u32 %v924, 2147483648
    %v952 = vor.u32 1.1754944e-38, %v951
    %v953 = vsel %vm950, %v952, %v948
    %v954 = vmul.f32 1.0, %v953
    %v955 = vadd.f32 %v913, %v316
    %v956 = vmul.f32 %v939, %v955
    %v957 = vadd.f32 %v806, %v956
    %v958 = vtanh.pop %v957
    %v959 = vsub.f32 1.0, %v954
    %v960 = vmul.f32 %v959, %v958
    %v961 = vmul.f32 %v954, %v800
    %v962 = vadd.f32 %v960, %v961
    %s963 = scalar_lea.vmem [#allocation2], 24
    %964 = vst [vmem:[%s963] sm:$0xff] %v962
    %s965 = scalar_lea.vmem [#allocation3], 96
    %v966 = vld [vmem:[%s965] sm:$0xff]
    %v967 = vld [vmem:[%s965 + $0x8] sm:$0xff]
    %v968 = vld [vmem:[%s965 + $0x10] sm:$0xff]
    %v969 = vld [vmem:[#allocation6] sm:$0xff]
    %v970 = vld [vmem:[#allocation6 + $0x8] sm:$0xff]
    %v971 = vld [vmem:[#allocation6 + $0x10] sm:$0xff]
    %v972 = vld [vmem:[#allocation6 + $0x18] sm:$0xff]
    %v973 = vld [vmem:[#allocation6 + $0x20] sm:$0xff]
    %v974 = vld [vmem:[#allocation6 + $0x28] sm:$0xff]
    %v975 = vld [vmem:[#allocation6 + $0x30] sm:$0xff]
    %v976 = vld [vmem:[#allocation6 + $0x38] sm:$0xff]
    %v977 = vld [vmem:[#allocation6 + $0x40] sm:$0xff]
    %v978 = vld [vmem:[#allocation6 + $0x48] sm:$0xff]
    %v979 = vld [vmem:[#allocation6 + $0x50] sm:$0xff]
    %v980 = vld [vmem:[#allocation6 + $0x58] sm:$0xff]
    %v981 = vld [vmem:[#allocation6 + $0x60] sm:$0xff]
    %v982 = vld [vmem:[#allocation6 + $0x68] sm:$0xff]
    %v983 = vld [vmem:[#allocation6 + $0x70] sm:$0xff]
    %v984 = vld [vmem:[#allocation6 + $0x78] sm:$0xff]
    %v985 = vld [vmem:[#allocation6 + $0x80] sm:$0xff]
    %v986 = vld [vmem:[#allocation6 + $0x88] sm:$0xff]
    %v987 = vld [vmem:[#allocation6 + $0x90] sm:$0xff]
    %v988 = vld [vmem:[#allocation6 + $0x98] sm:$0xff]
    %v989 = vld [vmem:[#allocation6 + $0xa0] sm:$0xff]
    %v990 = vld [vmem:[#allocation6 + $0xa8] sm:$0xff]
    %v991 = vld [vmem:[#allocation6 + $0xb0] sm:$0xff]
    %v992 = vld [vmem:[#allocation6 + $0xb8] sm:$0xff]
    %v993 = vld [vmem:[#allocation6 + $0xc0] sm:$0xff]
    %v994 = vld [vmem:[#allocation6 + $0xc8] sm:$0xff]
    %v995 = vld [vmem:[#allocation6 + $0xd0] sm:$0xff]
    %v996 = vld [vmem:[#allocation6 + $0xd8] sm:$0xff]
    %v997 = vld [vmem:[#allocation6 + $0xe0] sm:$0xff]
    %v998 = vld [vmem:[#allocation6 + $0xe8] sm:$0xff]
    %v999 = vld [vmem:[#allocation6 + $0xf0] sm:$0xff]
    %v1000 = vld [vmem:[#allocation6 + $0xf8] sm:$0xff]
    %v1001 = vld [vmem:[#allocation6 + $0x100] sm:$0xff]
    %v1002 = vld [vmem:[#allocation6 + $0x108] sm:$0xff]
    %v1003 = vld [vmem:[#allocation6 + $0x110] sm:$0xff]
    %v1004 = vld [vmem:[#allocation6 + $0x118] sm:$0xff]
    %v1005 = vld [vmem:[#allocation6 + $0x120] sm:$0xff]
    %v1006 = vld [vmem:[#allocation6 + $0x128] sm:$0xff]
    %v1007 = vld [vmem:[#allocation6 + $0x130] sm:$0xff]
    %v1008 = vld [vmem:[#allocation6 + $0x138] sm:$0xff]
    %v1009 = vld [vmem:[#allocation6 + $0x140] sm:$0xff]
    %v1010 = vld [vmem:[#allocation6 + $0x148] sm:$0xff]
    %v1011 = vld [vmem:[#allocation6 + $0x150] sm:$0xff]
    %v1012 = vld [vmem:[#allocation6 + $0x158] sm:$0xff]
    %v1013 = vld [vmem:[#allocation6 + $0x160] sm:$0xff]
    %v1014 = vld [vmem:[#allocation6 + $0x168] sm:$0xff]
    %v1015 = vld [vmem:[#allocation6 + $0x170] sm:$0xff]
    %v1016 = vld [vmem:[#allocation6 + $0x178] sm:$0xff]
    %1017 = vmatpush.msra.mxu0 %v1014
    %1018 = vmatpush.msra.mxu0 %v1011
    %1019 = vmatpush.msra.mxu0 %v1008
    %1020 = vmatpush.msra.mxu0 %v1005
    %1021 = vmatpush.msra.mxu0 %v1002
    %1022 = vmatpush.msra.mxu0 %v999
    %1023 = vmatpush.msra.mxu0 %v996
    %1024 = vmatpush.msra.mxu0 %v993
    %1025 = vmatpush.msra.mxu0 %v990
    %1026 = vmatpush.msra.mxu0 %v987
    %1027 = vmatpush.msra.mxu0 %v984
    %1028 = vmatpush.msra.mxu0 %v981
    %1029 = vmatpush.msra.mxu0 %v978
    %1030 = vmatpush.msra.mxu0 %v975
    %1031 = vmatpush.msra.mxu0 %v972
    %1032 = vmatpush.msra.mxu0 %v969
    %1033 = vmatmul.f32.gmra.mxu0 %v962
    %v1034 = vpop.f32.mrf.mxu0
    %v1035 = vadd.f32 0.0, %v1034
    %1036 = vdwg.mxu0
    %1037 = vmatpush.msra.mxu0 %v1015
    %1038 = vmatpush.msra.mxu0 %v1012
    %1039 = vmatpush.msra.mxu0 %v1009
    %1040 = vmatpush.msra.mxu0 %v1006
    %1041 = vmatpush.msra.mxu0 %v1003
    %1042 = vmatpush.msra.mxu0 %v1000
    %1043 = vmatpush.msra.mxu0 %v997
    %1044 = vmatpush.msra.mxu0 %v994
    %1045 = vmatpush.msra.mxu0 %v991
    %1046 = vmatpush.msra.mxu0 %v988
    %1047 = vmatpush.msra.mxu0 %v985
    %1048 = vmatpush.msra.mxu0 %v982
    %1049 = vmatpush.msra.mxu0 %v979
    %1050 = vmatpush.msra.mxu0 %v976
    %1051 = vmatpush.msra.mxu0 %v973
    %1052 = vmatpush.msra.mxu0 %v970
    %1053 = vmatmul.f32.gmra.mxu0 %v962
    %v1054 = vpop.f32.mrf.mxu0
    %v1055 = vadd.f32 0.0, %v1054
    %1056 = vdwg.mxu0
    %1057 = vmatpush.msra.mxu0 %v1016
    %1058 = vmatpush.msra.mxu0 %v1013
    %1059 = vmatpush.msra.mxu0 %v1010
    %1060 = vmatpush.msra.mxu0 %v1007
    %1061 = vmatpush.msra.mxu0 %v1004
    %1062 = vmatpush.msra.mxu0 %v1001
    %1063 = vmatpush.msra.mxu0 %v998
    %1064 = vmatpush.msra.mxu0 %v995
    %1065 = vmatpush.msra.mxu0 %v992
    %1066 = vmatpush.msra.mxu0 %v989
    %1067 = vmatpush.msra.mxu0 %v986
    %1068 = vmatpush.msra.mxu0 %v983
    %1069 = vmatpush.msra.mxu0 %v980
    %1070 = vmatpush.msra.mxu0 %v977
    %1071 = vmatpush.msra.mxu0 %v974
    %1072 = vmatpush.msra.mxu0 %v971
    %1073 = vmatmul.f32.gmra.mxu0 %v962
    %v1074 = vpop.f32.mrf.mxu0
    %v1075 = vadd.f32 0.0, %v1074
    %1076 = vdwg.mxu0
    %v1077 = vadd.f32 %v966, %v1035
    %v1078 = vadd.f32 %v967, %v1055
    %v1079 = vxor.u32 %v1077, 2147483648
    %v1080 = vxor.u32 %v1078, 2147483648
    %v1081 = vmul.f32 %v1079, 1.442695
    %v1082 = vpow.pop %v1081
    %v1083 = vmul.f32 %v1080, 1.442695
    %v1084 = vpow.pop %v1083
    %v1085 = vadd.f32 %v1082, 1.0
    %v1086 = vadd.f32 %v1084, 1.0
    %v1087 = vrcp.pop %v1085
    %v1088 = vmul.f32 %v1085, %v1087
    %v1089 = vsub.f32 1.0, %v1088
    %v1090 = vmul.f32 %v1087, %v1089
    %v1091 = vadd.f32 %v1087, %v1090
    %vm1092 = vweird.f32 %v1085
    %vm1093 = vweird.f32 %v1087
    %vm1094 = vmor %vm1092, %vm1093
    %v1095 = vsel %vm1094, %v1087, %v1091
    %v1096 = vand.u32 2147483647, %v1085
    %vm1097 = vcmp.eq.f32.partialorder %v1096, 8.507059e+37
    %v1098 = vand.u32 %v1085, 2147483648
    %v1099 = vor.u32 1.1754944e-38, %v1098
    %v1100 = vsel %vm1097, %v1099, %v1095
    %v1101 = vmul.f32 1.0, %v1100
    %v1102 = vrcp.pop %v1086
    %v1103 = vmul.f32 %v1086, %v1102
    %v1104 = vsub.f32 1.0, %v1103
    %v1105 = vmul.f32 %v1102, %v1104
    %v1106 = vadd.f32 %v1102, %v1105
    %vm1107 = vweird.f32 %v1086
    %vm1108 = vweird.f32 %v1102
    %vm1109 = vmor %vm1107, %vm1108
    %v1110 = vsel %vm1109, %v1102, %v1106
    %v1111 = vand.u32 2147483647, %v1086
    %vm1112 = vcmp.eq.f32.partialorder %v1111, 8.507059e+37
    %v1113 = vand.u32 %v1086, 2147483648
    %v1114 = vor.u32 1.1754944e-38, %v1113
    %v1115 = vsel %vm1112, %v1114, %v1110
    %v1116 = vmul.f32 1.0, %v1115
    %v1117 = vadd.f32 %v1075, %v316
    %v1118 = vmul.f32 %v1101, %v1117
    %v1119 = vadd.f32 %v968, %v1118
    %v1120 = vtanh.pop %v1119
    %v1121 = vsub.f32 1.0, %v1116
    %v1122 = vmul.f32 %v1121, %v1120
    %v1123 = vmul.f32 %v1116, %v962
    %v1124 = vadd.f32 %v1122, %v1123
    %s1125 = scalar_lea.vmem [#allocation2], 32
    %1126 = vst [vmem:[%s1125] sm:$0xff] %v1124
    %s1127 = scalar_lea.vmem [#allocation3], 120
    %v1128 = vld [vmem:[%s1127] sm:$0xff]
    %v1129 = vld [vmem:[%s1127 + $0x8] sm:$0xff]
    %v1130 = vld [vmem:[%s1127 + $0x10] sm:$0xff]
    %v1131 = vld [vmem:[#allocation6] sm:$0xff]
    %v1132 = vld [vmem:[#allocation6 + $0x8] sm:$0xff]
    %v1133 = vld [vmem:[#allocation6 + $0x10] sm:$0xff]
    %v1134 = vld [vmem:[#allocation6 + $0x18] sm:$0xff]
    %v1135 = vld [vmem:[#allocation6 + $0x20] sm:$0xff]
    %v1136 = vld [vmem:[#allocation6 + $0x28] sm:$0xff]
    %v1137 = vld [vmem:[#allocation6 + $0x30] sm:$0xff]
    %v1138 = vld [vmem:[#allocation6 + $0x38] sm:$0xff]
    %v1139 = vld [vmem:[#allocation6 + $0x40] sm:$0xff]
    %v1140 = vld [vmem:[#allocation6 + $0x48] sm:$0xff]
    %v1141 = vld [vmem:[#allocation6 + $0x50] sm:$0xff]
    %v1142 = vld [vmem:[#allocation6 + $0x58] sm:$0xff]
    %v1143 = vld [vmem:[#allocation6 + $0x60] sm:$0xff]
    %v1144 = vld [vmem:[#allocation6 + $0x68] sm:$0xff]
    %v1145 = vld [vmem:[#allocation6 + $0x70] sm:$0xff]
    %v1146 = vld [vmem:[#allocation6 + $0x78] sm:$0xff]
    %v1147 = vld [vmem:[#allocation6 + $0x80] sm:$0xff]
    %v1148 = vld [vmem:[#allocation6 + $0x88] sm:$0xff]
    %v1149 = vld [vmem:[#allocation6 + $0x90] sm:$0xff]
    %v1150 = vld [vmem:[#allocation6 + $0x98] sm:$0xff]
    %v1151 = vld [vmem:[#allocation6 + $0xa0] sm:$0xff]
    %v1152 = vld [vmem:[#allocation6 + $0xa8] sm:$0xff]
    %v1153 = vld [vmem:[#allocation6 + $0xb0] sm:$0xff]
    %v1154 = vld [vmem:[#allocation6 + $0xb8] sm:$0xff]
    %v1155 = vld [vmem:[#allocation6 + $0xc0] sm:$0xff]
    %v1156 = vld [vmem:[#allocation6 + $0xc8] sm:$0xff]
    %v1157 = vld [vmem:[#allocation6 + $0xd0] sm:$0xff]
    %v1158 = vld [vmem:[#allocation6 + $0xd8] sm:$0xff]
    %v1159 = vld [vmem:[#allocation6 + $0xe0] sm:$0xff]
    %v1160 = vld [vmem:[#allocation6 + $0xe8] sm:$0xff]
    %v1161 = vld [vmem:[#allocation6 + $0xf0] sm:$0xff]
    %v1162 = vld [vmem:[#allocation6 + $0xf8] sm:$0xff]
    %v1163 = vld [vmem:[#allocation6 + $0x100] sm:$0xff]
    %v1164 = vld [vmem:[#allocation6 + $0x108] sm:$0xff]
    %v1165 = vld [vmem:[#allocation6 + $0x110] sm:$0xff]
    %v1166 = vld [vmem:[#allocation6 + $0x118] sm:$0xff]
    %v1167 = vld [vmem:[#allocation6 + $0x120] sm:$0xff]
    %v1168 = vld [vmem:[#allocation6 + $0x128] sm:$0xff]
    %v1169 = vld [vmem:[#allocation6 + $0x130] sm:$0xff]
    %v1170 = vld [vmem:[#allocation6 + $0x138] sm:$0xff]
    %v1171 = vld [vmem:[#allocation6 + $0x140] sm:$0xff]
    %v1172 = vld [vmem:[#allocation6 + $0x148] sm:$0xff]
    %v1173 = vld [vmem:[#allocation6 + $0x150] sm:$0xff]
    %v1174 = vld [vmem:[#allocation6 + $0x158] sm:$0xff]
    %v1175 = vld [vmem:[#allocation6 + $0x160] sm:$0xff]
    %v1176 = vld [vmem:[#allocation6 + $0x168] sm:$0xff]
    %v1177 = vld [vmem:[#allocation6 + $0x170] sm:$0xff]
    %v1178 = vld [vmem:[#allocation6 + $0x178] sm:$0xff]
    %1179 = vmatpush.msra.mxu0 %v1176
    %1180 = vmatpush.msra.mxu0 %v1173
    %1181 = vmatpush.msra.mxu0 %v1170
    %1182 = vmatpush.msra.mxu0 %v1167
    %1183 = vmatpush.msra.mxu0 %v1164
    %1184 = vmatpush.msra.mxu0 %v1161
    %1185 = vmatpush.msra.mxu0 %v1158
    %1186 = vmatpush.msra.mxu0 %v1155
    %1187 = vmatpush.msra.mxu0 %v1152
    %1188 = vmatpush.msra.mxu0 %v1149
    %1189 = vmatpush.msra.mxu0 %v1146
    %1190 = vmatpush.msra.mxu0 %v1143
    %1191 = vmatpush.msra.mxu0 %v1140
    %1192 = vmatpush.msra.mxu0 %v1137
    %1193 = vmatpush.msra.mxu0 %v1134
    %1194 = vmatpush.msra.mxu0 %v1131
    %1195 = vmatmul.f32.gmra.mxu0 %v1124
    %v1196 = vpop.f32.mrf.mxu0
    %v1197 = vadd.f32 0.0, %v1196
    %1198 = vdwg.mxu0
    %1199 = vmatpush.msra.mxu0 %v1177
    %1200 = vmatpush.msra.mxu0 %v1174
    %1201 = vmatpush.msra.mxu0 %v1171
    %1202 = vmatpush.msra.mxu0 %v1168
    %1203 = vmatpush.msra.mxu0 %v1165
    %1204 = vmatpush.msra.mxu0 %v1162
    %1205 = vmatpush.msra.mxu0 %v1159
    %1206 = vmatpush.msra.mxu0 %v1156
    %1207 = vmatpush.msra.mxu0 %v1153
    %1208 = vmatpush.msra.mxu0 %v1150
    %1209 = vmatpush.msra.mxu0 %v1147
    %1210 = vmatpush.msra.mxu0 %v1144
    %1211 = vmatpush.msra.mxu0 %v1141
    %1212 = vmatpush.msra.mxu0 %v1138
    %1213 = vmatpush.msra.mxu0 %v1135
    %1214 = vmatpush.msra.mxu0 %v1132
    %1215 = vmatmul.f32.gmra.mxu0 %v1124
    %v1216 = vpop.f32.mrf.mxu0
    %v1217 = vadd.f32 0.0, %v1216
    %1218 = vdwg.mxu0
    %1219 = vmatpush.msra.mxu0 %v1178
    %1220 = vmatpush.msra.mxu0 %v1175
    %1221 = vmatpush.msra.mxu0 %v1172
    %1222 = vmatpush.msra.mxu0 %v1169
    %1223 = vmatpush.msra.mxu0 %v1166
    %1224 = vmatpush.msra.mxu0 %v1163
    %1225 = vmatpush.msra.mxu0 %v1160
    %1226 = vmatpush.msra.mxu0 %v1157
    %1227 = vmatpush.msra.mxu0 %v1154
    %1228 = vmatpush.msra.mxu0 %v1151
    %1229 = vmatpush.msra.mxu0 %v1148
    %1230 = vmatpush.msra.mxu0 %v1145
    %1231 = vmatpush.msra.mxu0 %v1142
    %1232 = vmatpush.msra.mxu0 %v1139
    %1233 = vmatpush.msra.mxu0 %v1136
    %1234 = vmatpush.msra.mxu0 %v1133
    %1235 = vmatmul.f32.gmra.mxu0 %v1124
    %v1236 = vpop.f32.mrf.mxu0
    %v1237 = vadd.f32 0.0, %v1236
    %1238 = vdwg.mxu0
    %v1239 = vadd.f32 %v1128, %v1197
    %v1240 = vadd.f32 %v1129, %v1217
    %v1241 = vxor.u32 %v1239, 2147483648
    %v1242 = vxor.u32 %v1240, 2147483648
    %v1243 = vmul.f32 %v1241, 1.442695
    %v1244 = vpow.pop %v1243
    %v1245 = vmul.f32 %v1242, 1.442695
    %v1246 = vpow.pop %v1245
    %v1247 = vadd.f32 %v1244, 1.0
    %v1248 = vadd.f32 %v1246, 1.0
    %v1249 = vrcp.pop %v1247
    %v1250 = vmul.f32 %v1247, %v1249
    %v1251 = vsub.f32 1.0, %v1250
    %v1252 = vmul.f32 %v1249, %v1251
    %v1253 = vadd.f32 %v1249, %v1252
    %vm1254 = vweird.f32 %v1247
    %vm1255 = vweird.f32 %v1249
    %vm1256 = vmor %vm1254, %vm1255
    %v1257 = vsel %vm1256, %v1249, %v1253
    %v1258 = vand.u32 2147483647, %v1247
    %vm1259 = vcmp.eq.f32.partialorder %v1258, 8.507059e+37
    %v1260 = vand.u32 %v1247, 2147483648
    %v1261 = vor.u32 1.1754944e-38, %v1260
    %v1262 = vsel %vm1259, %v1261, %v1257
    %v1263 = vmul.f32 1.0, %v1262
    %v1264 = vrcp.pop %v1248
    %v1265 = vmul.f32 %v1248, %v1264
    %v1266 = vsub.f32 1.0, %v1265
    %v1267 = vmul.f32 %v1264, %v1266
    %v1268 = vadd.f32 %v1264, %v1267
    %vm1269 = vweird.f32 %v1248
    %vm1270 = vweird.f32 %v1264
    %vm1271 = vmor %vm1269, %vm1270
    %v1272 = vsel %vm1271, %v1264, %v1268
    %v1273 = vand.u32 2147483647, %v1248
    %vm1274 = vcmp.eq.f32.partialorder %v1273, 8.507059e+37
    %v1275 = vand.u32 %v1248, 2147483648
    %v1276 = vor.u32 1.1754944e-38, %v1275
    %v1277 = vsel %vm1274, %v1276, %v1272
    %v1278 = vmul.f32 1.0, %v1277
    %v1279 = vadd.f32 %v1237, %v316
    %v1280 = vmul.f32 %v1263, %v1279
    %v1281 = vadd.f32 %v1130, %v1280
    %v1282 = vtanh.pop %v1281
    %v1283 = vsub.f32 1.0, %v1278
    %v1284 = vmul.f32 %v1283, %v1282
    %v1285 = vmul.f32 %v1278, %v1124
    %v1286 = vadd.f32 %v1284, %v1285
    %s1287 = scalar_lea.vmem [#allocation2], 40
    %1288 = vst [vmem:[%s1287] sm:$0xff] %v1286
    %s1289 = scalar_lea.vmem [#allocation3], 144
    %v1290 = vld [vmem:[%s1289] sm:$0xff]
    %v1291 = vld [vmem:[%s1289 + $0x8] sm:$0xff]
    %v1292 = vld [vmem:[%s1289 + $0x10] sm:$0xff]
    %v1293 = vld [vmem:[#allocation6] sm:$0xff]
    %v1294 = vld [vmem:[#allocation6 + $0x8] sm:$0xff]
    %v1295 = vld [vmem:[#allocation6 + $0x10] sm:$0xff]
    %v1296 = vld [vmem:[#allocation6 + $0x18] sm:$0xff]
    %v1297 = vld [vmem:[#allocation6 + $0x20] sm:$0xff]
    %v1298 = vld [vmem:[#allocation6 + $0x28] sm:$0xff]
    %v1299 = vld [vmem:[#allocation6 + $0x30] sm:$0xff]
    %v1300 = vld [vmem:[#allocation6 + $0x38] sm:$0xff]
    %v1301 = vld [vmem:[#allocation6 + $0x40] sm:$0xff]
    %v1302 = vld [vmem:[#allocation6 + $0x48] sm:$0xff]
    %v1303 = vld [vmem:[#allocation6 + $0x50] sm:$0xff]
    %v1304 = vld [vmem:[#allocation6 + $0x58] sm:$0xff]
    %v1305 = vld [vmem:[#allocation6 + $0x60] sm:$0xff]
    %v1306 = vld [vmem:[#allocation6 + $0x68] sm:$0xff]
    %v1307 = vld [vmem:[#allocation6 + $0x70] sm:$0xff]
    %v1308 = vld [vmem:[#allocation6 + $0x78] sm:$0xff]
    %v1309 = vld [vmem:[#allocation6 + $0x80] sm:$0xff]
    %v1310 = vld [vmem:[#allocation6 + $0x88] sm:$0xff]
    %v1311 = vld [vmem:[#allocation6 + $0x90] sm:$0xff]
    %v1312 = vld [vmem:[#allocation6 + $0x98] sm:$0xff]
    %v1313 = vld [vmem:[#allocation6 + $0xa0] sm:$0xff]
    %v1314 = vld [vmem:[#allocation6 + $0xa8] sm:$0xff]
    %v1315 = vld [vmem:[#allocation6 + $0xb0] sm:$0xff]
    %v1316 = vld [vmem:[#allocation6 + $0xb8] sm:$0xff]
    %v1317 = vld [vmem:[#allocation6 + $0xc0] sm:$0xff]
    %v1318 = vld [vmem:[#allocation6 + $0xc8] sm:$0xff]
    %v1319 = vld [vmem:[#allocation6 + $0xd0] sm:$0xff]
    %v1320 = vld [vmem:[#allocation6 + $0xd8] sm:$0xff]
    %v1321 = vld [vmem:[#allocation6 + $0xe0] sm:$0xff]
    %v1322 = vld [vmem:[#allocation6 + $0xe8] sm:$0xff]
    %v1323 = vld [vmem:[#allocation6 + $0xf0] sm:$0xff]
    %v1324 = vld [vmem:[#allocation6 + $0xf8] sm:$0xff]
    %v1325 = vld [vmem:[#allocation6 + $0x100] sm:$0xff]
    %v1326 = vld [vmem:[#allocation6 + $0x108] sm:$0xff]
    %v1327 = vld [vmem:[#allocation6 + $0x110] sm:$0xff]
    %v1328 = vld [vmem:[#allocation6 + $0x118] sm:$0xff]
    %v1329 = vld [vmem:[#allocation6 + $0x120] sm:$0xff]
    %v1330 = vld [vmem:[#allocation6 + $0x128] sm:$0xff]
    %v1331 = vld [vmem:[#allocation6 + $0x130] sm:$0xff]
    %v1332 = vld [vmem:[#allocation6 + $0x138] sm:$0xff]
    %v1333 = vld [vmem:[#allocation6 + $0x140] sm:$0xff]
    %v1334 = vld [vmem:[#allocation6 + $0x148] sm:$0xff]
    %v1335 = vld [vmem:[#allocation6 + $0x150] sm:$0xff]
    %v1336 = vld [vmem:[#allocation6 + $0x158] sm:$0xff]
    %v1337 = vld [vmem:[#allocation6 + $0x160] sm:$0xff]
    %v1338 = vld [vmem:[#allocation6 + $0x168] sm:$0xff]
    %v1339 = vld [vmem:[#allocation6 + $0x170] sm:$0xff]
    %v1340 = vld [vmem:[#allocation6 + $0x178] sm:$0xff]
    %1341 = vmatpush.msra.mxu0 %v1338
    %1342 = vmatpush.msra.mxu0 %v1335
    %1343 = vmatpush.msra.mxu0 %v1332
    %1344 = vmatpush.msra.mxu0 %v1329
    %1345 = vmatpush.msra.mxu0 %v1326
    %1346 = vmatpush.msra.mxu0 %v1323
    %1347 = vmatpush.msra.mxu0 %v1320
    %1348 = vmatpush.msra.mxu0 %v1317
    %1349 = vmatpush.msra.mxu0 %v1314
    %1350 = vmatpush.msra.mxu0 %v1311
    %1351 = vmatpush.msra.mxu0 %v1308
    %1352 = vmatpush.msra.mxu0 %v1305
    %1353 = vmatpush.msra.mxu0 %v1302
    %1354 = vmatpush.msra.mxu0 %v1299
    %1355 = vmatpush.msra.mxu0 %v1296
    %1356 = vmatpush.msra.mxu0 %v1293
    %1357 = vmatmul.f32.gmra.mxu0 %v1286
    %v1358 = vpop.f32.mrf.mxu0
    %v1359 = vadd.f32 0.0, %v1358
    %1360 = vdwg.mxu0
    %1361 = vmatpush.msra.mxu0 %v1339
    %1362 = vmatpush.msra.mxu0 %v1336
    %1363 = vmatpush.msra.mxu0 %v1333
    %1364 = vmatpush.msra.mxu0 %v1330
    %1365 = vmatpush.msra.mxu0 %v1327
    %1366 = vmatpush.msra.mxu0 %v1324
    %1367 = vmatpush.msra.mxu0 %v1321
    %1368 = vmatpush.msra.mxu0 %v1318
    %1369 = vmatpush.msra.mxu0 %v1315
    %1370 = vmatpush.msra.mxu0 %v1312
    %1371 = vmatpush.msra.mxu0 %v1309
    %1372 = vmatpush.msra.mxu0 %v1306
    %1373 = vmatpush.msra.mxu0 %v1303
    %1374 = vmatpush.msra.mxu0 %v1300
    %1375 = vmatpush.msra.mxu0 %v1297
    %1376 = vmatpush.msra.mxu0 %v1294
    %1377 = vmatmul.f32.gmra.mxu0 %v1286
    %v1378 = vpop.f32.mrf.mxu0
    %v1379 = vadd.f32 0.0, %v1378
    %1380 = vdwg.mxu0
    %1381 = vmatpush.msra.mxu0 %v1340
    %1382 = vmatpush.msra.mxu0 %v1337
    %1383 = vmatpush.msra.mxu0 %v1334
    %1384 = vmatpush.msra.mxu0 %v1331
    %1385 = vmatpush.msra.mxu0 %v1328
    %1386 = vmatpush.msra.mxu0 %v1325
    %1387 = vmatpush.msra.mxu0 %v1322
    %1388 = vmatpush.msra.mxu0 %v1319
    %1389 = vmatpush.msra.mxu0 %v1316
    %1390 = vmatpush.msra.mxu0 %v1313
    %1391 = vmatpush.msra.mxu0 %v1310
    %1392 = vmatpush.msra.mxu0 %v1307
    %1393 = vmatpush.msra.mxu0 %v1304
    %1394 = vmatpush.msra.mxu0 %v1301
    %1395 = vmatpush.msra.mxu0 %v1298
    %1396 = vmatpush.msra.mxu0 %v1295
    %1397 = vmatmul.f32.gmra.mxu0 %v1286
    %v1398 = vpop.f32.mrf.mxu0
    %v1399 = vadd.f32 0.0, %v1398
    %1400 = vdwg.mxu0
    %v1401 = vadd.f32 %v1290, %v1359
    %v1402 = vadd.f32 %v1291, %v1379
    %v1403 = vxor.u32 %v1401, 2147483648
    %v1404 = vxor.u32 %v1402, 2147483648
    %v1405 = vmul.f32 %v1403, 1.442695
    %v1406 = vpow.pop %v1405
    %v1407 = vmul.f32 %v1404, 1.442695
    %v1408 = vpow.pop %v1407
    %v1409 = vadd.f32 %v1406, 1.0
    %v1410 = vadd.f32 %v1408, 1.0
    %v1411 = vrcp.pop %v1409
    %v1412 = vmul.f32 %v1409, %v1411
    %v1413 = vsub.f32 1.0, %v1412
    %v1414 = vmul.f32 %v1411, %v1413
    %v1415 = vadd.f32 %v1411, %v1414
    %vm1416 = vweird.f32 %v1409
    %vm1417 = vweird.f32 %v1411
    %vm1418 = vmor %vm1416, %vm1417
    %v1419 = vsel %vm1418, %v1411, %v1415
    %v1420 = vand.u32 2147483647, %v1409
    %vm1421 = vcmp.eq.f32.partialorder %v1420, 8.507059e+37
    %v1422 = vand.u32 %v1409, 2147483648
    %v1423 = vor.u32 1.1754944e-38, %v1422
    %v1424 = vsel %vm1421, %v1423, %v1419
    %v1425 = vmul.f32 1.0, %v1424
    %v1426 = vrcp.pop %v1410
    %v1427 = vmul.f32 %v1410, %v1426
    %v1428 = vsub.f32 1.0, %v1427
    %v1429 = vmul.f32 %v1426, %v1428
    %v1430 = vadd.f32 %v1426, %v1429
    %vm1431 = vweird.f32 %v1410
    %vm1432 = vweird.f32 %v1426
    %vm1433 = vmor %vm1431, %vm1432
    %v1434 = vsel %vm1433, %v1426, %v1430
    %v1435 = vand.u32 2147483647, %v1410
    %vm1436 = vcmp.eq.f32.partialorder %v1435, 8.507059e+37
    %v1437 = vand.u32 %v1410, 2147483648
    %v1438 = vor.u32 1.1754944e-38, %v1437
    %v1439 = vsel %vm1436, %v1438, %v1434
    %v1440 = vmul.f32 1.0, %v1439
    %v1441 = vadd.f32 %v1399, %v316
    %v1442 = vmul.f32 %v1425, %v1441
    %v1443 = vadd.f32 %v1292, %v1442
    %v1444 = vtanh.pop %v1443
    %v1445 = vsub.f32 1.0, %v1440
    %v1446 = vmul.f32 %v1445, %v1444
    %v1447 = vmul.f32 %v1440, %v1286
    %v1448 = vadd.f32 %v1446, %v1447
    %s1449 = scalar_lea.vmem [#allocation2], 48
    %1450 = vst [vmem:[%s1449] sm:$0xff] %v1448
    %s1451 = scalar_lea.vmem [#allocation3], 168
    %v1452 = vld [vmem:[%s1451] sm:$0xff]
    %v1453 = vld [vmem:[%s1451 + $0x8] sm:$0xff]
    %v1454 = vld [vmem:[%s1451 + $0x10] sm:$0xff]
    %v1455 = vld [vmem:[#allocation6] sm:$0xff]
    %v1456 = vld [vmem:[#allocation6 + $0x8] sm:$0xff]
    %v1457 = vld [vmem:[#allocation6 + $0x10] sm:$0xff]
    %v1458 = vld [vmem:[#allocation6 + $0x18] sm:$0xff]
    %v1459 = vld [vmem:[#allocation6 + $0x20] sm:$0xff]
    %v1460 = vld [vmem:[#allocation6 + $0x28] sm:$0xff]
    %v1461 = vld [vmem:[#allocation6 + $0x30] sm:$0xff]
    %v1462 = vld [vmem:[#allocation6 + $0x38] sm:$0xff]
    %v1463 = vld [vmem:[#allocation6 + $0x40] sm:$0xff]
    %v1464 = vld [vmem:[#allocation6 + $0x48] sm:$0xff]
    %v1465 = vld [vmem:[#allocation6 + $0x50] sm:$0xff]
    %v1466 = vld [vmem:[#allocation6 + $0x58] sm:$0xff]
    %v1467 = vld [vmem:[#allocation6 + $0x60] sm:$0xff]
    %v1468 = vld [vmem:[#allocation6 + $0x68] sm:$0xff]
    %v1469 = vld [vmem:[#allocation6 + $0x70] sm:$0xff]
    %v1470 = vld [vmem:[#allocation6 + $0x78] sm:$0xff]
    %v1471 = vld [vmem:[#allocation6 + $0x80] sm:$0xff]
    %v1472 = vld [vmem:[#allocation6 + $0x88] sm:$0xff]
    %v1473 = vld [vmem:[#allocation6 + $0x90] sm:$0xff]
    %v1474 = vld [vmem:[#allocation6 + $0x98] sm:$0xff]
    %v1475 = vld [vmem:[#allocation6 + $0xa0] sm:$0xff]
    %v1476 = vld [vmem:[#allocation6 + $0xa8] sm:$0xff]
    %v1477 = vld [vmem:[#allocation6 + $0xb0] sm:$0xff]
    %v1478 = vld [vmem:[#allocation6 + $0xb8] sm:$0xff]
    %v1479 = vld [vmem:[#allocation6 + $0xc0] sm:$0xff]
    %v1480 = vld [vmem:[#allocation6 + $0xc8] sm:$0xff]
    %v1481 = vld [vmem:[#allocation6 + $0xd0] sm:$0xff]
    %v1482 = vld [vmem:[#allocation6 + $0xd8] sm:$0xff]
    %v1483 = vld [vmem:[#allocation6 + $0xe0] sm:$0xff]
    %v1484 = vld [vmem:[#allocation6 + $0xe8] sm:$0xff]
    %v1485 = vld [vmem:[#allocation6 + $0xf0] sm:$0xff]
    %v1486 = vld [vmem:[#allocation6 + $0xf8] sm:$0xff]
    %v1487 = vld [vmem:[#allocation6 + $0x100] sm:$0xff]
    %v1488 = vld [vmem:[#allocation6 + $0x108] sm:$0xff]
    %v1489 = vld [vmem:[#allocation6 + $0x110] sm:$0xff]
    %v1490 = vld [vmem:[#allocation6 + $0x118] sm:$0xff]
    %v1491 = vld [vmem:[#allocation6 + $0x120] sm:$0xff]
    %v1492 = vld [vmem:[#allocation6 + $0x128] sm:$0xff]
    %v1493 = vld [vmem:[#allocation6 + $0x130] sm:$0xff]
    %v1494 = vld [vmem:[#allocation6 + $0x138] sm:$0xff]
    %v1495 = vld [vmem:[#allocation6 + $0x140] sm:$0xff]
    %v1496 = vld [vmem:[#allocation6 + $0x148] sm:$0xff]
    %v1497 = vld [vmem:[#allocation6 + $0x150] sm:$0xff]
    %v1498 = vld [vmem:[#allocation6 + $0x158] sm:$0xff]
    %v1499 = vld [vmem:[#allocation6 + $0x160] sm:$0xff]
    %v1500 = vld [vmem:[#allocation6 + $0x168] sm:$0xff]
    %v1501 = vld [vmem:[#allocation6 + $0x170] sm:$0xff]
    %v1502 = vld [vmem:[#allocation6 + $0x178] sm:$0xff]
    %1503 = vmatpush.msra.mxu0 %v1500
    %1504 = vmatpush.msra.mxu0 %v1497
    %1505 = vmatpush.msra.mxu0 %v1494
    %1506 = vmatpush.msra.mxu0 %v1491
    %1507 = vmatpush.msra.mxu0 %v1488
    %1508 = vmatpush.msra.mxu0 %v1485
    %1509 = vmatpush.msra.mxu0 %v1482
    %1510 = vmatpush.msra.mxu0 %v1479
    %1511 = vmatpush.msra.mxu0 %v1476
    %1512 = vmatpush.msra.mxu0 %v1473
    %1513 = vmatpush.msra.mxu0 %v1470
    %1514 = vmatpush.msra.mxu0 %v1467
    %1515 = vmatpush.msra.mxu0 %v1464
    %1516 = vmatpush.msra.mxu0 %v1461
    %1517 = vmatpush.msra.mxu0 %v1458
    %1518 = vmatpush.msra.mxu0 %v1455
    %1519 = vmatmul.f32.gmra.mxu0 %v1448
    %v1520 = vpop.f32.mrf.mxu0
    %v1521 = vadd.f32 0.0, %v1520
    %1522 = vdwg.mxu0
    %1523 = vmatpush.msra.mxu0 %v1501
    %1524 = vmatpush.msra.mxu0 %v1498
    %1525 = vmatpush.msra.mxu0 %v1495
    %1526 = vmatpush.msra.mxu0 %v1492
    %1527 = vmatpush.msra.mxu0 %v1489
    %1528 = vmatpush.msra.mxu0 %v1486
    %1529 = vmatpush.msra.mxu0 %v1483
    %1530 = vmatpush.msra.mxu0 %v1480
    %1531 = vmatpush.msra.mxu0 %v1477
    %1532 = vmatpush.msra.mxu0 %v1474
    %1533 = vmatpush.msra.mxu0 %v1471
    %1534 = vmatpush.msra.mxu0 %v1468
    %1535 = vmatpush.msra.mxu0 %v1465
    %1536 = vmatpush.msra.mxu0 %v1462
    %1537 = vmatpush.msra.mxu0 %v1459
    %1538 = vmatpush.msra.mxu0 %v1456
    %1539 = vmatmul.f32.gmra.mxu0 %v1448
    %v1540 = vpop.f32.mrf.mxu0
    %v1541 = vadd.f32 0.0, %v1540
    %1542 = vdwg.mxu0
    %1543 = vmatpush.msra.mxu0 %v1502
    %1544 = vmatpush.msra.mxu0 %v1499
    %1545 = vmatpush.msra.mxu0 %v1496
    %1546 = vmatpush.msra.mxu0 %v1493
    %1547 = vmatpush.msra.mxu0 %v1490
    %1548 = vmatpush.msra.mxu0 %v1487
    %1549 = vmatpush.msra.mxu0 %v1484
    %1550 = vmatpush.msra.mxu0 %v1481
    %1551 = vmatpush.msra.mxu0 %v1478
    %1552 = vmatpush.msra.mxu0 %v1475
    %1553 = vmatpush.msra.mxu0 %v1472
    %1554 = vmatpush.msra.mxu0 %v1469
    %1555 = vmatpush.msra.mxu0 %v1466
    %1556 = vmatpush.msra.mxu0 %v1463
    %1557 = vmatpush.msra.mxu0 %v1460
    %1558 = vmatpush.msra.mxu0 %v1457
    %1559 = vmatmul.f32.gmra.mxu0 %v1448
    %v1560 = vpop.f32.mrf.mxu0
    %v1561 = vadd.f32 0.0, %v1560
    %1562 = vdwg.mxu0
    %v1563 = vadd.f32 %v1452, %v1521
    %v1564 = vadd.f32 %v1453, %v1541
    %v1565 = vxor.u32 %v1563, 2147483648
    %v1566 = vxor.u32 %v1564, 2147483648
    %v1567 = vmul.f32 %v1565, 1.442695
    %v1568 = vpow.pop %v1567
    %v1569 = vmul.f32 %v1566, 1.442695
    %v1570 = vpow.pop %v1569
    %v1571 = vadd.f32 %v1568, 1.0
    %v1572 = vadd.f32 %v1570, 1.0
    %v1573 = vrcp.pop %v1571
    %v1574 = vmul.f32 %v1571, %v1573
    %v1575 = vsub.f32 1.0, %v1574
    %v1576 = vmul.f32 %v1573, %v1575
    %v1577 = vadd.f32 %v1573, %v1576
    %vm1578 = vweird.f32 %v1571
    %vm1579 = vweird.f32 %v1573
    %vm1580 = vmor %vm1578, %vm1579
    %v1581 = vsel %vm1580, %v1573, %v1577
    %v1582 = vand.u32 2147483647, %v1571
    %vm1583 = vcmp.eq.f32.partialorder %v1582, 8.507059e+37
    %v1584 = vand.u32 %v1571, 2147483648
    %v1585 = vor.u32 1.1754944e-38, %v1584
    %v1586 = vsel %vm1583, %v1585, %v1581
    %v1587 = vmul.f32 1.0, %v1586
    %v1588 = vrcp.pop %v1572
    %v1589 = vmul.f32 %v1572, %v1588
    %v1590 = vsub.f32 1.0, %v1589
    %v1591 = vmul.f32 %v1588, %v1590
    %v1592 = vadd.f32 %v1588, %v1591
    %vm1593 = vweird.f32 %v1572
    %vm1594 = vweird.f32 %v1588
    %vm1595 = vmor %vm1593, %vm1594
    %v1596 = vsel %vm1595, %v1588, %v1592
    %v1597 = vand.u32 2147483647, %v1572
    %vm1598 = vcmp.eq.f32.partialorder %v1597, 8.507059e+37
    %v1599 = vand.u32 %v1572, 2147483648
    %v1600 = vor.u32 1.1754944e-38, %v1599
    %v1601 = vsel %vm1598, %v1600, %v1596
    %v1602 = vmul.f32 1.0, %v1601
    %v1603 = vadd.f32 %v1561, %v316
    %v1604 = vmul.f32 %v1587, %v1603
    %v1605 = vadd.f32 %v1454, %v1604
    %v1606 = vtanh.pop %v1605
    %v1607 = vsub.f32 1.0, %v1602
    %v1608 = vmul.f32 %v1607, %v1606
    %v1609 = vmul.f32 %v1602, %v1448
    %v1610 = vadd.f32 %v1608, %v1609
    %s1611 = scalar_lea.vmem [#allocation2], 56
    %1612 = vst [vmem:[%s1611] sm:$0xff] %v1610
    %1613 = vst [vmem:[%s9] sm:$0xff] %v1610
    %v1614 = vld [vmem:[#allocation2] sm:$0xff]
    %v1615 = vld [vmem:[#allocation2 + $0x8] sm:$0xff]
    %v1616 = vld [vmem:[#allocation2 + $0x10] sm:$0xff]
    %v1617 = vld [vmem:[#allocation2 + $0x18] sm:$0xff]
    %v1618 = vld [vmem:[#allocation2 + $0x20] sm:$0xff]
    %v1619 = vld [vmem:[#allocation2 + $0x28] sm:$0xff]
    %v1620 = vld [vmem:[#allocation2 + $0x30] sm:$0xff]
    %v1621 = vld [vmem:[#allocation2 + $0x38] sm:$0xff]
    %s1622 = scalar_lea.vmem [#allocation4], 384
    %v1623 = vld [vmem:[%s1622] sm:$0xff]
    %v1624 = vld [vmem:[%s1622 + $0x8] sm:$0xff]
    %v1625 = vld [vmem:[%s1622 + $0x10] sm:$0xff]
    %v1626 = vld [vmem:[%s1622 + $0x18] sm:$0xff]
    %v1627 = vld [vmem:[%s1622 + $0x20] sm:$0xff]
    %v1628 = vld [vmem:[%s1622 + $0x28] sm:$0xff]
    %v1629 = vld [vmem:[%s1622 + $0x30] sm:$0xff]
    %v1630 = vld [vmem:[%s1622 + $0x38] sm:$0xff]
    %v1631 = vld [vmem:[%s1622 + $0x40] sm:$0xff]
    %v1632 = vld [vmem:[%s1622 + $0x48] sm:$0xff]
    %v1633 = vld [vmem:[%s1622 + $0x50] sm:$0xff]
    %v1634 = vld [vmem:[%s1622 + $0x58] sm:$0xff]
    %v1635 = vld [vmem:[%s1622 + $0x60] sm:$0xff]
    %v1636 = vld [vmem:[%s1622 + $0x68] sm:$0xff]
    %v1637 = vld [vmem:[%s1622 + $0x70] sm:$0xff]
    %v1638 = vld [vmem:[%s1622 + $0x78] sm:$0xff]
    %v1639 = vld [vmem:[%s1622 + $0x80] sm:$0xff]
    %v1640 = vld [vmem:[%s1622 + $0x88] sm:$0xff]
    %v1641 = vld [vmem:[%s1622 + $0x90] sm:$0xff]
    %v1642 = vld [vmem:[%s1622 + $0x98] sm:$0xff]
    %v1643 = vld [vmem:[%s1622 + $0xa0] sm:$0xff]
    %v1644 = vld [vmem:[%s1622 + $0xa8] sm:$0xff]
    %v1645 = vld [vmem:[%s1622 + $0xb0] sm:$0xff]
    %v1646 = vld [vmem:[%s1622 + $0xb8] sm:$0xff]
    %v1647 = vld [vmem:[%s1622 + $0xc0] sm:$0xff]
    %v1648 = vld [vmem:[%s1622 + $0xc8] sm:$0xff]
    %v1649 = vld [vmem:[%s1622 + $0xd0] sm:$0xff]
    %v1650 = vld [vmem:[%s1622 + $0xd8] sm:$0xff]
    %v1651 = vld [vmem:[%s1622 + $0xe0] sm:$0xff]
    %v1652 = vld [vmem:[%s1622 + $0xe8] sm:$0xff]
    %v1653 = vld [vmem:[%s1622 + $0xf0] sm:$0xff]
    %v1654 = vld [vmem:[%s1622 + $0xf8] sm:$0xff]
    %v1655 = vld [vmem:[%s1622 + $0x100] sm:$0xff]
    %v1656 = vld [vmem:[%s1622 + $0x108] sm:$0xff]
    %v1657 = vld [vmem:[%s1622 + $0x110] sm:$0xff]
    %v1658 = vld [vmem:[%s1622 + $0x118] sm:$0xff]
    %v1659 = vld [vmem:[%s1622 + $0x120] sm:$0xff]
    %v1660 = vld [vmem:[%s1622 + $0x128] sm:$0xff]
    %v1661 = vld [vmem:[%s1622 + $0x130] sm:$0xff]
    %v1662 = vld [vmem:[%s1622 + $0x138] sm:$0xff]
    %v1663 = vld [vmem:[%s1622 + $0x140] sm:$0xff]
    %v1664 = vld [vmem:[%s1622 + $0x148] sm:$0xff]
    %v1665 = vld [vmem:[%s1622 + $0x150] sm:$0xff]
    %v1666 = vld [vmem:[%s1622 + $0x158] sm:$0xff]
    %v1667 = vld [vmem:[%s1622 + $0x160] sm:$0xff]
    %v1668 = vld [vmem:[%s1622 + $0x168] sm:$0xff]
    %v1669 = vld [vmem:[%s1622 + $0x170] sm:$0xff]
    %v1670 = vld [vmem:[%s1622 + $0x178] sm:$0xff]
    %s1671 = scalar_lea.vmem %s4, 3
    %v1672 = vld [vmem:[%s1671] sm:$0x7]
    %v1674 = vperm.slane %v1672, 0
    %v1675 = vperm.slane %v1672, 1
    %v1676 = vperm.slane %v1672, 2
    %1680 = vmatpush.msra.mxu0 %v1668
    %1681 = vmatpush.msra.mxu0 %v1665
    %1682 = vmatpush.msra.mxu0 %v1662
    %1683 = vmatpush.msra.mxu0 %v1659
    %1684 = vmatpush.msra.mxu0 %v1656
    %1685 = vmatpush.msra.mxu0 %v1653
    %1686 = vmatpush.msra.mxu0 %v1650
    %1687 = vmatpush.msra.mxu0 %v1647
    %1688 = vmatpush.msra.mxu0 %v1644
    %1689 = vmatpush.msra.mxu0 %v1641
    %1690 = vmatpush.msra.mxu0 %v1638
    %1691 = vmatpush.msra.mxu0 %v1635
    %1692 = vmatpush.msra.mxu0 %v1632
    %1693 = vmatpush.msra.mxu0 %v1629
    %1694 = vmatpush.msra.mxu0 %v1626
    %1695 = vmatpush.msra.mxu0 %v1623
    %1696 = vmatmul.f32.gmra.mxu0 %v1614
    %v1697 = vpop.f32.mrf.mxu0
    %v1698 = vadd.f32 %v1674, %v1697
    %1699 = vmatmul.f32.gmra.mxu0 %v1615
    %v1700 = vpop.f32.mrf.mxu0
    %v1701 = vadd.f32 %v1674, %v1700
    %1702 = vmatmul.f32.gmra.mxu0 %v1616
    %v1703 = vpop.f32.mrf.mxu0
    %v1704 = vadd.f32 %v1674, %v1703
    %1705 = vmatmul.f32.gmra.mxu0 %v1617
    %v1706 = vpop.f32.mrf.mxu0
    %v1707 = vadd.f32 %v1674, %v1706
    %1708 = vmatmul.f32.gmra.mxu0 %v1618
    %v1709 = vpop.f32.mrf.mxu0
    %v1710 = vadd.f32 %v1674, %v1709
    %1711 = vmatmul.f32.gmra.mxu0 %v1619
    %v1712 = vpop.f32.mrf.mxu0
    %v1713 = vadd.f32 %v1674, %v1712
    %1714 = vmatmul.f32.gmra.mxu0 %v1620
    %v1715 = vpop.f32.mrf.mxu0
    %v1716 = vadd.f32 %v1674, %v1715
    %1717 = vmatmul.f32.gmra.mxu0 %v1621
    %v1718 = vpop.f32.mrf.mxu0
    %v1719 = vadd.f32 %v1674, %v1718
    %1720 = vdwg.mxu0
    %1721 = vmatpush.msra.mxu0 %v1669
    %1722 = vmatpush.msra.mxu0 %v1666
    %1723 = vmatpush.msra.mxu0 %v1663
    %1724 = vmatpush.msra.mxu0 %v1660
    %1725 = vmatpush.msra.mxu0 %v1657
    %1726 = vmatpush.msra.mxu0 %v1654
    %1727 = vmatpush.msra.mxu0 %v1651
    %1728 = vmatpush.msra.mxu0 %v1648
    %1729 = vmatpush.msra.mxu0 %v1645
    %1730 = vmatpush.msra.mxu0 %v1642
    %1731 = vmatpush.msra.mxu0 %v1639
    %1732 = vmatpush.msra.mxu0 %v1636
    %1733 = vmatpush.msra.mxu0 %v1633
    %1734 = vmatpush.msra.mxu0 %v1630
    %1735 = vmatpush.msra.mxu0 %v1627
    %1736 = vmatpush.msra.mxu0 %v1624
    %1737 = vmatmul.f32.gmra.mxu0 %v1614
    %v1738 = vpop.f32.mrf.mxu0
    %v1739 = vadd.f32 %v1675, %v1738
    %1740 = vmatmul.f32.gmra.mxu0 %v1615
    %v1741 = vpop.f32.mrf.mxu0
    %v1742 = vadd.f32 %v1675, %v1741
    %1743 = vmatmul.f32.gmra.mxu0 %v1616
    %v1744 = vpop.f32.mrf.mxu0
    %v1745 = vadd.f32 %v1675, %v1744
    %1746 = vmatmul.f32.gmra.mxu0 %v1617
    %v1747 = vpop.f32.mrf.mxu0
    %v1748 = vadd.f32 %v1675, %v1747
    %1749 = vmatmul.f32.gmra.mxu0 %v1618
    %v1750 = vpop.f32.mrf.mxu0
    %v1751 = vadd.f32 %v1675, %v1750
    %1752 = vmatmul.f32.gmra.mxu0 %v1619
    %v1753 = vpop.f32.mrf.mxu0
    %v1754 = vadd.f32 %v1675, %v1753
    %1755 = vmatmul.f32.gmra.mxu0 %v1620
    %v1756 = vpop.f32.mrf.mxu0
    %v1757 = vadd.f32 %v1675, %v1756
    %1758 = vmatmul.f32.gmra.mxu0 %v1621
    %v1759 = vpop.f32.mrf.mxu0
    %v1760 = vadd.f32 %v1675, %v1759
    %1761 = vdwg.mxu0
    %1762 = vmatpush.msra.mxu0 %v1670
    %1763 = vmatpush.msra.mxu0 %v1667
    %1764 = vmatpush.msra.mxu0 %v1664
    %1765 = vmatpush.msra.mxu0 %v1661
    %1766 = vmatpush.msra.mxu0 %v1658
    %1767 = vmatpush.msra.mxu0 %v1655
    %1768 = vmatpush.msra.mxu0 %v1652
    %1769 = vmatpush.msra.mxu0 %v1649
    %1770 = vmatpush.msra.mxu0 %v1646
    %1771 = vmatpush.msra.mxu0 %v1643
    %1772 = vmatpush.msra.mxu0 %v1640
    %1773 = vmatpush.msra.mxu0 %v1637
    %1774 = vmatpush.msra.mxu0 %v1634
    %1775 = vmatpush.msra.mxu0 %v1631
    %1776 = vmatpush.msra.mxu0 %v1628
    %1777 = vmatpush.msra.mxu0 %v1625
    %1778 = vmatmul.f32.gmra.mxu0 %v1614
    %v1779 = vpop.f32.mrf.mxu0
    %v1780 = vadd.f32 %v1676, %v1779
    %1781 = vmatmul.f32.gmra.mxu0 %v1615
    %v1782 = vpop.f32.mrf.mxu0
    %v1783 = vadd.f32 %v1676, %v1782
    %1784 = vmatmul.f32.gmra.mxu0 %v1616
    %v1785 = vpop.f32.mrf.mxu0
    %v1786 = vadd.f32 %v1676, %v1785
    %1787 = vmatmul.f32.gmra.mxu0 %v1617
    %v1788 = vpop.f32.mrf.mxu0
    %v1789 = vadd.f32 %v1676, %v1788
    %1790 = vmatmul.f32.gmra.mxu0 %v1618
    %v1791 = vpop.f32.mrf.mxu0
    %v1792 = vadd.f32 %v1676, %v1791
    %1793 = vmatmul.f32.gmra.mxu0 %v1619
    %v1794 = vpop.f32.mrf.mxu0
    %v1795 = vadd.f32 %v1676, %v1794
    %1796 = vmatmul.f32.gmra.mxu0 %v1620
    %v1797 = vpop.f32.mrf.mxu0
    %v1798 = vadd.f32 %v1676, %v1797
    %1799 = vmatmul.f32.gmra.mxu0 %v1621
    %v1800 = vpop.f32.mrf.mxu0
    %v1801 = vadd.f32 %v1676, %v1800
    %1802 = vdwg.mxu0
    %1803 = vst [vmem:[#allocation3] sm:$0xff] %v1698
    %1804 = vst [vmem:[#allocation3 + $0x8] sm:$0xff] %v1739
    %1805 = vst [vmem:[#allocation3 + $0x10] sm:$0xff] %v1780
    %1806 = vst [vmem:[#allocation3 + $0x18] sm:$0xff] %v1701
    %1807 = vst [vmem:[#allocation3 + $0x20] sm:$0xff] %v1742
    %1808 = vst [vmem:[#allocation3 + $0x28] sm:$0xff] %v1783
    %1809 = vst [vmem:[#allocation3 + $0x30] sm:$0xff] %v1704
    %1810 = vst [vmem:[#allocation3 + $0x38] sm:$0xff] %v1745
    %1811 = vst [vmem:[#allocation3 + $0x40] sm:$0xff] %v1786
    %1812 = vst [vmem:[#allocation3 + $0x48] sm:$0xff] %v1707
    %1813 = vst [vmem:[#allocation3 + $0x50] sm:$0xff] %v1748
    %1814 = vst [vmem:[#allocation3 + $0x58] sm:$0xff] %v1789
    %1815 = vst [vmem:[#allocation3 + $0x60] sm:$0xff] %v1710
    %1816 = vst [vmem:[#allocation3 + $0x68] sm:$0xff] %v1751
    %1817 = vst [vmem:[#allocation3 + $0x70] sm:$0xff] %v1792
    %1818 = vst [vmem:[#allocation3 + $0x78] sm:$0xff] %v1713
    %1819 = vst [vmem:[#allocation3 + $0x80] sm:$0xff] %v1754
    %1820 = vst [vmem:[#allocation3 + $0x88] sm:$0xff] %v1795
    %1821 = vst [vmem:[#allocation3 + $0x90] sm:$0xff] %v1716
    %1822 = vst [vmem:[#allocation3 + $0x98] sm:$0xff] %v1757
    %1823 = vst [vmem:[#allocation3 + $0xa0] sm:$0xff] %v1798
    %1824 = vst [vmem:[#allocation3 + $0xa8] sm:$0xff] %v1719
    %1825 = vst [vmem:[#allocation3 + $0xb0] sm:$0xff] %v1760
    %1826 = vst [vmem:[#allocation3 + $0xb8] sm:$0xff] %v1801
    %s1827 = scalar_lea.vmem %s5, 1
    %v1828 = vld [vmem:[%s1827] sm:$0x1]
    %v1830 = vperm.slane %v1828, 0
    %s1832 = scalar_lea.vmem %s1, 8
    %v1833 = vld [vmem:[%s1832] sm:$0xff]
    %v1834 = vld [vmem:[#allocation3] sm:$0xff]
    %v1835 = vld [vmem:[#allocation3 + $0x8] sm:$0xff]
    %v1836 = vld [vmem:[#allocation3 + $0x10] sm:$0xff]
    %s1837 = scalar_lea.vmem [#allocation6], 384
    %v1838 = vld [vmem:[%s1837] sm:$0xff]
    %v1839 = vld [vmem:[%s1837 + $0x8] sm:$0xff]
    %v1840 = vld [vmem:[%s1837 + $0x10] sm:$0xff]
    %v1841 = vld [vmem:[%s1837 + $0x18] sm:$0xff]
    %v1842 = vld [vmem:[%s1837 + $0x20] sm:$0xff]
    %v1843 = vld [vmem:[%s1837 + $0x28] sm:$0xff]
    %v1844 = vld [vmem:[%s1837 + $0x30] sm:$0xff]
    %v1845 = vld [vmem:[%s1837 + $0x38] sm:$0xff]
    %v1846 = vld [vmem:[%s1837 + $0x40] sm:$0xff]
    %v1847 = vld [vmem:[%s1837 + $0x48] sm:$0xff]
    %v1848 = vld [vmem:[%s1837 + $0x50] sm:$0xff]
    %v1849 = vld [vmem:[%s1837 + $0x58] sm:$0xff]
    %v1850 = vld [vmem:[%s1837 + $0x60] sm:$0xff]
    %v1851 = vld [vmem:[%s1837 + $0x68] sm:$0xff]
    %v1852 = vld [vmem:[%s1837 + $0x70] sm:$0xff]
    %v1853 = vld [vmem:[%s1837 + $0x78] sm:$0xff]
    %v1854 = vld [vmem:[%s1837 + $0x80] sm:$0xff]
    %v1855 = vld [vmem:[%s1837 + $0x88] sm:$0xff]
    %v1856 = vld [vmem:[%s1837 + $0x90] sm:$0xff]
    %v1857 = vld [vmem:[%s1837 + $0x98] sm:$0xff]
    %v1858 = vld [vmem:[%s1837 + $0xa0] sm:$0xff]
    %v1859 = vld [vmem:[%s1837 + $0xa8] sm:$0xff]
    %v1860 = vld [vmem:[%s1837 + $0xb0] sm:$0xff]
    %v1861 = vld [vmem:[%s1837 + $0xb8] sm:$0xff]
    %v1862 = vld [vmem:[%s1837 + $0xc0] sm:$0xff]
    %v1863 = vld [vmem:[%s1837 + $0xc8] sm:$0xff]
    %v1864 = vld [vmem:[%s1837 + $0xd0] sm:$0xff]
    %v1865 = vld [vmem:[%s1837 + $0xd8] sm:$0xff]
    %v1866 = vld [vmem:[%s1837 + $0xe0] sm:$0xff]
    %v1867 = vld [vmem:[%s1837 + $0xe8] sm:$0xff]
    %v1868 = vld [vmem:[%s1837 + $0xf0] sm:$0xff]
    %v1869 = vld [vmem:[%s1837 + $0xf8] sm:$0xff]
    %v1870 = vld [vmem:[%s1837 + $0x100] sm:$0xff]
    %v1871 = vld [vmem:[%s1837 + $0x108] sm:$0xff]
    %v1872 = vld [vmem:[%s1837 + $0x110] sm:$0xff]
    %v1873 = vld [vmem:[%s1837 + $0x118] sm:$0xff]
    %v1874 = vld [vmem:[%s1837 + $0x120] sm:$0xff]
    %v1875 = vld [vmem:[%s1837 + $0x128] sm:$0xff]
    %v1876 = vld [vmem:[%s1837 + $0x130] sm:$0xff]
    %v1877 = vld [vmem:[%s1837 + $0x138] sm:$0xff]
    %v1878 = vld [vmem:[%s1837 + $0x140] sm:$0xff]
    %v1879 = vld [vmem:[%s1837 + $0x148] sm:$0xff]
    %v1880 = vld [vmem:[%s1837 + $0x150] sm:$0xff]
    %v1881 = vld [vmem:[%s1837 + $0x158] sm:$0xff]
    %v1882 = vld [vmem:[%s1837 + $0x160] sm:$0xff]
    %v1883 = vld [vmem:[%s1837 + $0x168] sm:$0xff]
    %v1884 = vld [vmem:[%s1837 + $0x170] sm:$0xff]
    %v1885 = vld [vmem:[%s1837 + $0x178] sm:$0xff]
    %1886 = vmatpush.msra.mxu0 %v1883
    %1887 = vmatpush.msra.mxu0 %v1880
    %1888 = vmatpush.msra.mxu0 %v1877
    %1889 = vmatpush.msra.mxu0 %v1874
    %1890 = vmatpush.msra.mxu0 %v1871
    %1891 = vmatpush.msra.mxu0 %v1868
    %1892 = vmatpush.msra.mxu0 %v1865
    %1893 = vmatpush.msra.mxu0 %v1862
    %1894 = vmatpush.msra.mxu0 %v1859
    %1895 = vmatpush.msra.mxu0 %v1856
    %1896 = vmatpush.msra.mxu0 %v1853
    %1897 = vmatpush.msra.mxu0 %v1850
    %1898 = vmatpush.msra.mxu0 %v1847
    %1899 = vmatpush.msra.mxu0 %v1844
    %1900 = vmatpush.msra.mxu0 %v1841
    %1901 = vmatpush.msra.mxu0 %v1838
    %1902 = vmatmul.f32.gmra.mxu0 %v1833
    %v1903 = vpop.f32.mrf.mxu0
    %v1904 = vadd.f32 0.0, %v1903
    %1905 = vdwg.mxu0
    %1906 = vmatpush.msra.mxu0 %v1884
    %1907 = vmatpush.msra.mxu0 %v1881
    %1908 = vmatpush.msra.mxu0 %v1878
    %1909 = vmatpush.msra.mxu0 %v1875
    %1910 = vmatpush.msra.mxu0 %v1872
    %1911 = vmatpush.msra.mxu0 %v1869
    %1912 = vmatpush.msra.mxu0 %v1866
    %1913 = vmatpush.msra.mxu0 %v1863
    %1914 = vmatpush.msra.mxu0 %v1860
    %1915 = vmatpush.msra.mxu0 %v1857
    %1916 = vmatpush.msra.mxu0 %v1854
    %1917 = vmatpush.msra.mxu0 %v1851
    %1918 = vmatpush.msra.mxu0 %v1848
    %1919 = vmatpush.msra.mxu0 %v1845
    %1920 = vmatpush.msra.mxu0 %v1842
    %1921 = vmatpush.msra.mxu0 %v1839
    %1922 = vmatmul.f32.gmra.mxu0 %v1833
    %v1923 = vpop.f32.mrf.mxu0
    %v1924 = vadd.f32 0.0, %v1923
    %1925 = vdwg.mxu0
    %1926 = vmatpush.msra.mxu0 %v1885
    %1927 = vmatpush.msra.mxu0 %v1882
    %1928 = vmatpush.msra.mxu0 %v1879
    %1929 = vmatpush.msra.mxu0 %v1876
    %1930 = vmatpush.msra.mxu0 %v1873
    %1931 = vmatpush.msra.mxu0 %v1870
    %1932 = vmatpush.msra.mxu0 %v1867
    %1933 = vmatpush.msra.mxu0 %v1864
    %1934 = vmatpush.msra.mxu0 %v1861
    %1935 = vmatpush.msra.mxu0 %v1858
    %1936 = vmatpush.msra.mxu0 %v1855
    %1937 = vmatpush.msra.mxu0 %v1852
    %1938 = vmatpush.msra.mxu0 %v1849
    %1939 = vmatpush.msra.mxu0 %v1846
    %1940 = vmatpush.msra.mxu0 %v1843
    %1941 = vmatpush.msra.mxu0 %v1840
    %1942 = vmatmul.f32.gmra.mxu0 %v1833
    %v1943 = vpop.f32.mrf.mxu0
    %v1944 = vadd.f32 0.0, %v1943
    %1945 = vdwg.mxu0
    %v1946 = vadd.f32 %v1834, %v1904
    %v1947 = vadd.f32 %v1835, %v1924
    %v1948 = vxor.u32 %v1946, 2147483648
    %v1949 = vxor.u32 %v1947, 2147483648
    %v1950 = vmul.f32 %v1948, 1.442695
    %v1951 = vpow.pop %v1950
    %v1952 = vmul.f32 %v1949, 1.442695
    %v1953 = vpow.pop %v1952
    %v1954 = vadd.f32 %v1951, 1.0
    %v1955 = vadd.f32 %v1953, 1.0
    %v1956 = vrcp.pop %v1954
    %v1957 = vmul.f32 %v1954, %v1956
    %v1958 = vsub.f32 1.0, %v1957
    %v1959 = vmul.f32 %v1956, %v1958
    %v1960 = vadd.f32 %v1956, %v1959
    %vm1961 = vweird.f32 %v1954
    %vm1962 = vweird.f32 %v1956
    %vm1963 = vmor %vm1961, %vm1962
    %v1964 = vsel %vm1963, %v1956, %v1960
    %v1965 = vand.u32 2147483647, %v1954
    %vm1966 = vcmp.eq.f32.partialorder %v1965, 8.507059e+37
    %v1967 = vand.u32 %v1954, 2147483648
    %v1968 = vor.u32 1.1754944e-38, %v1967
    %v1969 = vsel %vm1966, %v1968, %v1964
    %v1970 = vmul.f32 1.0, %v1969
    %v1971 = vrcp.pop %v1955
    %v1972 = vmul.f32 %v1955, %v1971
    %v1973 = vsub.f32 1.0, %v1972
    %v1974 = vmul.f32 %v1971, %v1973
    %v1975 = vadd.f32 %v1971, %v1974
    %vm1976 = vweird.f32 %v1955
    %vm1977 = vweird.f32 %v1971
    %vm1978 = vmor %vm1976, %vm1977
    %v1979 = vsel %vm1978, %v1971, %v1975
    %v1980 = vand.u32 2147483647, %v1955
    %vm1981 = vcmp.eq.f32.partialorder %v1980, 8.507059e+37
    %v1982 = vand.u32 %v1955, 2147483648
    %v1983 = vor.u32 1.1754944e-38, %v1982
    %v1984 = vsel %vm1981, %v1983, %v1979
    %v1985 = vmul.f32 1.0, %v1984
    %v1986 = vadd.f32 %v1944, %v1830
    %v1987 = vmul.f32 %v1970, %v1986
    %v1988 = vadd.f32 %v1836, %v1987
    %v1989 = vtanh.pop %v1988
    %v1990 = vsub.f32 1.0, %v1985
    %v1991 = vmul.f32 %v1990, %v1989
    %v1992 = vmul.f32 %v1985, %v1833
    %v1993 = vadd.f32 %v1991, %v1992
    %v1994 = vld [vmem:[%s479] sm:$0xff]
    %v1995 = vld [vmem:[%s479 + $0x8] sm:$0xff]
    %v1996 = vld [vmem:[%s479 + $0x10] sm:$0xff]
    %1997 = vmatpush.msra.mxu0 %v1883
    %1998 = vmatpush.msra.mxu0 %v1880
    %1999 = vmatpush.msra.mxu0 %v1877
    %2000 = vmatpush.msra.mxu0 %v1874
    %2001 = vmatpush.msra.mxu0 %v1871
    %2002 = vmatpush.msra.mxu0 %v1868
    %2003 = vmatpush.msra.mxu0 %v1865
    %2004 = vmatpush.msra.mxu0 %v1862
    %2005 = vmatpush.msra.mxu0 %v1859
    %2006 = vmatpush.msra.mxu0 %v1856
    %2007 = vmatpush.msra.mxu0 %v1853
    %2008 = vmatpush.msra.mxu0 %v1850
    %2009 = vmatpush.msra.mxu0 %v1847
    %2010 = vmatpush.msra.mxu0 %v1844
    %2011 = vmatpush.msra.mxu0 %v1841
    %2012 = vmatpush.msra.mxu0 %v1838
    %2013 = vmatmul.f32.gmra.mxu0 %v1993
    %v2014 = vpop.f32.mrf.mxu0
    %v2015 = vadd.f32 0.0, %v2014
    %2016 = vdwg.mxu0
    %2017 = vmatpush.msra.mxu0 %v1884
    %2018 = vmatpush.msra.mxu0 %v1881
    %2019 = vmatpush.msra.mxu0 %v1878
    %2020 = vmatpush.msra.mxu0 %v1875
    %2021 = vmatpush.msra.mxu0 %v1872
    %2022 = vmatpush.msra.mxu0 %v1869
    %2023 = vmatpush.msra.mxu0 %v1866
    %2024 = vmatpush.msra.mxu0 %v1863
    %2025 = vmatpush.msra.mxu0 %v1860
    %2026 = vmatpush.msra.mxu0 %v1857
    %2027 = vmatpush.msra.mxu0 %v1854
    %2028 = vmatpush.msra.mxu0 %v1851
    %2029 = vmatpush.msra.mxu0 %v1848
    %2030 = vmatpush.msra.mxu0 %v1845
    %2031 = vmatpush.msra.mxu0 %v1842
    %2032 = vmatpush.msra.mxu0 %v1839
    %2033 = vmatmul.f32.gmra.mxu0 %v1993
    %v2034 = vpop.f32.mrf.mxu0
    %v2035 = vadd.f32 0.0, %v2034
    %2036 = vdwg.mxu0
    %2037 = vmatpush.msra.mxu0 %v1885
    %2038 = vmatpush.msra.mxu0 %v1882
    %2039 = vmatpush.msra.mxu0 %v1879
    %2040 = vmatpush.msra.mxu0 %v1876
    %2041 = vmatpush.msra.mxu0 %v1873
    %2042 = vmatpush.msra.mxu0 %v1870
    %2043 = vmatpush.msra.mxu0 %v1867
    %2044 = vmatpush.msra.mxu0 %v1864
    %2045 = vmatpush.msra.mxu0 %v1861
    %2046 = vmatpush.msra.mxu0 %v1858
    %2047 = vmatpush.msra.mxu0 %v1855
    %2048 = vmatpush.msra.mxu0 %v1852
    %2049 = vmatpush.msra.mxu0 %v1849
    %2050 = vmatpush.msra.mxu0 %v1846
    %2051 = vmatpush.msra.mxu0 %v1843
    %2052 = vmatpush.msra.mxu0 %v1840
    %2053 = vmatmul.f32.gmra.mxu0 %v1993
    %v2054 = vpop.f32.mrf.mxu0
    %v2055 = vadd.f32 0.0, %v2054
    %2056 = vdwg.mxu0
    %v2057 = vadd.f32 %v1994, %v2015
    %v2058 = vadd.f32 %v1995, %v2035
    %v2059 = vxor.u32 %v2057, 2147483648
    %v2060 = vxor.u32 %v2058, 2147483648
    %v2061 = vmul.f32 %v2059, 1.442695
    %v2062 = vpow.pop %v2061
    %v2063 = vmul.f32 %v2060, 1.442695
    %v2064 = vpow.pop %v2063
    %v2065 = vadd.f32 %v2062, 1.0
    %v2066 = vadd.f32 %v2064, 1.0
    %v2067 = vrcp.pop %v2065
    %v2068 = vmul.f32 %v2065, %v2067
    %v2069 = vsub.f32 1.0, %v2068
    %v2070 = vmul.f32 %v2067, %v2069
    %v2071 = vadd.f32 %v2067, %v2070
    %vm2072 = vweird.f32 %v2065
    %vm2073 = vweird.f32 %v2067
    %vm2074 = vmor %vm2072, %vm2073
    %v2075 = vsel %vm2074, %v2067, %v2071
    %v2076 = vand.u32 2147483647, %v2065
    %vm2077 = vcmp.eq.f32.partialorder %v2076, 8.507059e+37
    %v2078 = vand.u32 %v2065, 2147483648
    %v2079 = vor.u32 1.1754944e-38, %v2078
    %v2080 = vsel %vm2077, %v2079, %v2075
    %v2081 = vmul.f32 1.0, %v2080
    %v2082 = vrcp.pop %v2066
    %v2083 = vmul.f32 %v2066, %v2082
    %v2084 = vsub.f32 1.0, %v2083
    %v2085 = vmul.f32 %v2082, %v2084
    %v2086 = vadd.f32 %v2082, %v2085
    %vm2087 = vweird.f32 %v2066
    %vm2088 = vweird.f32 %v2082
    %vm2089 = vmor %vm2087, %vm2088
    %v2090 = vsel %vm2089, %v2082, %v2086
    %v2091 = vand.u32 2147483647, %v2066
    %vm2092 = vcmp.eq.f32.partialorder %v2091, 8.507059e+37
    %v2093 = vand.u32 %v2066, 2147483648
    %v2094 = vor.u32 1.1754944e-38, %v2093
    %v2095 = vsel %vm2092, %v2094, %v2090
    %v2096 = vmul.f32 1.0, %v2095
    %v2097 = vadd.f32 %v2055, %v1830
    %v2098 = vmul.f32 %v2081, %v2097
    %v2099 = vadd.f32 %v1996, %v2098
    %v2100 = vtanh.pop %v2099
    %v2101 = vsub.f32 1.0, %v2096
    %v2102 = vmul.f32 %v2101, %v2100
    %v2103 = vmul.f32 %v2096, %v1993
    %v2104 = vadd.f32 %v2102, %v2103
    %v2105 = vld [vmem:[%s641] sm:$0xff]
    %v2106 = vld [vmem:[%s641 + $0x8] sm:$0xff]
    %v2107 = vld [vmem:[%s641 + $0x10] sm:$0xff]
    %2108 = vmatpush.msra.mxu0 %v1883
    %2109 = vmatpush.msra.mxu0 %v1880
    %2110 = vmatpush.msra.mxu0 %v1877
    %2111 = vmatpush.msra.mxu0 %v1874
    %2112 = vmatpush.msra.mxu0 %v1871
    %2113 = vmatpush.msra.mxu0 %v1868
    %2114 = vmatpush.msra.mxu0 %v1865
    %2115 = vmatpush.msra.mxu0 %v1862
    %2116 = vmatpush.msra.mxu0 %v1859
    %2117 = vmatpush.msra.mxu0 %v1856
    %2118 = vmatpush.msra.mxu0 %v1853
    %2119 = vmatpush.msra.mxu0 %v1850
    %2120 = vmatpush.msra.mxu0 %v1847
    %2121 = vmatpush.msra.mxu0 %v1844
    %2122 = vmatpush.msra.mxu0 %v1841
    %2123 = vmatpush.msra.mxu0 %v1838
    %2124 = vmatmul.f32.gmra.mxu0 %v2104
    %v2125 = vpop.f32.mrf.mxu0
    %v2126 = vadd.f32 0.0, %v2125
    %2127 = vdwg.mxu0
    %2128 = vmatpush.msra.mxu0 %v1884
    %2129 = vmatpush.msra.mxu0 %v1881
    %2130 = vmatpush.msra.mxu0 %v1878
    %2131 = vmatpush.msra.mxu0 %v1875
    %2132 = vmatpush.msra.mxu0 %v1872
    %2133 = vmatpush.msra.mxu0 %v1869
    %2134 = vmatpush.msra.mxu0 %v1866
    %2135 = vmatpush.msra.mxu0 %v1863
    %2136 = vmatpush.msra.mxu0 %v1860
    %2137 = vmatpush.msra.mxu0 %v1857
    %2138 = vmatpush.msra.mxu0 %v1854
    %2139 = vmatpush.msra.mxu0 %v1851
    %2140 = vmatpush.msra.mxu0 %v1848
    %2141 = vmatpush.msra.mxu0 %v1845
    %2142 = vmatpush.msra.mxu0 %v1842
    %2143 = vmatpush.msra.mxu0 %v1839
    %2144 = vmatmul.f32.gmra.mxu0 %v2104
    %v2145 = vpop.f32.mrf.mxu0
    %v2146 = vadd.f32 0.0, %v2145
    %2147 = vdwg.mxu0
    %2148 = vmatpush.msra.mxu0 %v1885
    %2149 = vmatpush.msra.mxu0 %v1882
    %2150 = vmatpush.msra.mxu0 %v1879
    %2151 = vmatpush.msra.mxu0 %v1876
    %2152 = vmatpush.msra.mxu0 %v1873
    %2153 = vmatpush.msra.mxu0 %v1870
    %2154 = vmatpush.msra.mxu0 %v1867
    %2155 = vmatpush.msra.mxu0 %v1864
    %2156 = vmatpush.msra.mxu0 %v1861
    %2157 = vmatpush.msra.mxu0 %v1858
    %2158 = vmatpush.msra.mxu0 %v1855
    %2159 = vmatpush.msra.mxu0 %v1852
    %2160 = vmatpush.msra.mxu0 %v1849
    %2161 = vmatpush.msra.mxu0 %v1846
    %2162 = vmatpush.msra.mxu0 %v1843
    %2163 = vmatpush.msra.mxu0 %v1840
    %2164 = vmatmul.f32.gmra.mxu0 %v2104
    %v2165 = vpop.f32.mrf.mxu0
    %v2166 = vadd.f32 0.0, %v2165
    %2167 = vdwg.mxu0
    %v2168 = vadd.f32 %v2105, %v2126
    %v2169 = vadd.f32 %v2106, %v2146
    %v2170 = vxor.u32 %v2168, 2147483648
    %v2171 = vxor.u32 %v2169, 2147483648
    %v2172 = vmul.f32 %v2170, 1.442695
    %v2173 = vpow.pop %v2172
    %v2174 = vmul.f32 %v2171, 1.442695
    %v2175 = vpow.pop %v2174
    %v2176 = vadd.f32 %v2173, 1.0
    %v2177 = vadd.f32 %v2175, 1.0
    %v2178 = vrcp.pop %v2176
    %v2179 = vmul.f32 %v2176, %v2178
    %v2180 = vsub.f32 1.0, %v2179
    %v2181 = vmul.f32 %v2178, %v2180
    %v2182 = vadd.f32 %v2178, %v2181
    %vm2183 = vweird.f32 %v2176
    %vm2184 = vweird.f32 %v2178
    %vm2185 = vmor %vm2183, %vm2184
    %v2186 = vsel %vm2185, %v2178, %v2182
    %v2187 = vand.u32 2147483647, %v2176
    %vm2188 = vcmp.eq.f32.partialorder %v2187, 8.507059e+37
    %v2189 = vand.u32 %v2176, 2147483648
    %v2190 = vor.u32 1.1754944e-38, %v2189
    %v2191 = vsel %vm2188, %v2190, %v2186
    %v2192 = vmul.f32 1.0, %v2191
    %v2193 = vrcp.pop %v2177
    %v2194 = vmul.f32 %v2177, %v2193
    %v2195 = vsub.f32 1.0, %v2194
    %v2196 = vmul.f32 %v2193, %v2195
    %v2197 = vadd.f32 %v2193, %v2196
    %vm2198 = vweird.f32 %v2177
    %vm2199 = vweird.f32 %v2193
    %vm2200 = vmor %vm2198, %vm2199
    %v2201 = vsel %vm2200, %v2193, %v2197
    %v2202 = vand.u32 2147483647, %v2177
    %vm2203 = vcmp.eq.f32.partialorder %v2202, 8.507059e+37
    %v2204 = vand.u32 %v2177, 2147483648
    %v2205 = vor.u32 1.1754944e-38, %v2204
    %v2206 = vsel %vm2203, %v2205, %v2201
    %v2207 = vmul.f32 1.0, %v2206
    %v2208 = vadd.f32 %v2166, %v1830
    %v2209 = vmul.f32 %v2192, %v2208
    %v2210 = vadd.f32 %v2107, %v2209
    %v2211 = vtanh.pop %v2210
    %v2212 = vsub.f32 1.0, %v2207
    %v2213 = vmul.f32 %v2212, %v2211
    %v2214 = vmul.f32 %v2207, %v2104
    %v2215 = vadd.f32 %v2213, %v2214
    %v2216 = vld [vmem:[%s803] sm:$0xff]
    %v2217 = vld [vmem:[%s803 + $0x8] sm:$0xff]
    %v2218 = vld [vmem:[%s803 + $0x10] sm:$0xff]
    %2219 = vmatpush.msra.mxu0 %v1883
    %2220 = vmatpush.msra.mxu0 %v1880
    %2221 = vmatpush.msra.mxu0 %v1877
    %2222 = vmatpush.msra.mxu0 %v1874
    %2223 = vmatpush.msra.mxu0 %v1871
    %2224 = vmatpush.msra.mxu0 %v1868
    %2225 = vmatpush.msra.mxu0 %v1865
    %2226 = vmatpush.msra.mxu0 %v1862
    %2227 = vmatpush.msra.mxu0 %v1859
    %2228 = vmatpush.msra.mxu0 %v1856
    %2229 = vmatpush.msra.mxu0 %v1853
    %2230 = vmatpush.msra.mxu0 %v1850
    %2231 = vmatpush.msra.mxu0 %v1847
    %2232 = vmatpush.msra.mxu0 %v1844
    %2233 = vmatpush.msra.mxu0 %v1841
    %2234 = vmatpush.msra.mxu0 %v1838
    %2235 = vmatmul.f32.gmra.mxu0 %v2215
    %v2236 = vpop.f32.mrf.mxu0
    %v2237 = vadd.f32 0.0, %v2236
    %2238 = vdwg.mxu0
    %2239 = vmatpush.msra.mxu0 %v1884
    %2240 = vmatpush.msra.mxu0 %v1881
    %2241 = vmatpush.msra.mxu0 %v1878
    %2242 = vmatpush.msra.mxu0 %v1875
    %2243 = vmatpush.msra.mxu0 %v1872
    %2244 = vmatpush.msra.mxu0 %v1869
    %2245 = vmatpush.msra.mxu0 %v1866
    %2246 = vmatpush.msra.mxu0 %v1863
    %2247 = vmatpush.msra.mxu0 %v1860
    %2248 = vmatpush.msra.mxu0 %v1857
    %2249 = vmatpush.msra.mxu0 %v1854
    %2250 = vmatpush.msra.mxu0 %v1851
    %2251 = vmatpush.msra.mxu0 %v1848
    %2252 = vmatpush.msra.mxu0 %v1845
    %2253 = vmatpush.msra.mxu0 %v1842
    %2254 = vmatpush.msra.mxu0 %v1839
    %2255 = vmatmul.f32.gmra.mxu0 %v2215
    %v2256 = vpop.f32.mrf.mxu0
    %v2257 = vadd.f32 0.0, %v2256
    %2258 = vdwg.mxu0
    %2259 = vmatpush.msra.mxu0 %v1885
    %2260 = vmatpush.msra.mxu0 %v1882
    %2261 = vmatpush.msra.mxu0 %v1879
    %2262 = vmatpush.msra.mxu0 %v1876
    %2263 = vmatpush.msra.mxu0 %v1873
    %2264 = vmatpush.msra.mxu0 %v1870
    %2265 = vmatpush.msra.mxu0 %v1867
    %2266 = vmatpush.msra.mxu0 %v1864
    %2267 = vmatpush.msra.mxu0 %v1861
    %2268 = vmatpush.msra.mxu0 %v1858
    %2269 = vmatpush.msra.mxu0 %v1855
    %2270 = vmatpush.msra.mxu0 %v1852
    %2271 = vmatpush.msra.mxu0 %v1849
    %2272 = vmatpush.msra.mxu0 %v1846
    %2273 = vmatpush.msra.mxu0 %v1843
    %2274 = vmatpush.msra.mxu0 %v1840
    %2275 = vmatmul.f32.gmra.mxu0 %v2215
    %v2276 = vpop.f32.mrf.mxu0
    %v2277 = vadd.f32 0.0, %v2276
    %2278 = vdwg.mxu0
    %v2279 = vadd.f32 %v2216, %v2237
    %v2280 = vadd.f32 %v2217, %v2257
    %v2281 = vxor.u32 %v2279, 2147483648
    %v2282 = vxor.u32 %v2280, 2147483648
    %v2283 = vmul.f32 %v2281, 1.442695
    %v2284 = vpow.pop %v2283
    %v2285 = vmul.f32 %v2282, 1.442695
    %v2286 = vpow.pop %v2285
    %v2287 = vadd.f32 %v2284, 1.0
    %v2288 = vadd.f32 %v2286, 1.0
    %v2289 = vrcp.pop %v2287
    %v2290 = vmul.f32 %v2287, %v2289
    %v2291 = vsub.f32 1.0, %v2290
    %v2292 = vmul.f32 %v2289, %v2291
    %v2293 = vadd.f32 %v2289, %v2292
    %vm2294 = vweird.f32 %v2287
    %vm2295 = vweird.f32 %v2289
    %vm2296 = vmor %vm2294, %vm2295
    %v2297 = vsel %vm2296, %v2289, %v2293
    %v2298 = vand.u32 2147483647, %v2287
    %vm2299 = vcmp.eq.f32.partialorder %v2298, 8.507059e+37
    %v2300 = vand.u32 %v2287, 2147483648
    %v2301 = vor.u32 1.1754944e-38, %v2300
    %v2302 = vsel %vm2299, %v2301, %v2297
    %v2303 = vmul.f32 1.0, %v2302
    %v2304 = vrcp.pop %v2288
    %v2305 = vmul.f32 %v2288, %v2304
    %v2306 = vsub.f32 1.0, %v2305
    %v2307 = vmul.f32 %v2304, %v2306
    %v2308 = vadd.f32 %v2304, %v2307
    %vm2309 = vweird.f32 %v2288
    %vm2310 = vweird.f32 %v2304
    %vm2311 = vmor %vm2309, %vm2310
    %v2312 = vsel %vm2311, %v2304, %v2308
    %v2313 = vand.u32 2147483647, %v2288
    %vm2314 = vcmp.eq.f32.partialorder %v2313, 8.507059e+37
    %v2315 = vand.u32 %v2288, 2147483648
    %v2316 = vor.u32 1.1754944e-38, %v2315
    %v2317 = vsel %vm2314, %v2316, %v2312
    %v2318 = vmul.f32 1.0, %v2317
    %v2319 = vadd.f32 %v2277, %v1830
    %v2320 = vmul.f32 %v2303, %v2319
    %v2321 = vadd.f32 %v2218, %v2320
    %v2322 = vtanh.pop %v2321
    %v2323 = vsub.f32 1.0, %v2318
    %v2324 = vmul.f32 %v2323, %v2322
    %v2325 = vmul.f32 %v2318, %v2215
    %v2326 = vadd.f32 %v2324, %v2325
    %v2327 = vld [vmem:[%s965] sm:$0xff]
    %v2328 = vld [vmem:[%s965 + $0x8] sm:$0xff]
    %v2329 = vld [vmem:[%s965 + $0x10] sm:$0xff]
    %2330 = vmatpush.msra.mxu0 %v1883
    %2331 = vmatpush.msra.mxu0 %v1880
    %2332 = vmatpush.msra.mxu0 %v1877
    %2333 = vmatpush.msra.mxu0 %v1874
    %2334 = vmatpush.msra.mxu0 %v1871
    %2335 = vmatpush.msra.mxu0 %v1868
    %2336 = vmatpush.msra.mxu0 %v1865
    %2337 = vmatpush.msra.mxu0 %v1862
    %2338 = vmatpush.msra.mxu0 %v1859
    %2339 = vmatpush.msra.mxu0 %v1856
    %2340 = vmatpush.msra.mxu0 %v1853
    %2341 = vmatpush.msra.mxu0 %v1850
    %2342 = vmatpush.msra.mxu0 %v1847
    %2343 = vmatpush.msra.mxu0 %v1844
    %2344 = vmatpush.msra.mxu0 %v1841
    %2345 = vmatpush.msra.mxu0 %v1838
    %2346 = vmatmul.f32.gmra.mxu0 %v2326
    %v2347 = vpop.f32.mrf.mxu0
    %v2348 = vadd.f32 0.0, %v2347
    %2349 = vdwg.mxu0
    %2350 = vmatpush.msra.mxu0 %v1884
    %2351 = vmatpush.msra.mxu0 %v1881
    %2352 = vmatpush.msra.mxu0 %v1878
    %2353 = vmatpush.msra.mxu0 %v1875
    %2354 = vmatpush.msra.mxu0 %v1872
    %2355 = vmatpush.msra.mxu0 %v1869
    %2356 = vmatpush.msra.mxu0 %v1866
    %2357 = vmatpush.msra.mxu0 %v1863
    %2358 = vmatpush.msra.mxu0 %v1860
    %2359 = vmatpush.msra.mxu0 %v1857
    %2360 = vmatpush.msra.mxu0 %v1854
    %2361 = vmatpush.msra.mxu0 %v1851
    %2362 = vmatpush.msra.mxu0 %v1848
    %2363 = vmatpush.msra.mxu0 %v1845
    %2364 = vmatpush.msra.mxu0 %v1842
    %2365 = vmatpush.msra.mxu0 %v1839
    %2366 = vmatmul.f32.gmra.mxu0 %v2326
    %v2367 = vpop.f32.mrf.mxu0
    %v2368 = vadd.f32 0.0, %v2367
    %2369 = vdwg.mxu0
    %2370 = vmatpush.msra.mxu0 %v1885
    %2371 = vmatpush.msra.mxu0 %v1882
    %2372 = vmatpush.msra.mxu0 %v1879
    %2373 = vmatpush.msra.mxu0 %v1876
    %2374 = vmatpush.msra.mxu0 %v1873
    %2375 = vmatpush.msra.mxu0 %v1870
    %2376 = vmatpush.msra.mxu0 %v1867
    %2377 = vmatpush.msra.mxu0 %v1864
    %2378 = vmatpush.msra.mxu0 %v1861
    %2379 = vmatpush.msra.mxu0 %v1858
    %2380 = vmatpush.msra.mxu0 %v1855
    %2381 = vmatpush.msra.mxu0 %v1852
    %2382 = vmatpush.msra.mxu0 %v1849
    %2383 = vmatpush.msra.mxu0 %v1846
    %2384 = vmatpush.msra.mxu0 %v1843
    %2385 = vmatpush.msra.mxu0 %v1840
    %2386 = vmatmul.f32.gmra.mxu0 %v2326
    %v2387 = vpop.f32.mrf.mxu0
    %v2388 = vadd.f32 0.0, %v2387
    %2389 = vdwg.mxu0
    %v2390 = vadd.f32 %v2327, %v2348
    %v2391 = vadd.f32 %v2328, %v2368
    %v2392 = vxor.u32 %v2390, 2147483648
    %v2393 = vxor.u32 %v2391, 2147483648
    %v2394 = vmul.f32 %v2392, 1.442695
    %v2395 = vpow.pop %v2394
    %v2396 = vmul.f32 %v2393, 1.442695
    %v2397 = vpow.pop %v2396
    %v2398 = vadd.f32 %v2395, 1.0
    %v2399 = vadd.f32 %v2397, 1.0
    %v2400 = vrcp.pop %v2398
    %v2401 = vmul.f32 %v2398, %v2400
    %v2402 = vsub.f32 1.0, %v2401
    %v2403 = vmul.f32 %v2400, %v2402
    %v2404 = vadd.f32 %v2400, %v2403
    %vm2405 = vweird.f32 %v2398
    %vm2406 = vweird.f32 %v2400
    %vm2407 = vmor %vm2405, %vm2406
    %v2408 = vsel %vm2407, %v2400, %v2404
    %v2409 = vand.u32 2147483647, %v2398
    %vm2410 = vcmp.eq.f32.partialorder %v2409, 8.507059e+37
    %v2411 = vand.u32 %v2398, 2147483648
    %v2412 = vor.u32 1.1754944e-38, %v2411
    %v2413 = vsel %vm2410, %v2412, %v2408
    %v2414 = vmul.f32 1.0, %v2413
    %v2415 = vrcp.pop %v2399
    %v2416 = vmul.f32 %v2399, %v2415
    %v2417 = vsub.f32 1.0, %v2416
    %v2418 = vmul.f32 %v2415, %v2417
    %v2419 = vadd.f32 %v2415, %v2418
    %vm2420 = vweird.f32 %v2399
    %vm2421 = vweird.f32 %v2415
    %vm2422 = vmor %vm2420, %vm2421
    %v2423 = vsel %vm2422, %v2415, %v2419
    %v2424 = vand.u32 2147483647, %v2399
    %vm2425 = vcmp.eq.f32.partialorder %v2424, 8.507059e+37
    %v2426 = vand.u32 %v2399, 2147483648
    %v2427 = vor.u32 1.1754944e-38, %v2426
    %v2428 = vsel %vm2425, %v2427, %v2423
    %v2429 = vmul.f32 1.0, %v2428
    %v2430 = vadd.f32 %v2388, %v1830
    %v2431 = vmul.f32 %v2414, %v2430
    %v2432 = vadd.f32 %v2329, %v2431
    %v2433 = vtanh.pop %v2432
    %v2434 = vsub.f32 1.0, %v2429
    %v2435 = vmul.f32 %v2434, %v2433
    %v2436 = vmul.f32 %v2429, %v2326
    %v2437 = vadd.f32 %v2435, %v2436
    %v2438 = vld [vmem:[%s1127] sm:$0xff]
    %v2439 = vld [vmem:[%s1127 + $0x8] sm:$0xff]
    %v2440 = vld [vmem:[%s1127 + $0x10] sm:$0xff]
    %2441 = vmatpush.msra.mxu0 %v1883
    %2442 = vmatpush.msra.mxu0 %v1880
    %2443 = vmatpush.msra.mxu0 %v1877
    %2444 = vmatpush.msra.mxu0 %v1874
    %2445 = vmatpush.msra.mxu0 %v1871
    %2446 = vmatpush.msra.mxu0 %v1868
    %2447 = vmatpush.msra.mxu0 %v1865
    %2448 = vmatpush.msra.mxu0 %v1862
    %2449 = vmatpush.msra.mxu0 %v1859
    %2450 = vmatpush.msra.mxu0 %v1856
    %2451 = vmatpush.msra.mxu0 %v1853
    %2452 = vmatpush.msra.mxu0 %v1850
    %2453 = vmatpush.msra.mxu0 %v1847
    %2454 = vmatpush.msra.mxu0 %v1844
    %2455 = vmatpush.msra.mxu0 %v1841
    %2456 = vmatpush.msra.mxu0 %v1838
    %2457 = vmatmul.f32.gmra.mxu0 %v2437
    %v2458 = vpop.f32.mrf.mxu0
    %v2459 = vadd.f32 0.0, %v2458
    %2460 = vdwg.mxu0
    %2461 = vmatpush.msra.mxu0 %v1884
    %2462 = vmatpush.msra.mxu0 %v1881
    %2463 = vmatpush.msra.mxu0 %v1878
    %2464 = vmatpush.msra.mxu0 %v1875
    %2465 = vmatpush.msra.mxu0 %v1872
    %2466 = vmatpush.msra.mxu0 %v1869
    %2467 = vmatpush.msra.mxu0 %v1866
    %2468 = vmatpush.msra.mxu0 %v1863
    %2469 = vmatpush.msra.mxu0 %v1860
    %2470 = vmatpush.msra.mxu0 %v1857
    %2471 = vmatpush.msra.mxu0 %v1854
    %2472 = vmatpush.msra.mxu0 %v1851
    %2473 = vmatpush.msra.mxu0 %v1848
    %2474 = vmatpush.msra.mxu0 %v1845
    %2475 = vmatpush.msra.mxu0 %v1842
    %2476 = vmatpush.msra.mxu0 %v1839
    %2477 = vmatmul.f32.gmra.mxu0 %v2437
    %v2478 = vpop.f32.mrf.mxu0
    %v2479 = vadd.f32 0.0, %v2478
    %2480 = vdwg.mxu0
    %2481 = vmatpush.msra.mxu0 %v1885
    %2482 = vmatpush.msra.mxu0 %v1882
    %2483 = vmatpush.msra.mxu0 %v1879
    %2484 = vmatpush.msra.mxu0 %v1876
    %2485 = vmatpush.msra.mxu0 %v1873
    %2486 = vmatpush.msra.mxu0 %v1870
    %2487 = vmatpush.msra.mxu0 %v1867
    %2488 = vmatpush.msra.mxu0 %v1864
    %2489 = vmatpush.msra.mxu0 %v1861
    %2490 = vmatpush.msra.mxu0 %v1858
    %2491 = vmatpush.msra.mxu0 %v1855
    %2492 = vmatpush.msra.mxu0 %v1852
    %2493 = vmatpush.msra.mxu0 %v1849
    %2494 = vmatpush.msra.mxu0 %v1846
    %2495 = vmatpush.msra.mxu0 %v1843
    %2496 = vmatpush.msra.mxu0 %v1840
    %2497 = vmatmul.f32.gmra.mxu0 %v2437
    %v2498 = vpop.f32.mrf.mxu0
    %v2499 = vadd.f32 0.0, %v2498
    %2500 = vdwg.mxu0
    %v2501 = vadd.f32 %v2438, %v2459
    %v2502 = vadd.f32 %v2439, %v2479
    %v2503 = vxor.u32 %v2501, 2147483648
    %v2504 = vxor.u32 %v2502, 2147483648
    %v2505 = vmul.f32 %v2503, 1.442695
    %v2506 = vpow.pop %v2505
    %v2507 = vmul.f32 %v2504, 1.442695
    %v2508 = vpow.pop %v2507
    %v2509 = vadd.f32 %v2506, 1.0
    %v2510 = vadd.f32 %v2508, 1.0
    %v2511 = vrcp.pop %v2509
    %v2512 = vmul.f32 %v2509, %v2511
    %v2513 = vsub.f32 1.0, %v2512
    %v2514 = vmul.f32 %v2511, %v2513
    %v2515 = vadd.f32 %v2511, %v2514
    %vm2516 = vweird.f32 %v2509
    %vm2517 = vweird.f32 %v2511
    %vm2518 = vmor %vm2516, %vm2517
    %v2519 = vsel %vm2518, %v2511, %v2515
    %v2520 = vand.u32 2147483647, %v2509
    %vm2521 = vcmp.eq.f32.partialorder %v2520, 8.507059e+37
    %v2522 = vand.u32 %v2509, 2147483648
    %v2523 = vor.u32 1.1754944e-38, %v2522
    %v2524 = vsel %vm2521, %v2523, %v2519
    %v2525 = vmul.f32 1.0, %v2524
    %v2526 = vrcp.pop %v2510
    %v2527 = vmul.f32 %v2510, %v2526
    %v2528 = vsub.f32 1.0, %v2527
    %v2529 = vmul.f32 %v2526, %v2528
    %v2530 = vadd.f32 %v2526, %v2529
    %vm2531 = vweird.f32 %v2510
    %vm2532 = vweird.f32 %v2526
    %vm2533 = vmor %vm2531, %vm2532
    %v2534 = vsel %vm2533, %v2526, %v2530
    %v2535 = vand.u32 2147483647, %v2510
    %vm2536 = vcmp.eq.f32.partialorder %v2535, 8.507059e+37
    %v2537 = vand.u32 %v2510, 2147483648
    %v2538 = vor.u32 1.1754944e-38, %v2537
    %v2539 = vsel %vm2536, %v2538, %v2534
    %v2540 = vmul.f32 1.0, %v2539
    %v2541 = vadd.f32 %v2499, %v1830
    %v2542 = vmul.f32 %v2525, %v2541
    %v2543 = vadd.f32 %v2440, %v2542
    %v2544 = vtanh.pop %v2543
    %v2545 = vsub.f32 1.0, %v2540
    %v2546 = vmul.f32 %v2545, %v2544
    %v2547 = vmul.f32 %v2540, %v2437
    %v2548 = vadd.f32 %v2546, %v2547
    %v2549 = vld [vmem:[%s1289] sm:$0xff]
    %v2550 = vld [vmem:[%s1289 + $0x8] sm:$0xff]
    %v2551 = vld [vmem:[%s1289 + $0x10] sm:$0xff]
    %2552 = vmatpush.msra.mxu0 %v1883
    %2553 = vmatpush.msra.mxu0 %v1880
    %2554 = vmatpush.msra.mxu0 %v1877
    %2555 = vmatpush.msra.mxu0 %v1874
    %2556 = vmatpush.msra.mxu0 %v1871
    %2557 = vmatpush.msra.mxu0 %v1868
    %2558 = vmatpush.msra.mxu0 %v1865
    %2559 = vmatpush.msra.mxu0 %v1862
    %2560 = vmatpush.msra.mxu0 %v1859
    %2561 = vmatpush.msra.mxu0 %v1856
    %2562 = vmatpush.msra.mxu0 %v1853
    %2563 = vmatpush.msra.mxu0 %v1850
    %2564 = vmatpush.msra.mxu0 %v1847
    %2565 = vmatpush.msra.mxu0 %v1844
    %2566 = vmatpush.msra.mxu0 %v1841
    %2567 = vmatpush.msra.mxu0 %v1838
    %2568 = vmatmul.f32.gmra.mxu0 %v2548
    %v2569 = vpop.f32.mrf.mxu0
    %v2570 = vadd.f32 0.0, %v2569
    %2571 = vdwg.mxu0
    %2572 = vmatpush.msra.mxu0 %v1884
    %2573 = vmatpush.msra.mxu0 %v1881
    %2574 = vmatpush.msra.mxu0 %v1878
    %2575 = vmatpush.msra.mxu0 %v1875
    %2576 = vmatpush.msra.mxu0 %v1872
    %2577 = vmatpush.msra.mxu0 %v1869
    %2578 = vmatpush.msra.mxu0 %v1866
    %2579 = vmatpush.msra.mxu0 %v1863
    %2580 = vmatpush.msra.mxu0 %v1860
    %2581 = vmatpush.msra.mxu0 %v1857
    %2582 = vmatpush.msra.mxu0 %v1854
    %2583 = vmatpush.msra.mxu0 %v1851
    %2584 = vmatpush.msra.mxu0 %v1848
    %2585 = vmatpush.msra.mxu0 %v1845
    %2586 = vmatpush.msra.mxu0 %v1842
    %2587 = vmatpush.msra.mxu0 %v1839
    %2588 = vmatmul.f32.gmra.mxu0 %v2548
    %v2589 = vpop.f32.mrf.mxu0
    %v2590 = vadd.f32 0.0, %v2589
    %2591 = vdwg.mxu0
    %2592 = vmatpush.msra.mxu0 %v1885
    %2593 = vmatpush.msra.mxu0 %v1882
    %2594 = vmatpush.msra.mxu0 %v1879
    %2595 = vmatpush.msra.mxu0 %v1876
    %2596 = vmatpush.msra.mxu0 %v1873
    %2597 = vmatpush.msra.mxu0 %v1870
    %2598 = vmatpush.msra.mxu0 %v1867
    %2599 = vmatpush.msra.mxu0 %v1864
    %2600 = vmatpush.msra.mxu0 %v1861
    %2601 = vmatpush.msra.mxu0 %v1858
    %2602 = vmatpush.msra.mxu0 %v1855
    %2603 = vmatpush.msra.mxu0 %v1852
    %2604 = vmatpush.msra.mxu0 %v1849
    %2605 = vmatpush.msra.mxu0 %v1846
    %2606 = vmatpush.msra.mxu0 %v1843
    %2607 = vmatpush.msra.mxu0 %v1840
    %2608 = vmatmul.f32.gmra.mxu0 %v2548
    %v2609 = vpop.f32.mrf.mxu0
    %v2610 = vadd.f32 0.0, %v2609
    %2611 = vdwg.mxu0
    %v2612 = vadd.f32 %v2549, %v2570
    %v2613 = vadd.f32 %v2550, %v2590
    %v2614 = vxor.u32 %v2612, 2147483648
    %v2615 = vxor.u32 %v2613, 2147483648
    %v2616 = vmul.f32 %v2614, 1.442695
    %v2617 = vpow.pop %v2616
    %v2618 = vmul.f32 %v2615, 1.442695
    %v2619 = vpow.pop %v2618
    %v2620 = vadd.f32 %v2617, 1.0
    %v2621 = vadd.f32 %v2619, 1.0
    %v2622 = vrcp.pop %v2620
    %v2623 = vmul.f32 %v2620, %v2622
    %v2624 = vsub.f32 1.0, %v2623
    %v2625 = vmul.f32 %v2622, %v2624
    %v2626 = vadd.f32 %v2622, %v2625
    %vm2627 = vweird.f32 %v2620
    %vm2628 = vweird.f32 %v2622
    %vm2629 = vmor %vm2627, %vm2628
    %v2630 = vsel %vm2629, %v2622, %v2626
    %v2631 = vand.u32 2147483647, %v2620
    %vm2632 = vcmp.eq.f32.partialorder %v2631, 8.507059e+37
    %v2633 = vand.u32 %v2620, 2147483648
    %v2634 = vor.u32 1.1754944e-38, %v2633
    %v2635 = vsel %vm2632, %v2634, %v2630
    %v2636 = vmul.f32 1.0, %v2635
    %v2637 = vrcp.pop %v2621
    %v2638 = vmul.f32 %v2621, %v2637
    %v2639 = vsub.f32 1.0, %v2638
    %v2640 = vmul.f32 %v2637, %v2639
    %v2641 = vadd.f32 %v2637, %v2640
    %vm2642 = vweird.f32 %v2621
    %vm2643 = vweird.f32 %v2637
    %vm2644 = vmor %vm2642, %vm2643
    %v2645 = vsel %vm2644, %v2637, %v2641
    %v2646 = vand.u32 2147483647, %v2621
    %vm2647 = vcmp.eq.f32.partialorder %v2646, 8.507059e+37
    %v2648 = vand.u32 %v2621, 2147483648
    %v2649 = vor.u32 1.1754944e-38, %v2648
    %v2650 = vsel %vm2647, %v2649, %v2645
    %v2651 = vmul.f32 1.0, %v2650
    %v2652 = vadd.f32 %v2610, %v1830
    %v2653 = vmul.f32 %v2636, %v2652
    %v2654 = vadd.f32 %v2551, %v2653
    %v2655 = vtanh.pop %v2654
    %v2656 = vsub.f32 1.0, %v2651
    %v2657 = vmul.f32 %v2656, %v2655
    %v2658 = vmul.f32 %v2651, %v2548
    %v2659 = vadd.f32 %v2657, %v2658
    %v2660 = vld [vmem:[%s1451] sm:$0xff]
    %v2661 = vld [vmem:[%s1451 + $0x8] sm:$0xff]
    %v2662 = vld [vmem:[%s1451 + $0x10] sm:$0xff]
    %2663 = vmatpush.msra.mxu0 %v1883
    %2664 = vmatpush.msra.mxu0 %v1880
    %2665 = vmatpush.msra.mxu0 %v1877
    %2666 = vmatpush.msra.mxu0 %v1874
    %2667 = vmatpush.msra.mxu0 %v1871
    %2668 = vmatpush.msra.mxu0 %v1868
    %2669 = vmatpush.msra.mxu0 %v1865
    %2670 = vmatpush.msra.mxu0 %v1862
    %2671 = vmatpush.msra.mxu0 %v1859
    %2672 = vmatpush.msra.mxu0 %v1856
    %2673 = vmatpush.msra.mxu0 %v1853
    %2674 = vmatpush.msra.mxu0 %v1850
    %2675 = vmatpush.msra.mxu0 %v1847
    %2676 = vmatpush.msra.mxu0 %v1844
    %2677 = vmatpush.msra.mxu0 %v1841
    %2678 = vmatpush.msra.mxu0 %v1838
    %2679 = vmatmul.f32.gmra.mxu0 %v2659
    %v2680 = vpop.f32.mrf.mxu0
    %v2681 = vadd.f32 0.0, %v2680
    %2682 = vdwg.mxu0
    %2683 = vmatpush.msra.mxu0 %v1884
    %2684 = vmatpush.msra.mxu0 %v1881
    %2685 = vmatpush.msra.mxu0 %v1878
    %2686 = vmatpush.msra.mxu0 %v1875
    %2687 = vmatpush.msra.mxu0 %v1872
    %2688 = vmatpush.msra.mxu0 %v1869
    %2689 = vmatpush.msra.mxu0 %v1866
    %2690 = vmatpush.msra.mxu0 %v1863
    %2691 = vmatpush.msra.mxu0 %v1860
    %2692 = vmatpush.msra.mxu0 %v1857
    %2693 = vmatpush.msra.mxu0 %v1854
    %2694 = vmatpush.msra.mxu0 %v1851
    %2695 = vmatpush.msra.mxu0 %v1848
    %2696 = vmatpush.msra.mxu0 %v1845
    %2697 = vmatpush.msra.mxu0 %v1842
    %2698 = vmatpush.msra.mxu0 %v1839
    %2699 = vmatmul.f32.gmra.mxu0 %v2659
    %v2700 = vpop.f32.mrf.mxu0
    %v2701 = vadd.f32 0.0, %v2700
    %2702 = vdwg.mxu0
    %2703 = vmatpush.msra.mxu0 %v1885
    %2704 = vmatpush.msra.mxu0 %v1882
    %2705 = vmatpush.msra.mxu0 %v1879
    %2706 = vmatpush.msra.mxu0 %v1876
    %2707 = vmatpush.msra.mxu0 %v1873
    %2708 = vmatpush.msra.mxu0 %v1870
    %2709 = vmatpush.msra.mxu0 %v1867
    %2710 = vmatpush.msra.mxu0 %v1864
    %2711 = vmatpush.msra.mxu0 %v1861
    %2712 = vmatpush.msra.mxu0 %v1858
    %2713 = vmatpush.msra.mxu0 %v1855
    %2714 = vmatpush.msra.mxu0 %v1852
    %2715 = vmatpush.msra.mxu0 %v1849
    %2716 = vmatpush.msra.mxu0 %v1846
    %2717 = vmatpush.msra.mxu0 %v1843
    %2718 = vmatpush.msra.mxu0 %v1840
    %2719 = vmatmul.f32.gmra.mxu0 %v2659
    %v2720 = vpop.f32.mrf.mxu0
    %v2721 = vadd.f32 0.0, %v2720
    %2722 = vdwg.mxu0
    %v2723 = vadd.f32 %v2660, %v2681
    %v2724 = vadd.f32 %v2661, %v2701
    %v2725 = vxor.u32 %v2723, 2147483648
    %v2726 = vxor.u32 %v2724, 2147483648
    %v2727 = vmul.f32 %v2725, 1.442695
    %v2728 = vpow.pop %v2727
    %v2729 = vmul.f32 %v2726, 1.442695
    %v2730 = vpow.pop %v2729
    %v2731 = vadd.f32 %v2728, 1.0
    %v2732 = vadd.f32 %v2730, 1.0
    %v2733 = vrcp.pop %v2731
    %v2734 = vmul.f32 %v2731, %v2733
    %v2735 = vsub.f32 1.0, %v2734
    %v2736 = vmul.f32 %v2733, %v2735
    %v2737 = vadd.f32 %v2733, %v2736
    %vm2738 = vweird.f32 %v2731
    %vm2739 = vweird.f32 %v2733
    %vm2740 = vmor %vm2738, %vm2739
    %v2741 = vsel %vm2740, %v2733, %v2737
    %v2742 = vand.u32 2147483647, %v2731
    %vm2743 = vcmp.eq.f32.partialorder %v2742, 8.507059e+37
    %v2744 = vand.u32 %v2731, 2147483648
    %v2745 = vor.u32 1.1754944e-38, %v2744
    %v2746 = vsel %vm2743, %v2745, %v2741
    %v2747 = vmul.f32 1.0, %v2746
    %v2748 = vrcp.pop %v2732
    %v2749 = vmul.f32 %v2732, %v2748
    %v2750 = vsub.f32 1.0, %v2749
    %v2751 = vmul.f32 %v2748, %v2750
    %v2752 = vadd.f32 %v2748, %v2751
    %vm2753 = vweird.f32 %v2732
    %vm2754 = vweird.f32 %v2748
    %vm2755 = vmor %vm2753, %vm2754
    %v2756 = vsel %vm2755, %v2748, %v2752
    %v2757 = vand.u32 2147483647, %v2732
    %vm2758 = vcmp.eq.f32.partialorder %v2757, 8.507059e+37
    %v2759 = vand.u32 %v2732, 2147483648
    %v2760 = vor.u32 1.1754944e-38, %v2759
    %v2761 = vsel %vm2758, %v2760, %v2756
    %v2762 = vmul.f32 1.0, %v2761
    %v2763 = vadd.f32 %v2721, %v1830
    %v2764 = vmul.f32 %v2747, %v2763
    %v2765 = vadd.f32 %v2662, %v2764
    %v2766 = vtanh.pop %v2765
    %v2767 = vsub.f32 1.0, %v2762
    %v2768 = vmul.f32 %v2767, %v2766
    %v2769 = vmul.f32 %v2762, %v2659
    %v2770 = vadd.f32 %v2768, %v2769
    %s2771 = scalar_lea.vmem %s9, 8
    %2772 = vst [vmem:[%s2771] sm:$0xff] %v2770
    %v2773 = vmax.f32 %v2770, 0.0
    %v2774 = vld [vmem:[#allocation8] sm:$0xff]
    %v2775 = vld [vmem:[#allocation8 + $0x8] sm:$0xff]
    %v2776 = vld [vmem:[#allocation8 + $0x10] sm:$0xff]
    %v2777 = vld [vmem:[#allocation8 + $0x18] sm:$0xff]
    %v2778 = vld [vmem:[#allocation8 + $0x20] sm:$0xff]
    %v2779 = vld [vmem:[#allocation8 + $0x28] sm:$0xff]
    %v2780 = vld [vmem:[#allocation8 + $0x30] sm:$0xff]
    %v2781 = vld [vmem:[#allocation8 + $0x38] sm:$0xff]
    %v2782 = vld [vmem:[#allocation8 + $0x40] sm:$0xff]
    %v2783 = vld [vmem:[#allocation8 + $0x48] sm:$0xff]
    %v2784 = vld [vmem:[#allocation8 + $0x50] sm:$0xff]
    %v2785 = vld [vmem:[#allocation8 + $0x58] sm:$0xff]
    %v2786 = vld [vmem:[#allocation8 + $0x60] sm:$0xff]
    %v2787 = vld [vmem:[#allocation8 + $0x68] sm:$0xff]
    %v2788 = vld [vmem:[#allocation8 + $0x70] sm:$0xff]
    %v2789 = vld [vmem:[#allocation8 + $0x78] sm:$0xff]
    %v2790 = vld [vmem:[%s7] sm:$0x1]
    %v2792 = vperm.slane %v2790, 0
    %2794 = vmatpush.msra.mxu0 %v2789
    %2795 = vmatpush.msra.mxu0 %v2788
    %2796 = vmatpush.msra.mxu0 %v2787
    %2797 = vmatpush.msra.mxu0 %v2786
    %2798 = vmatpush.msra.mxu0 %v2785
    %2799 = vmatpush.msra.mxu0 %v2784
    %2800 = vmatpush.msra.mxu0 %v2783
    %2801 = vmatpush.msra.mxu0 %v2782
    %2802 = vmatpush.msra.mxu0 %v2781
    %2803 = vmatpush.msra.mxu0 %v2780
    %2804 = vmatpush.msra.mxu0 %v2779
    %2805 = vmatpush.msra.mxu0 %v2778
    %2806 = vmatpush.msra.mxu0 %v2777
    %2807 = vmatpush.msra.mxu0 %v2776
    %2808 = vmatpush.msra.mxu0 %v2775
    %2809 = vmatpush.msra.mxu0 %v2774
    %2810 = vmatmul.f32.gmra.mxu0 %v2773
    %v2811 = vpop.f32.mrf.mxu0
    %v2812 = vadd.f32 %v2792, %v2811
    %2813 = vdwg.mxu0
    %2814 = vst [vmem:[%s8] sm:$0xff] %v2812
    // Predicated region
    $region46: #{grunet_forward.1} parent=1 // pred_check
      _
    $region47: #{grunet_forward.1} parent=1 // pred_check_branch
      %2816 = sbr.rel (0) target = $region49
    $region48: #{grunet_forward.1} parent=1 // pred_region
      _
    $region49: #{grunet_forward.1} parent=1 // pred_fallthru
      _
    // Predicated region
    $region50: #{grunet_forward.1} parent=1 // pred_check
      _
    $region51: #{grunet_forward.1} parent=1 // pred_check_branch
      %2818 = sbr.rel (0) target = $region53
    $region52: #{grunet_forward.1} parent=1 // pred_region
      _
    $region53: #{grunet_forward.1} parent=1 // pred_fallthru
      _
    // Predicated region
    $region54: #{grunet_forward.1} parent=1 // pred_check
      _
    $region55: #{grunet_forward.1} parent=1 // pred_check_branch
      %2820 = sbr.rel (0) target = $region57
    $region56: #{grunet_forward.1} parent=1 // pred_region
      _
    $region57: #{grunet_forward.1} parent=1 // pred_fallthru
      _
    // Predicated region
    $region58: #{grunet_forward.1} parent=1 // pred_check
      _
    $region59: #{grunet_forward.1} parent=1 // pred_check_branch
      %2822 = sbr.rel (0) target = $region61
    $region60: #{grunet_forward.1} parent=1 // pred_region
      _
    $region61: #{grunet_forward.1} parent=1 // pred_fallthru
      _
    %2823 = vsyncpa [#allocation5], 1
    %2824 = vsyncpa [#allocation7], 1

</llo_original>
